<compile_context>
chip_gen: v6e
topology: v6e:2x2x1
jax: 0.10.0
libtpu: 0.0.40
codegen_flags: <defaults>
</compile_context>

<pallas_src>
import math
import functools

import jax
import jax.numpy as jnp
from jax.experimental import pallas as pl
from jax.experimental.pallas import tpu as pltpu


# ----------------------------------------------------------------------------
# Kernel 1: fused 3x3 conv (+bias, +optional ReLU) as 9 accumulated tap matmuls
#   x_ref      : (1, s*s, Hh, Wh, Cin)  padded, space-to-depth'ed NHWC input
#   w_ref      : (9, Cin, Cout)         tap-major conv weight (kh, kw) order
#   b_ref      : (1, Cout)
#   o_nhwc_ref : (1, Ho, Wo, Cout)      NHWC output (feeds the next conv)
#   o_cm_ref   : (1, Cout, Ho*Wo)       lane-dense channel-major copy
#                                       (== NCHW after a free reshape)
# ----------------------------------------------------------------------------
def _conv3x3_kernel(x_ref, w_ref, b_ref, o_nhwc_ref, o_cm_ref, *,
                    stride, Ho, Wo, relu):
    s = stride
    x = x_ref[0]                              # (s*s, Hh, Wh, Cin)
    Cin = x.shape[-1]
    Cout = w_ref.shape[-1]
    M = Ho * Wo
    acc = jnp.zeros((M, Cout), jnp.float32)
    for i in range(3):
        for j in range(3):
            ph = (i % s) * s + (j % s)        # space-to-depth phase plane
            oi, oj = i // s, j // s           # offset inside the phase plane
            tap = x[ph, oi:oi + Ho, oj:oj + Wo, :].reshape(M, Cin)
            acc = acc + jnp.dot(tap, w_ref[i * 3 + j],
                                preferred_element_type=jnp.float32)
    acc = acc + b_ref[...]
    if relu:
        acc = jnp.maximum(acc, 0.0)
    o_nhwc_ref[0] = acc.reshape(Ho, Wo, Cout).astype(o_nhwc_ref.dtype)
    o_cm_ref[0] = acc.T.astype(o_cm_ref.dtype)       # lane-dense (Cout, M)


def conv3x3_fused(x_nhwc, w_hwio, b, *, stride, relu=True):
    """3x3 conv, padding=1, fused bias/ReLU.  Returns (NHWC out, (C, H*W) out)."""
    N, H, W, Cin = x_nhwc.shape
    kh, kw, _, Cout = w_hwio.shape
    assert (kh, kw) == (3, 3)
    pad = 1
    s = stride
    Ho = (H + 2 * pad - kh) // s + 1
    Wo = (W + 2 * pad - kw) // s + 1
    xp = jnp.pad(x_nhwc, ((0, 0), (pad, pad), (pad, pad), (0, 0)))
    Hp, Wp = H + 2 * pad, W + 2 * pad
    if s == 1:
        Hh, Wh = Hp, Wp
        xs = xp.reshape(N, 1, Hp, Wp, Cin)
    else:
        assert Hp % s == 0 and Wp % s == 0
        Hh, Wh = Hp // s, Wp // s
        # space-to-depth: phase (pi, pj) plane holds xp[:, u*s+pi, v*s+pj, :]
        xs = (xp.reshape(N, Hh, s, Wh, s, Cin)
                .transpose(0, 2, 4, 1, 3, 5)
                .reshape(N, s * s, Hh, Wh, Cin))
    w9 = w_hwio.reshape(9, Cin, Cout)

    out_nhwc, out_cm = pl.pallas_call(
        functools.partial(_conv3x3_kernel, stride=s, Ho=Ho, Wo=Wo, relu=relu),
        out_shape=(jax.ShapeDtypeStruct((N, Ho, Wo, Cout), jnp.float32),
                   jax.ShapeDtypeStruct((N, Cout, Ho * Wo), jnp.float32)),
        grid=(N,),
        in_specs=[
            pl.BlockSpec((1, s * s, Hh, Wh, Cin), lambda n: (n, 0, 0, 0, 0)),
            pl.BlockSpec((9, Cin, Cout), lambda n: (0, 0, 0)),   # resident
            pl.BlockSpec((1, Cout), lambda n: (0, 0)),           # resident
        ],
        out_specs=[
            pl.BlockSpec((1, Ho, Wo, Cout), lambda n: (n, 0, 0, 0)),
            pl.BlockSpec((1, Cout, Ho * Wo), lambda n: (n, 0, 0)),
        ],
        compiler_params=pltpu.CompilerParams(
            dimension_semantics=("parallel",)),
    )(xs, w9, b.reshape(1, Cout))
    return out_nhwc, out_cm


# ----------------------------------------------------------------------------
# Kernel 2: fused RPN level = 3x3 conv + ReLU + objectness head + delta head.
#   x_ref   : (1, Hp, Wp, C)     padded NHWC feature map
#   wc_ref  : (9, C, C)          shared conv weight (tap-major)
#   bc_ref  : (1, C)
#   wht_ref : (A+4A, C)          concatenated, pre-transposed head weights
#   bh_ref  : (A+4A, 1)          concatenated head bias (column vector)
#   obj_ref : (1, A,   Ho*Wo)    lane-dense, channel-major (== NCHW reshape)
#   dlt_ref : (1, 4A,  Ho*Wo)
# ----------------------------------------------------------------------------
def _rpn_level_kernel(x_ref, wc_ref, bc_ref, wht_ref, bh_ref,
                      obj_ref, dlt_ref, *, Ho, Wo, A):
    x = x_ref[0]                              # (Hp, Wp, C)
    C = x.shape[-1]
    M = Ho * Wo
    acc = jnp.zeros((M, C), jnp.float32)
    for i in range(3):
        for j in range(3):
            tap = x[i:i + Ho, j:j + Wo, :].reshape(M, C)
            acc = acc + jnp.dot(tap, wc_ref[i * 3 + j],
                                preferred_element_type=jnp.float32)
    t = jnp.maximum(acc + bc_ref[...], 0.0)   # (M, C): conv act stays on-chip
    # Both 1x1 heads in one matmul, output transposed so M is on the lane axis.
    head = jnp.dot(wht_ref[...], t.T, preferred_element_type=jnp.float32)
    head = head + bh_ref[...]                 # (A + 4A, M)
    obj_ref[0] = head[:A, :].astype(obj_ref.dtype)
    dlt_ref[0] = head[A:, :].astype(dlt_ref.dtype)


def rpn_level_fused(feat_nhwc, wc9, bc, wht, bh, A):
    N, H, W, C = feat_nhwc.shape
    Ho, Wo = H, W
    M = Ho * Wo
    xp = jnp.pad(feat_nhwc, ((0, 0), (1, 1), (1, 1), (0, 0)))
    Hp, Wp = H + 2, W + 2
    obj, dlt = pl.pallas_call(
        functools.partial(_rpn_level_kernel, Ho=Ho, Wo=Wo, A=A),
        out_shape=(jax.ShapeDtypeStruct((N, A, M), jnp.float32),
                   jax.ShapeDtypeStruct((N, 4 * A, M), jnp.float32)),
        grid=(N,),
        in_specs=[
            pl.BlockSpec((1, Hp, Wp, C), lambda n: (n, 0, 0, 0)),
            pl.BlockSpec((9, C, C), lambda n: (0, 0, 0)),    # resident
            pl.BlockSpec((1, C), lambda n: (0, 0)),          # resident
            pl.BlockSpec((5 * A, C), lambda n: (0, 0)),      # resident
            pl.BlockSpec((5 * A, 1), lambda n: (0, 0)),      # resident
        ],
        out_specs=[
            pl.BlockSpec((1, A, M), lambda n: (n, 0, 0)),
            pl.BlockSpec((1, 4 * A, M), lambda n: (n, 0, 0)),
        ],
        compiler_params=pltpu.CompilerParams(
            dimension_semantics=("parallel",)),
    )(xp, wc9, bc.reshape(1, C), wht, bh)
    return obj, dlt


# ----------------------------------------------------------------------------
# Backbone: two 3x3 stride-2 conv+ReLU stages.  NHWC end-to-end internally;
# the NCHW dict for the public API is a free reshape of the channel-major out.
# ----------------------------------------------------------------------------
def backbone_forward(params, images_nchw):
    x = jnp.transpose(images_nchw, (0, 2, 3, 1))   # single boundary transpose
    p2_nhwc, p2_cm = conv3x3_fused(x, params["bb_w1"], params["bb_b1"],
                                   stride=2, relu=True)
    p3_nhwc, p3_cm = conv3x3_fused(p2_nhwc, params["bb_w2"], params["bb_b2"],
                                   stride=2, relu=True)
    N = images_nchw.shape[0]
    feats_nchw = {
        "p2": p2_cm.reshape(N, p2_cm.shape[1], p2_nhwc.shape[1], p2_nhwc.shape[2]),
        "p3": p3_cm.reshape(N, p3_cm.shape[1], p3_nhwc.shape[1], p3_nhwc.shape[2]),
    }
    feats_nhwc = {"p2": p2_nhwc, "p3": p3_nhwc}
    return feats_nchw, feats_nhwc


# ----------------------------------------------------------------------------
# StandardRPNHead: shared 3x3 conv+ReLU, 1x1 objectness (A), 1x1 deltas (A*4)
# ----------------------------------------------------------------------------
def rpn_head_forward(params, feats_nhwc):
    C = params["rpn_conv_w"].shape[2]
    A = params["rpn_obj_w"].shape[1]
    wc9 = params["rpn_conv_w"].reshape(9, C, C)
    wht = jnp.concatenate([params["rpn_obj_w"].T, params["rpn_delta_w"].T], axis=0)
    bh = jnp.concatenate([params["rpn_obj_b"], params["rpn_delta_b"]]).reshape(-1, 1)
    logits, deltas = [], []
    for f in feats_nhwc:
        N, H, W, _ = f.shape
        obj, dlt = rpn_level_fused(f, wc9, params["rpn_conv_b"], wht, bh, A)
        logits.append(obj.reshape(N, A, H, W))        # NCHW, reshape only
        deltas.append(dlt.reshape(N, 4 * A, H, W))    # NCHW, reshape only
    return logits, deltas


# ----------------------------------------------------------------------------
# DefaultAnchorGenerator equivalent (precomputed constants, plain JAX glue)
# ----------------------------------------------------------------------------
def generate_cell_anchors(sizes, aspect_ratios):
    anchors = []
    for size in sizes:
        area = size ** 2.0
        for ar in aspect_ratios:
            w = math.sqrt(area / ar)
            h = ar * w
            anchors.append([-w / 2.0, -h / 2.0, w / 2.0, h / 2.0])
    return jnp.array(anchors, dtype=jnp.float32)


def grid_anchors(grid_sizes, strides, cell_anchors, offset):
    out = []
    for (gh, gw), stride, base in zip(grid_sizes, strides, cell_anchors):
        shifts_x = jnp.arange(offset * stride, gw * stride, step=stride,
                              dtype=jnp.float32)
        shifts_y = jnp.arange(offset * stride, gh * stride, step=stride,
                              dtype=jnp.float32)
        shift_y, shift_x = jnp.meshgrid(shifts_y, shifts_x, indexing="ij")
        shift_x = shift_x.reshape(-1)
        shift_y = shift_y.reshape(-1)
        shifts = jnp.stack([shift_x, shift_y, shift_x, shift_y], axis=1)
        anchors = (shifts.reshape(-1, 1, 4) + base.reshape(1, -1, 4)).reshape(-1, 4)
        out.append(anchors)
    return out


def _conv_out_hw(hw, k=3, s=2, p=1):
    return ((hw[0] + 2 * p - k) // s + 1, (hw[1] + 2 * p - k) // s + 1)


# ----------------------------------------------------------------------------
# Detectron2 equivalent
# ----------------------------------------------------------------------------
class Detectron2Pallas:
    def __init__(self, params, in_features, strides, cell_anchors, offset,
                 images_tensor, num_images):
        self.params = params
        self.in_features = in_features
        self.num_images = num_images
        # anchors precomputed in __init__ (as in the PyTorch module), but grid
        # sizes are derived arithmetically — no backbone forward needed here.
        H, W = images_tensor.shape[-2:]
        p2_hw = _conv_out_hw((H, W))
        p3_hw = _conv_out_hw(p2_hw)
        level_hw = {"p2": p2_hw, "p3": p3_hw}
        grid_sizes = [level_hw[f] for f in in_features]
        self.anchors = grid_anchors(grid_sizes, strides, cell_anchors, offset)

    def __call__(self, images_tensor):
        feats_nchw, feats_nhwc = backbone_forward(self.params, images_tensor)
        rpn_in = [feats_nhwc[f] for f in self.in_features]
        pred_objectness_logits, pred_anchor_deltas = rpn_head_forward(
            self.params, rpn_in)
        return feats_nchw, pred_objectness_logits, pred_anchor_deltas, self.anchors


if __name__ == "__main__":
    key = jax.random.PRNGKey(0)
    k_img, k_par = jax.random.split(key)
    N, Cin, H, W = 2, 3, 32, 32
    C = 16           # backbone / rpn hidden channels
    A = 3            # anchors per location (3 aspect ratios, 1 size per level)
    box_dim = 4

    images = jax.random.normal(k_img, (N, Cin, H, W), dtype=jnp.float32)

    ks = jax.random.split(k_par, 6)
    params = {
        "bb_w1": 0.1 * jax.random.normal(ks[0], (3, 3, Cin, C), jnp.float32),
        "bb_b1": jnp.zeros((C,), jnp.float32),
        "bb_w2": 0.1 * jax.random.normal(ks[1], (3, 3, C, C), jnp.float32),
        "bb_b2": jnp.zeros((C,), jnp.float32),
        "rpn_conv_w": 0.1 * jax.random.normal(ks[2], (3, 3, C, C), jnp.float32),
        "rpn_conv_b": jnp.zeros((C,), jnp.float32),
        "rpn_obj_w": 0.1 * jax.random.normal(ks[3], (C, A), jnp.float32),
        "rpn_obj_b": jnp.zeros((A,), jnp.float32),
        "rpn_delta_w": 0.1 * jax.random.normal(ks[4], (C, A * box_dim), jnp.float32),
        "rpn_delta_b": jnp.zeros((A * box_dim,), jnp.float32),
    }

    cell_anchors = [
        generate_cell_anchors((32,), (0.5, 1.0, 2.0)),   # for p2
        generate_cell_anchors((64,), (0.5, 1.0, 2.0)),   # for p3
    ]
    strides = [2, 4]

    model = Detectron2Pallas(params, ["p2", "p3"], strides, cell_anchors,
                             offset=0.5, images_tensor=images, num_images=N)

    features, logits, deltas, anchors = model(images)
    jax.block_until_ready((features, logits, deltas, anchors))

    # sanity checks on shapes
    assert features["p2"].shape == (N, C, 16, 16)
    assert features["p3"].shape == (N, C, 8, 8)
    assert logits[0].shape == (N, A, 16, 16) and logits[1].shape == (N, A, 8, 8)
    assert deltas[0].shape == (N, A * 4, 16, 16) and deltas[1].shape == (N, A * 4, 8, 8)
    assert anchors[0].shape == (16 * 16 * A, 4) and anchors[1].shape == (8 * 8 * A, 4)

    print("KERNEL_OK")
</pallas_src>

<mosaic_0001>
module attributes {stable_mosaic.version = 11 : i64} {
  func.func @_conv3x3_kernel(%arg0: i32, %arg1: memref<1x4x17x17x3xf32, #tpu.memory_space<vmem>>, %arg2: memref<9x3x16xf32, #tpu.memory_space<vmem>>, %arg3: memref<1x16xf32, #tpu.memory_space<vmem>>, %arg4: memref<1x16x16x16xf32, #tpu.memory_space<vmem>>, %arg5: memref<1x16x256xf32, #tpu.memory_space<vmem>>) attributes {dimension_semantics = [#tpu.dimension_semantics<parallel>], iteration_bounds = array<i64: 2>, scalar_prefetch = 0 : i64, scratch_operands = 0 : i64, tpu.core_type = #tpu.core_type<tc>, window_params = [{transform_indices = @transform_0, window_bounds = array<i64: 1, 4, 17, 17, 3>}, {pipeline_mode = #tpu.pipeline_mode<synchronous>, transform_indices = @transform_1, window_bounds = array<i64: 9, 3, 16>}, {pipeline_mode = #tpu.pipeline_mode<synchronous>, transform_indices = @transform_2, window_bounds = array<i64: 1, 16>}, {transform_indices = @transform_3, window_bounds = array<i64: 1, 16, 16, 16>}, {transform_indices = @transform_4, window_bounds = array<i64: 1, 16, 256>}]} {
    %c0 = arith.constant 0 : index
    %c0_0 = arith.constant 0 : index
    %c0_1 = arith.constant 0 : index
    %c0_2 = arith.constant 0 : index
    %c0_3 = arith.constant 0 : index
    %0 = vector.load %arg1[%c0, %c0_0, %c0_1, %c0_2, %c0_3] : memref<1x4x17x17x3xf32, #tpu.memory_space<vmem>>, vector<1x4x17x17x3xf32>
    %1 = vector.shape_cast %0 : vector<1x4x17x17x3xf32> to vector<4x17x17x3xf32>
    %cst = arith.constant 0.000000e+00 : f32
    %2 = vector.broadcast %cst : f32 to vector<256x16xf32>
    %3 = vector.extract_strided_slice %1 {offsets = [0, 0, 0, 0], sizes = [1, 16, 16, 3], strides = [1, 1, 1, 1]} : vector<4x17x17x3xf32> to vector<1x16x16x3xf32>
    %4 = vector.shape_cast %3 : vector<1x16x16x3xf32> to vector<16x16x3xf32>
    %5 = vector.shape_cast %4 : vector<16x16x3xf32> to vector<256x3xf32>
    %c0_4 = arith.constant 0 : index
    %c0_5 = arith.constant 0 : index
    %c0_6 = arith.constant 0 : index
    %6 = vector.load %arg2[%c0_4, %c0_5, %c0_6] : memref<9x3x16xf32, #tpu.memory_space<vmem>>, vector<1x3x16xf32>
    %7 = vector.shape_cast %6 : vector<1x3x16xf32> to vector<3x16xf32>
    %cst_7 = arith.constant dense<0.000000e+00> : vector<256x16xf32>
    %8 = tpu.matmul %5, %7, %cst_7 {dimension_numbers = #tpu.dot_dimension_numbers<[1], [0], [0], [1], [0, 0, 1, 1], [], []>} : vector<256x3xf32>, vector<3x16xf32>, vector<256x16xf32> -> vector<256x16xf32>
    %9 = arith.addf %2, %8 : vector<256x16xf32>
    %10 = vector.extract_strided_slice %1 {offsets = [1, 0, 0, 0], sizes = [1, 16, 16, 3], strides = [1, 1, 1, 1]} : vector<4x17x17x3xf32> to vector<1x16x16x3xf32>
    %11 = vector.shape_cast %10 : vector<1x16x16x3xf32> to vector<16x16x3xf32>
    %12 = vector.shape_cast %11 : vector<16x16x3xf32> to vector<256x3xf32>
    %c1 = arith.constant 1 : index
    %c0_8 = arith.constant 0 : index
    %c0_9 = arith.constant 0 : index
    %13 = vector.load %arg2[%c1, %c0_8, %c0_9] : memref<9x3x16xf32, #tpu.memory_space<vmem>>, vector<1x3x16xf32>
    %14 = vector.shape_cast %13 : vector<1x3x16xf32> to vector<3x16xf32>
    %cst_10 = arith.constant dense<0.000000e+00> : vector<256x16xf32>
    %15 = tpu.matmul %12, %14, %cst_10 {dimension_numbers = #tpu.dot_dimension_numbers<[1], [0], [0], [1], [0, 0, 1, 1], [], []>} : vector<256x3xf32>, vector<3x16xf32>, vector<256x16xf32> -> vector<256x16xf32>
    %16 = arith.addf %9, %15 : vector<256x16xf32>
    %17 = vector.extract_strided_slice %1 {offsets = [0, 0, 1, 0], sizes = [1, 16, 16, 3], strides = [1, 1, 1, 1]} : vector<4x17x17x3xf32> to vector<1x16x16x3xf32>
    %18 = vector.shape_cast %17 : vector<1x16x16x3xf32> to vector<16x16x3xf32>
    %19 = vector.shape_cast %18 : vector<16x16x3xf32> to vector<256x3xf32>
    %c2 = arith.constant 2 : index
    %c0_11 = arith.constant 0 : index
    %c0_12 = arith.constant 0 : index
    %20 = vector.load %arg2[%c2, %c0_11, %c0_12] : memref<9x3x16xf32, #tpu.memory_space<vmem>>, vector<1x3x16xf32>
    %21 = vector.shape_cast %20 : vector<1x3x16xf32> to vector<3x16xf32>
    %cst_13 = arith.constant dense<0.000000e+00> : vector<256x16xf32>
    %22 = tpu.matmul %19, %21, %cst_13 {dimension_numbers = #tpu.dot_dimension_numbers<[1], [0], [0], [1], [0, 0, 1, 1], [], []>} : vector<256x3xf32>, vector<3x16xf32>, vector<256x16xf32> -> vector<256x16xf32>
    %23 = arith.addf %16, %22 : vector<256x16xf32>
    %24 = vector.extract_strided_slice %1 {offsets = [2, 0, 0, 0], sizes = [1, 16, 16, 3], strides = [1, 1, 1, 1]} : vector<4x17x17x3xf32> to vector<1x16x16x3xf32>
    %25 = vector.shape_cast %24 : vector<1x16x16x3xf32> to vector<16x16x3xf32>
    %26 = vector.shape_cast %25 : vector<16x16x3xf32> to vector<256x3xf32>
    %c3 = arith.constant 3 : index
    %c0_14 = arith.constant 0 : index
    %c0_15 = arith.constant 0 : index
    %27 = vector.load %arg2[%c3, %c0_14, %c0_15] : memref<9x3x16xf32, #tpu.memory_space<vmem>>, vector<1x3x16xf32>
    %28 = vector.shape_cast %27 : vector<1x3x16xf32> to vector<3x16xf32>
    %cst_16 = arith.constant dense<0.000000e+00> : vector<256x16xf32>
    %29 = tpu.matmul %26, %28, %cst_16 {dimension_numbers = #tpu.dot_dimension_numbers<[1], [0], [0], [1], [0, 0, 1, 1], [], []>} : vector<256x3xf32>, vector<3x16xf32>, vector<256x16xf32> -> vector<256x16xf32>
    %30 = arith.addf %23, %29 : vector<256x16xf32>
    %31 = vector.extract_strided_slice %1 {offsets = [3, 0, 0, 0], sizes = [1, 16, 16, 3], strides = [1, 1, 1, 1]} : vector<4x17x17x3xf32> to vector<1x16x16x3xf32>
    %32 = vector.shape_cast %31 : vector<1x16x16x3xf32> to vector<16x16x3xf32>
    %33 = vector.shape_cast %32 : vector<16x16x3xf32> to vector<256x3xf32>
    %c4 = arith.constant 4 : index
    %c0_17 = arith.constant 0 : index
    %c0_18 = arith.constant 0 : index
    %34 = vector.load %arg2[%c4, %c0_17, %c0_18] : memref<9x3x16xf32, #tpu.memory_space<vmem>>, vector<1x3x16xf32>
    %35 = vector.shape_cast %34 : vector<1x3x16xf32> to vector<3x16xf32>
    %cst_19 = arith.constant dense<0.000000e+00> : vector<256x16xf32>
    %36 = tpu.matmul %33, %35, %cst_19 {dimension_numbers = #tpu.dot_dimension_numbers<[1], [0], [0], [1], [0, 0, 1, 1], [], []>} : vector<256x3xf32>, vector<3x16xf32>, vector<256x16xf32> -> vector<256x16xf32>
    %37 = arith.addf %30, %36 : vector<256x16xf32>
    %38 = vector.extract_strided_slice %1 {offsets = [2, 0, 1, 0], sizes = [1, 16, 16, 3], strides = [1, 1, 1, 1]} : vector<4x17x17x3xf32> to vector<1x16x16x3xf32>
    %39 = vector.shape_cast %38 : vector<1x16x16x3xf32> to vector<16x16x3xf32>
    %40 = vector.shape_cast %39 : vector<16x16x3xf32> to vector<256x3xf32>
    %c5 = arith.constant 5 : index
    %c0_20 = arith.constant 0 : index
    %c0_21 = arith.constant 0 : index
    %41 = vector.load %arg2[%c5, %c0_20, %c0_21] : memref<9x3x16xf32, #tpu.memory_space<vmem>>, vector<1x3x16xf32>
    %42 = vector.shape_cast %41 : vector<1x3x16xf32> to vector<3x16xf32>
    %cst_22 = arith.constant dense<0.000000e+00> : vector<256x16xf32>
    %43 = tpu.matmul %40, %42, %cst_22 {dimension_numbers = #tpu.dot_dimension_numbers<[1], [0], [0], [1], [0, 0, 1, 1], [], []>} : vector<256x3xf32>, vector<3x16xf32>, vector<256x16xf32> -> vector<256x16xf32>
    %44 = arith.addf %37, %43 : vector<256x16xf32>
    %45 = vector.extract_strided_slice %1 {offsets = [0, 1, 0, 0], sizes = [1, 16, 16, 3], strides = [1, 1, 1, 1]} : vector<4x17x17x3xf32> to vector<1x16x16x3xf32>
    %46 = vector.shape_cast %45 : vector<1x16x16x3xf32> to vector<16x16x3xf32>
    %47 = vector.shape_cast %46 : vector<16x16x3xf32> to vector<256x3xf32>
    %c6 = arith.constant 6 : index
    %c0_23 = arith.constant 0 : index
    %c0_24 = arith.constant 0 : index
    %48 = vector.load %arg2[%c6, %c0_23, %c0_24] : memref<9x3x16xf32, #tpu.memory_space<vmem>>, vector<1x3x16xf32>
    %49 = vector.shape_cast %48 : vector<1x3x16xf32> to vector<3x16xf32>
    %cst_25 = arith.constant dense<0.000000e+00> : vector<256x16xf32>
    %50 = tpu.matmul %47, %49, %cst_25 {dimension_numbers = #tpu.dot_dimension_numbers<[1], [0], [0], [1], [0, 0, 1, 1], [], []>} : vector<256x3xf32>, vector<3x16xf32>, vector<256x16xf32> -> vector<256x16xf32>
    %51 = arith.addf %44, %50 : vector<256x16xf32>
    %52 = vector.extract_strided_slice %1 {offsets = [1, 1, 0, 0], sizes = [1, 16, 16, 3], strides = [1, 1, 1, 1]} : vector<4x17x17x3xf32> to vector<1x16x16x3xf32>
    %53 = vector.shape_cast %52 : vector<1x16x16x3xf32> to vector<16x16x3xf32>
    %54 = vector.shape_cast %53 : vector<16x16x3xf32> to vector<256x3xf32>
    %c7 = arith.constant 7 : index
    %c0_26 = arith.constant 0 : index
    %c0_27 = arith.constant 0 : index
    %55 = vector.load %arg2[%c7, %c0_26, %c0_27] : memref<9x3x16xf32, #tpu.memory_space<vmem>>, vector<1x3x16xf32>
    %56 = vector.shape_cast %55 : vector<1x3x16xf32> to vector<3x16xf32>
    %cst_28 = arith.constant dense<0.000000e+00> : vector<256x16xf32>
    %57 = tpu.matmul %54, %56, %cst_28 {dimension_numbers = #tpu.dot_dimension_numbers<[1], [0], [0], [1], [0, 0, 1, 1], [], []>} : vector<256x3xf32>, vector<3x16xf32>, vector<256x16xf32> -> vector<256x16xf32>
    %58 = arith.addf %51, %57 : vector<256x16xf32>
    %59 = vector.extract_strided_slice %1 {offsets = [0, 1, 1, 0], sizes = [1, 16, 16, 3], strides = [1, 1, 1, 1]} : vector<4x17x17x3xf32> to vector<1x16x16x3xf32>
    %60 = vector.shape_cast %59 : vector<1x16x16x3xf32> to vector<16x16x3xf32>
    %61 = vector.shape_cast %60 : vector<16x16x3xf32> to vector<256x3xf32>
    %c8 = arith.constant 8 : index
    %c0_29 = arith.constant 0 : index
    %c0_30 = arith.constant 0 : index
    %62 = vector.load %arg2[%c8, %c0_29, %c0_30] : memref<9x3x16xf32, #tpu.memory_space<vmem>>, vector<1x3x16xf32>
    %63 = vector.shape_cast %62 : vector<1x3x16xf32> to vector<3x16xf32>
    %cst_31 = arith.constant dense<0.000000e+00> : vector<256x16xf32>
    %64 = tpu.matmul %61, %63, %cst_31 {dimension_numbers = #tpu.dot_dimension_numbers<[1], [0], [0], [1], [0, 0, 1, 1], [], []>} : vector<256x3xf32>, vector<3x16xf32>, vector<256x16xf32> -> vector<256x16xf32>
    %65 = arith.addf %58, %64 : vector<256x16xf32>
    %c0_32 = arith.constant 0 : index
    %c0_33 = arith.constant 0 : index
    %66 = vector.load %arg3[%c0_32, %c0_33] : memref<1x16xf32, #tpu.memory_space<vmem>>, vector<1x16xf32>
    %67 = vector.broadcast %66 : vector<1x16xf32> to vector<256x16xf32>
    %68 = arith.addf %65, %67 : vector<256x16xf32>
    %cst_34 = arith.constant 0.000000e+00 : f32
    %69 = vector.broadcast %cst_34 : f32 to vector<256x16xf32>
    %70 = arith.maximumf %68, %69 : vector<256x16xf32>
    %71 = vector.shape_cast %70 : vector<256x16xf32> to vector<16x16x16xf32>
    %c0_35 = arith.constant 0 : index
    %c0_36 = arith.constant 0 : index
    %c0_37 = arith.constant 0 : index
    %c0_38 = arith.constant 0 : index
    %72 = vector.load %arg4[%c0_35, %c0_36, %c0_37, %c0_38] : memref<1x16x16x16xf32, #tpu.memory_space<vmem>>, vector<1x16x16x16xf32>
    %73 = vector.shape_cast %72 : vector<1x16x16x16xf32> to vector<16x16x16xf32>
    %74 = vector.shape_cast %71 : vector<16x16x16xf32> to vector<1x16x16x16xf32>
    tpu.vector_store %arg4[%c0_35, %c0_36, %c0_37, %c0_38], %74 {strides = array<i32>} : memref<1x16x16x16xf32, #tpu.memory_space<vmem>>, vector<1x16x16x16xf32>,
    %75 = tpu.transpose %70, [1, 0] : vector<256x16xf32> -> vector<16x256xf32>
    %c0_39 = arith.constant 0 : index
    %c0_40 = arith.constant 0 : index
    %c0_41 = arith.constant 0 : index
    %76 = vector.load %arg5[%c0_39, %c0_40, %c0_41] : memref<1x16x256xf32, #tpu.memory_space<vmem>>, vector<1x16x256xf32>
    %77 = vector.shape_cast %76 : vector<1x16x256xf32> to vector<16x256xf32>
    %78 = vector.shape_cast %75 : vector<16x256xf32> to vector<1x16x256xf32>
    tpu.vector_store %arg5[%c0_39, %c0_40, %c0_41], %78 {strides = array<i32>} : memref<1x16x256xf32, #tpu.memory_space<vmem>>, vector<1x16x256xf32>,
    return
  }
  func.func @transform_0(%arg0: i32) -> (i32, i32, i32, i32, i32) {
    %c0_i32 = arith.constant 0 : i32
    %c0_i32_0 = arith.constant 0 : i32
    %c0_i32_1 = arith.constant 0 : i32
    %c0_i32_2 = arith.constant 0 : i32
    %c0_i32_3 = arith.constant 0 : i32
    return %arg0, %c0_i32, %c0_i32_0, %c0_i32_1, %c0_i32_2 : i32, i32, i32, i32, i32
  }
  func.func @transform_1(%arg0: i32) -> (i32, i32, i32) {
    %c0_i32 = arith.constant 0 : i32
    %c0_i32_0 = arith.constant 0 : i32
    %c0_i32_1 = arith.constant 0 : i32
    %c0_i32_2 = arith.constant 0 : i32
    return %c0_i32, %c0_i32_0, %c0_i32_1 : i32, i32, i32
  }
  func.func @transform_2(%arg0: i32) -> (i32, i32) {
    %c0_i32 = arith.constant 0 : i32
    %c0_i32_0 = arith.constant 0 : i32
    %c0_i32_1 = arith.constant 0 : i32
    return %c0_i32, %c0_i32_0 : i32, i32
  }
  func.func @transform_3(%arg0: i32) -> (i32, i32, i32, i32) {
    %c0_i32 = arith.constant 0 : i32
    %c0_i32_0 = arith.constant 0 : i32
    %c0_i32_1 = arith.constant 0 : i32
    %c0_i32_2 = arith.constant 0 : i32
    return %arg0, %c0_i32, %c0_i32_0, %c0_i32_1 : i32, i32, i32, i32
  }
  func.func @transform_4(%arg0: i32) -> (i32, i32, i32) {
    %c0_i32 = arith.constant 0 : i32
    %c0_i32_0 = arith.constant 0 : i32
    %c0_i32_1 = arith.constant 0 : i32
    return %arg0, %c0_i32, %c0_i32_0 : i32, i32, i32
  }
}

</mosaic_0001>

<llo_original>
// kernel: tpu_custom_call.1
$region0: #{tpu_custom_call.1}
  #allocation0 [shape = 'u32[]', space=smem, size = 0x4, offset = 0x4, fixed_abs, tag = 'smem constant byte address 0x4 - core index']
  #allocation1 [shape = 'u32[144,128]{1,0:T(1,128)}', space=vmem, size = 0x12000, scoped, tag = 'internal scratch']
  %s0 = inlined_call_operand.vmem [shape: f32[2,4,17,17,3], index: 0, kind: input, shape index: {}]
  %s1 = inlined_call_operand.vmem [shape: f32[9,3,16], index: 1, kind: input, shape index: {}]
  %s2 = inlined_call_operand.vmem [shape: f32[1,16], index: 2, kind: input, shape index: {}]
  %s3 = inlined_call_operand.hbm [shape: f32[2,16,16,16], index: 3, kind: output, shape index: {0}]
  %s4 = inlined_call_operand.hbm [shape: f32[2,16,256], index: 4, kind: output, shape index: {1}]
  %5 = xla_tuple %s3, %s4
  %s6 = sld [smem:[#allocation0]]
  $region53: #{tpu_custom_call.1} parent=0
    _
  %s8 = ssub.s32 1, %s6
  %s9 = scalar_select 0, %s8, %s6
  $region1: #{tpu_custom_call.1} parent=0
    #allocation2 [shape = 'u8[262144]{0}', space=vmem, size = 0x40000, scoped, tag = 'output window, operand 0']
    #allocation3 [shape = 's32[2]{0}', space=sflag, size = 0x8, scoped, tag = 'scoped memory for tpu_custom_call.1']
    #allocation4 [shape = 'u8[32768]{0}', space=vmem, size = 0x8000, scoped, tag = 'output window, operand 1']
    #allocation5 [shape = 's32[2]{0}', space=sflag, size = 0x8, scoped, tag = 'scoped memory for tpu_custom_call.1']
    %10 = vsyncpa [#allocation3], 0
    %s11 = scalar_lea.sflag [#allocation3], 1
    %12 = vsyncpa %s11, 0
    %13 = vsyncpa [#allocation5], 0
    %s14 = scalar_lea.sflag [#allocation5], 1
    %15 = vsyncpa %s14, 0
    loop: start=0, step=1, limit=4
    $region2: #{tpu_custom_call.1} parent=1 // loop_pre_header
      _
    $region3: #{tpu_custom_call.1} parent=1 // loop_header
      %s17 = sphi 0, %s21
      %p18 = scmp.ge.s32.totalorder %s17, 4
      %s27 = sphi 0, %s29
      %s30 = sphi 0, %s27
      %s31 = sphi 0, %s30
      %s47 = sphi 0, %s31
      %s51 = sphi 0, %s51
      %s53 = sphi 0, %s51
      %s54 = sphi 0, %s53
      %s68 = sphi 0, %s54
      %s72 = sphi 0, %s72
      %s74 = sphi 0, %s72
      %s75 = sphi 0, %s74
      %s89 = sphi 0, %s75
      %s95 = sphi 0, %s97
      %s98 = sphi 0, %s95
      %s99 = sphi 0, %s98
      %s115 = sphi 0, %s99
      %s121 = sphi 0, %s123
      %s124 = sphi 0, %s121
      %s125 = sphi 0, %s124
      %s141 = sphi 0, %s125
    $region4: #{tpu_custom_call.1} parent=1 // loop_header_branch
      %20 = sbr.rel (%p18) target = $region8
    $region5: #{tpu_custom_call.1} parent=1 // loop_body
      %s22 = ssub.s32 %s17, 1
      %s23 = ssub.s32 %s17, 2
      %s24 = sadd.s32 %s17, 1
      %s25 = ssub.s32 %s17, %s24
      %p26 = scmp.eq.s32.totalorder %s25, 0
      %s28 = sadd.s32 %s27, 1
      %s29 = scalar_select %p26, %s27, %s28
      %p32 = pneg %p26
      %p33 = scmp.eq.s32.totalorder %s17, 1
      %p34 = por %p32, %p33
      %p35 = scmp.ne.s32.totalorder %s27, %s30
      %p36 = scmp.eq.s32.totalorder %s17, 0
      %p37 = por %p35, %p36
      %p38 = scmp.ne.s32.totalorder %s27, %s30
      %p39 = scmp.eq.s32.totalorder %s22, 1
      %p40 = por %p38, %p39
      %p41 = scmp.ne.s32.totalorder %s30, %s31
      %p42 = scmp.eq.s32.totalorder %s22, 0
      %p43 = por %p41, %p42
      %p44 = scmp.ne.s32.totalorder %s30, %s31
      %p45 = scmp.eq.s32.totalorder %s23, 1
      %p46 = por %p44, %p45
      %p48 = scmp.ne.s32.totalorder %s31, %s47
      %p49 = scmp.eq.s32.totalorder %s23, 0
      %p50 = por %p48, %p49
      %s52 = sadd.s32 %s51, 1
      %p55 = scmp.eq.s32.totalorder %s17, 1
      %p56 = scmp.ne.s32.totalorder %s51, %s53
      %p57 = scmp.eq.s32.totalorder %s17, 0
      %p58 = por %p56, %p57
      %p59 = scmp.ne.s32.totalorder %s51, %s53
      %p60 = scmp.eq.s32.totalorder %s22, 1
      %p61 = por %p59, %p60
      %p62 = scmp.ne.s32.totalorder %s53, %s54
      %p63 = scmp.eq.s32.totalorder %s22, 0
      %p64 = por %p62, %p63
      %p65 = scmp.ne.s32.totalorder %s53, %s54
      %p66 = scmp.eq.s32.totalorder %s23, 1
      %p67 = por %p65, %p66
      %p69 = scmp.ne.s32.totalorder %s54, %s68
      %p70 = scmp.eq.s32.totalorder %s23, 0
      %p71 = por %p69, %p70
      %s73 = sadd.s32 %s72, 1
      %p76 = scmp.eq.s32.totalorder %s17, 1
      %p77 = scmp.ne.s32.totalorder %s72, %s74
      %p78 = scmp.eq.s32.totalorder %s17, 0
      %p79 = por %p77, %p78
      %p80 = scmp.ne.s32.totalorder %s72, %s74
      %p81 = scmp.eq.s32.totalorder %s22, 1
      %p82 = por %p80, %p81
      %p83 = scmp.ne.s32.totalorder %s74, %s75
      %p84 = scmp.eq.s32.totalorder %s22, 0
      %p85 = por %p83, %p84
      %p86 = scmp.ne.s32.totalorder %s74, %s75
      %p87 = scmp.eq.s32.totalorder %s23, 1
      %p88 = por %p86, %p87
      %p90 = scmp.ne.s32.totalorder %s75, %s89
      %p91 = scmp.eq.s32.totalorder %s23, 0
      %p92 = por %p90, %p91
      %s93 = ssub.s32 %s17, %s24
      %p94 = scmp.eq.s32.totalorder %s93, 0
      %s96 = sadd.s32 %s95, 1
      %s97 = scalar_select %p94, %s95, %s96
      %p100 = pneg %p94
      %p101 = scmp.eq.s32.totalorder %s17, 1
      %p102 = por %p100, %p101
      %p103 = scmp.ne.s32.totalorder %s95, %s98
      %p104 = scmp.eq.s32.totalorder %s17, 0
      %p105 = por %p103, %p104
      %p106 = scmp.ne.s32.totalorder %s95, %s98
      %p107 = scmp.eq.s32.totalorder %s22, 1
      %p108 = por %p106, %p107
      %p109 = scmp.ne.s32.totalorder %s98, %s99
      %p110 = scmp.eq.s32.totalorder %s22, 0
      %p111 = por %p109, %p110
      %p112 = scmp.ne.s32.totalorder %s98, %s99
      %p113 = scmp.eq.s32.totalorder %s23, 1
      %p114 = por %p112, %p113
      %p116 = scmp.ne.s32.totalorder %s99, %s115
      %p117 = scmp.eq.s32.totalorder %s23, 0
      %p118 = por %p116, %p117
      %s119 = ssub.s32 %s17, %s24
      %p120 = scmp.eq.s32.totalorder %s119, 0
      %s122 = sadd.s32 %s121, 1
      %s123 = scalar_select %p120, %s121, %s122
      %p126 = pneg %p120
      %p127 = scmp.eq.s32.totalorder %s17, 1
      %p128 = por %p126, %p127
      %p129 = scmp.ne.s32.totalorder %s121, %s124
      %p130 = scmp.eq.s32.totalorder %s17, 0
      %p131 = por %p129, %p130
      %p132 = scmp.ne.s32.totalorder %s121, %s124
      %p133 = scmp.eq.s32.totalorder %s22, 1
      %p134 = por %p132, %p133
      %p135 = scmp.ne.s32.totalorder %s124, %s125
      %p136 = scmp.eq.s32.totalorder %s22, 0
      %p137 = por %p135, %p136
      %p138 = scmp.ne.s32.totalorder %s124, %s125
      %p139 = scmp.eq.s32.totalorder %s23, 1
      %p140 = por %p138, %p139
      %p142 = scmp.ne.s32.totalorder %s125, %s141
      %p143 = scmp.eq.s32.totalorder %s23, 0
      %p144 = por %p142, %p143
      %p145 = scmp.le.s32.totalorder 1, %s17
      %p146 = scmp.lt.s32.totalorder %s17, 3
      %p147 = pnand %p145, %p146
      %p148 = pneg %p147
      // Predicated region
      $region9: #{tpu_custom_call.1} parent=5 // pred_check
        _
      $region10: #{tpu_custom_call.1} parent=5 // pred_check_branch
        %150 = sbr.rel (%p147) target = $region12
      $region11: #{tpu_custom_call.1} parent=5 // pred_region
        %s151 = ssub.s32 %s17, 1
        // Predicated region
        $region13: #{tpu_custom_call.1} parent=11 // pred_check
          %p152 = pneg %p64
        $region14: #{tpu_custom_call.1} parent=11 // pred_check_branch
          %154 = sbr.rel (%p152) target = $region16
        $region15: #{tpu_custom_call.1} parent=11 // pred_region
          _
        $region16: #{tpu_custom_call.1} parent=11 // pred_fallthru
          _
        // Predicated region
        $region17: #{tpu_custom_call.1} parent=11 // pred_check
          %p155 = pneg %p85
        $region18: #{tpu_custom_call.1} parent=11 // pred_check_branch
          %157 = sbr.rel (%p155) target = $region20
        $region19: #{tpu_custom_call.1} parent=11 // pred_region
          _
        $region20: #{tpu_custom_call.1} parent=11 // pred_fallthru
          _
      $region12: #{tpu_custom_call.1} parent=5 // pred_fallthru
        _
      %p158 = scmp.lt.s32.totalorder %s17, 2
      // Predicated region
      $region21: #{tpu_custom_call.1} parent=5 // pred_check
        %p159 = pneg %p158
      $region22: #{tpu_custom_call.1} parent=5 // pred_check_branch
        %161 = sbr.rel (%p159) target = $region24
      $region23: #{tpu_custom_call.1} parent=5 // pred_region
        // Predicated region
        $region25: #{tpu_custom_call.1} parent=23 // pred_check
          %p162 = pneg %p37
        $region26: #{tpu_custom_call.1} parent=23 // pred_check_branch
          %164 = sbr.rel (%p162) target = $region28
        $region27: #{tpu_custom_call.1} parent=23 // pred_region
          %p165 = scmp.lt.s32.totalorder %s17, 1
          %s166 = scalar_select %p165, %s17, 1
          %s167 = smul.addr %s166, 204
          %s168 = smul.addr %s167, 8
          %s169 = scalar_lea.vmem %s0, %s168
        $region28: #{tpu_custom_call.1} parent=23 // pred_fallthru
          _
      $region24: #{tpu_custom_call.1} parent=5 // pred_fallthru
        _
      %p170 = scmp.le.s32.totalorder 1, %s17
      %p171 = scmp.lt.s32.totalorder %s17, 3
      %p172 = pnand %p170, %p171
      %p173 = pneg %p172
      // Predicated region
      $region29: #{tpu_custom_call.1} parent=5 // pred_check
        _
      $region30: #{tpu_custom_call.1} parent=5 // pred_check_branch
        %175 = sbr.rel (%p172) target = $region32
      $region31: #{tpu_custom_call.1} parent=5 // pred_region
        %s176 = ssub.s32 %s17, 1
        %p177 = scmp.lt.s32.totalorder %s22, 1
        %s178 = scalar_select %p177, %s22, 1
        %s179 = smul.addr %s178, 204
        %s180 = smul.addr %s179, 8
        %s181 = scalar_lea.vmem %s0, %s180
        %p182 = pneg %p43
        %p183 = pneg %p40
        %p184 = pneg %p64
        %p185 = pneg %p61
        %p186 = pneg %p85
        %p187 = pneg %p82
        %p188 = pneg %p111
        %p189 = pneg %p108
        %s190 = sand.u32 %s98, 1
        %s191 = scalar_lea.sflag [#allocation3], %s190
        %s192 = sand.u32 %s98, 1
        %s193 = smul.addr %s192, 256
        %s194 = scalar_lea.vmem [#allocation2], %s193
        %p195 = pneg %p137
        %p196 = pneg %p134
        %s197 = sand.u32 %s124, 1
        %s198 = scalar_lea.sflag [#allocation5], %s197
        %s199 = sand.u32 %s124, 1
        %s200 = smul.addr %s199, 32
        %s201 = scalar_lea.vmem [#allocation4], %s200
        %p202 = scmp.lt.s32.totalorder %s22, 1
        %s203 = scalar_select %p202, %s22, 1
        %s204 = smul.addr %s203, 204
        %s205 = smul.addr %s204, 8
        %s206 = scalar_lea.vmem %s0, %s205
        %v207 = vld [vmem:[%s206] sm:$0xff]
        %v208 = vld [vmem:[%s206 + $0x8] sm:$0xff]
        %v209 = vld [vmem:[%s206 + $0x10] sm:$0x1]
        %v210 = vld [vmem:[%s206 + $0x18] sm:$0xff]
        %v211 = vld [vmem:[%s206 + $0x20] sm:$0xff]
        %v212 = vld [vmem:[%s206 + $0x28] sm:$0x1]
        %v213 = vld [vmem:[%s206 + $0x30] sm:$0xff]
        %v214 = vld [vmem:[%s206 + $0x38] sm:$0xff]
        %v215 = vld [vmem:[%s206 + $0x40] sm:$0x1]
        %v216 = vld [vmem:[%s206 + $0x48] sm:$0xff]
        %v217 = vld [vmem:[%s206 + $0x50] sm:$0xff]
        %v218 = vld [vmem:[%s206 + $0x58] sm:$0x1]
        %v219 = vld [vmem:[%s206 + $0x60] sm:$0xff]
        %v220 = vld [vmem:[%s206 + $0x68] sm:$0xff]
        %v221 = vld [vmem:[%s206 + $0x70] sm:$0x1]
        %v222 = vld [vmem:[%s206 + $0x78] sm:$0xff]
        %v223 = vld [vmem:[%s206 + $0x80] sm:$0xff]
        %v224 = vld [vmem:[%s206 + $0x88] sm:$0x1]
        %v225 = vld [vmem:[%s206 + $0x90] sm:$0xff]
        %v226 = vld [vmem:[%s206 + $0x98] sm:$0xff]
        %v227 = vld [vmem:[%s206 + $0xa0] sm:$0x1]
        %v228 = vld [vmem:[%s206 + $0xa8] sm:$0xff]
        %v229 = vld [vmem:[%s206 + $0xb0] sm:$0xff]
        %v230 = vld [vmem:[%s206 + $0xb8] sm:$0x1]
        %v231 = vld [vmem:[%s206 + $0xc0] sm:$0xff]
        %v232 = vld [vmem:[%s206 + $0xc8] sm:$0xff]
        %v233 = vld [vmem:[%s206 + $0xd0] sm:$0x1]
        %v234 = vld [vmem:[%s206 + $0xd8] sm:$0xff]
        %v235 = vld [vmem:[%s206 + $0xe0] sm:$0xff]
        %v236 = vld [vmem:[%s206 + $0xe8] sm:$0x1]
        %v237 = vld [vmem:[%s206 + $0xf0] sm:$0xff]
        %v238 = vld [vmem:[%s206 + $0xf8] sm:$0xff]
        %v239 = vld [vmem:[%s206 + $0x100] sm:$0x1]
        %v240 = vld [vmem:[%s206 + $0x108] sm:$0xff]
        %v241 = vld [vmem:[%s206 + $0x110] sm:$0xff]
        %v242 = vld [vmem:[%s206 + $0x118] sm:$0x1]
        %v243 = vld [vmem:[%s206 + $0x120] sm:$0xff]
        %v244 = vld [vmem:[%s206 + $0x128] sm:$0xff]
        %v245 = vld [vmem:[%s206 + $0x130] sm:$0x1]
        %v246 = vld [vmem:[%s206 + $0x138] sm:$0xff]
        %v247 = vld [vmem:[%s206 + $0x140] sm:$0xff]
        %v248 = vld [vmem:[%s206 + $0x148] sm:$0x1]
        %v249 = vld [vmem:[%s206 + $0x150] sm:$0xff]
        %v250 = vld [vmem:[%s206 + $0x158] sm:$0xff]
        %v251 = vld [vmem:[%s206 + $0x160] sm:$0x1]
        %v252 = vld [vmem:[%s206 + $0x168] sm:$0xff]
        %v253 = vld [vmem:[%s206 + $0x170] sm:$0xff]
        %v254 = vld [vmem:[%s206 + $0x178] sm:$0x1]
        %v255 = vld [vmem:[%s206 + $0x180] sm:$0xff]
        %v256 = vld [vmem:[%s206 + $0x188] sm:$0xff]
        %v257 = vld [vmem:[%s206 + $0x190] sm:$0x1]
        %v258 = vld [vmem:[%s206 + $0x198] sm:$0xff]
        %v259 = vld [vmem:[%s206 + $0x1a0] sm:$0xff]
        %v260 = vld [vmem:[%s206 + $0x1b0] sm:$0xff]
        %v261 = vld [vmem:[%s206 + $0x1b8] sm:$0xff]
        %v262 = vld [vmem:[%s206 + $0x1c8] sm:$0xff]
        %v263 = vld [vmem:[%s206 + $0x1d0] sm:$0xff]
        %v264 = vld [vmem:[%s206 + $0x1e0] sm:$0xff]
        %v265 = vld [vmem:[%s206 + $0x1e8] sm:$0xff]
        %v266 = vld [vmem:[%s206 + $0x1f8] sm:$0xff]
        %v267 = vld [vmem:[%s206 + $0x200] sm:$0xff]
        %v268 = vld [vmem:[%s206 + $0x210] sm:$0xff]
        %v269 = vld [vmem:[%s206 + $0x218] sm:$0xff]
        %v270 = vld [vmem:[%s206 + $0x228] sm:$0xff]
        %v271 = vld [vmem:[%s206 + $0x230] sm:$0xff]
        %v272 = vld [vmem:[%s206 + $0x240] sm:$0xff]
        %v273 = vld [vmem:[%s206 + $0x248] sm:$0xff]
        %v274 = vld [vmem:[%s206 + $0x258] sm:$0xff]
        %v275 = vld [vmem:[%s206 + $0x260] sm:$0xff]
        %v276 = vld [vmem:[%s206 + $0x270] sm:$0xff]
        %v277 = vld [vmem:[%s206 + $0x278] sm:$0xff]
        %v278 = vld [vmem:[%s206 + $0x288] sm:$0xff]
        %v279 = vld [vmem:[%s206 + $0x290] sm:$0xff]
        %v280 = vld [vmem:[%s206 + $0x2a0] sm:$0xff]
        %v281 = vld [vmem:[%s206 + $0x2a8] sm:$0xff]
        %v282 = vld [vmem:[%s206 + $0x2b8] sm:$0xff]
        %v283 = vld [vmem:[%s206 + $0x2c0] sm:$0xff]
        %v284 = vld [vmem:[%s206 + $0x2d0] sm:$0xff]
        %v285 = vld [vmem:[%s206 + $0x2d8] sm:$0xff]
        %v286 = vld [vmem:[%s206 + $0x2e8] sm:$0xff]
        %v287 = vld [vmem:[%s206 + $0x2f0] sm:$0xff]
        %v288 = vld [vmem:[%s206 + $0x300] sm:$0xff]
        %v289 = vld [vmem:[%s206 + $0x308] sm:$0xff]
        %v290 = vld [vmem:[%s206 + $0x318] sm:$0xff]
        %v291 = vld [vmem:[%s206 + $0x320] sm:$0xff]
        %v292 = vld [vmem:[%s206 + $0x330] sm:$0xff]
        %v293 = vld [vmem:[%s206 + $0x338] sm:$0xff]
        %v294 = vld [vmem:[%s206 + $0x340] sm:$0x1]
        %v295 = vld [vmem:[%s206 + $0x348] sm:$0xff]
        %v296 = vld [vmem:[%s206 + $0x350] sm:$0xff]
        %v297 = vld [vmem:[%s206 + $0x358] sm:$0x1]
        %v298 = vld [vmem:[%s206 + $0x360] sm:$0xff]
        %v299 = vld [vmem:[%s206 + $0x368] sm:$0xff]
        %v300 = vld [vmem:[%s206 + $0x370] sm:$0x1]
        %v301 = vld [vmem:[%s206 + $0x378] sm:$0xff]
        %v302 = vld [vmem:[%s206 + $0x380] sm:$0xff]
        %v303 = vld [vmem:[%s206 + $0x388] sm:$0x1]
        %v304 = vld [vmem:[%s206 + $0x390] sm:$0xff]
        %v305 = vld [vmem:[%s206 + $0x398] sm:$0xff]
        %v306 = vld [vmem:[%s206 + $0x3a0] sm:$0x1]
        %v307 = vld [vmem:[%s206 + $0x3a8] sm:$0xff]
        %v308 = vld [vmem:[%s206 + $0x3b0] sm:$0xff]
        %v309 = vld [vmem:[%s206 + $0x3b8] sm:$0x1]
        %v310 = vld [vmem:[%s206 + $0x3c0] sm:$0xff]
        %v311 = vld [vmem:[%s206 + $0x3c8] sm:$0xff]
        %v312 = vld [vmem:[%s206 + $0x3d0] sm:$0x1]
        %v313 = vld [vmem:[%s206 + $0x3d8] sm:$0xff]
        %v314 = vld [vmem:[%s206 + $0x3e0] sm:$0xff]
        %v315 = vld [vmem:[%s206 + $0x3e8] sm:$0x1]
        %v316 = vld [vmem:[%s206 + $0x3f0] sm:$0xff]
        %v317 = vld [vmem:[%s206 + $0x3f8] sm:$0xff]
        %v318 = vld [vmem:[%s206 + $0x400] sm:$0x1]
        %v319 = vld [vmem:[%s206 + $0x408] sm:$0xff]
        %v320 = vld [vmem:[%s206 + $0x410] sm:$0xff]
        %v321 = vld [vmem:[%s206 + $0x418] sm:$0x1]
        %v322 = vld [vmem:[%s206 + $0x420] sm:$0xff]
        %v323 = vld [vmem:[%s206 + $0x428] sm:$0xff]
        %v324 = vld [vmem:[%s206 + $0x430] sm:$0x1]
        %v325 = vld [vmem:[%s206 + $0x438] sm:$0xff]
        %v326 = vld [vmem:[%s206 + $0x440] sm:$0xff]
        %v327 = vld [vmem:[%s206 + $0x448] sm:$0x1]
        %v328 = vld [vmem:[%s206 + $0x450] sm:$0xff]
        %v329 = vld [vmem:[%s206 + $0x458] sm:$0xff]
        %v330 = vld [vmem:[%s206 + $0x460] sm:$0x1]
        %v331 = vld [vmem:[%s206 + $0x468] sm:$0xff]
        %v332 = vld [vmem:[%s206 + $0x470] sm:$0xff]
        %v333 = vld [vmem:[%s206 + $0x478] sm:$0x1]
        %v334 = vld [vmem:[%s206 + $0x480] sm:$0xff]
        %v335 = vld [vmem:[%s206 + $0x488] sm:$0xff]
        %v336 = vld [vmem:[%s206 + $0x490] sm:$0x1]
        %v337 = vld [vmem:[%s206 + $0x498] sm:$0xff]
        %v338 = vld [vmem:[%s206 + $0x4a0] sm:$0xff]
        %v339 = vld [vmem:[%s206 + $0x4a8] sm:$0x1]
        %v340 = vld [vmem:[%s206 + $0x4c8] sm:$0xff]
        %v341 = vld [vmem:[%s206 + $0x4d0] sm:$0xff]
        %v342 = vld [vmem:[%s206 + $0x4e0] sm:$0xff]
        %v343 = vld [vmem:[%s206 + $0x4e8] sm:$0xff]
        %v344 = vld [vmem:[%s206 + $0x4f8] sm:$0xff]
        %v345 = vld [vmem:[%s206 + $0x500] sm:$0xff]
        %v346 = vld [vmem:[%s206 + $0x510] sm:$0xff]
        %v347 = vld [vmem:[%s206 + $0x518] sm:$0xff]
        %v348 = vld [vmem:[%s206 + $0x528] sm:$0xff]
        %v349 = vld [vmem:[%s206 + $0x530] sm:$0xff]
        %v350 = vld [vmem:[%s206 + $0x540] sm:$0xff]
        %v351 = vld [vmem:[%s206 + $0x548] sm:$0xff]
        %v352 = vld [vmem:[%s206 + $0x558] sm:$0xff]
        %v353 = vld [vmem:[%s206 + $0x560] sm:$0xff]
        %v354 = vld [vmem:[%s206 + $0x570] sm:$0xff]
        %v355 = vld [vmem:[%s206 + $0x578] sm:$0xff]
        %v356 = vld [vmem:[%s206 + $0x588] sm:$0xff]
        %v357 = vld [vmem:[%s206 + $0x590] sm:$0xff]
        %v358 = vld [vmem:[%s206 + $0x5a0] sm:$0xff]
        %v359 = vld [vmem:[%s206 + $0x5a8] sm:$0xff]
        %v360 = vld [vmem:[%s206 + $0x5b8] sm:$0xff]
        %v361 = vld [vmem:[%s206 + $0x5c0] sm:$0xff]
        %v362 = vld [vmem:[%s206 + $0x5d0] sm:$0xff]
        %v363 = vld [vmem:[%s206 + $0x5d8] sm:$0xff]
        %v364 = vld [vmem:[%s206 + $0x5e8] sm:$0xff]
        %v365 = vld [vmem:[%s206 + $0x5f0] sm:$0xff]
        %v366 = vld [vmem:[%s206 + $0x600] sm:$0xff]
        %v367 = vld [vmem:[%s206 + $0x608] sm:$0xff]
        %v368 = vld [vmem:[%s206 + $0x618] sm:$0xff]
        %v369 = vld [vmem:[%s206 + $0x620] sm:$0xff]
        %v370 = vld [vmem:[%s206 + $0x630] sm:$0xff]
        %v371 = vld [vmem:[%s206 + $0x638] sm:$0xff]
        %v372 = vld [vmem:[%s1] sm:$0x7]
        %s373 = scalar_lea.vmem %s1, 4
        %v374 = vld [vmem:[%s373] sm:$0x7]
        %vm375 = vcmask 23552
        %v377 = vsel %vm375, %v258, 0
        %v380 = vsel %vm375, %v259, 0
        %v383 = vsel %vm375, %v260, 0
        %v386 = vsel %vm375, %v261, 0
        %v389 = vsel %vm375, %v262, 0
        %v392 = vsel %vm375, %v263, 0
        %v395 = vsel %vm375, %v264, 0
        %v398 = vsel %vm375, %v265, 0
        %v401 = vsel %vm375, %v266, 0
        %v404 = vsel %vm375, %v267, 0
        %v407 = vsel %vm375, %v268, 0
        %v410 = vsel %vm375, %v269, 0
        %v413 = vsel %vm375, %v270, 0
        %v416 = vsel %vm375, %v271, 0
        %v419 = vsel %vm375, %v272, 0
        %v422 = vsel %vm375, %v273, 0
        %v425 = vsel %vm375, %v274, 0
        %v428 = vsel %vm375, %v275, 0
        %v431 = vsel %vm375, %v276, 0
        %v434 = vsel %vm375, %v277, 0
        %v437 = vsel %vm375, %v278, 0
        %v440 = vsel %vm375, %v279, 0
        %v443 = vsel %vm375, %v280, 0
        %v446 = vsel %vm375, %v281, 0
        %v449 = vsel %vm375, %v282, 0
        %v452 = vsel %vm375, %v283, 0
        %v455 = vsel %vm375, %v284, 0
        %v458 = vsel %vm375, %v285, 0
        %v461 = vsel %vm375, %v286, 0
        %v464 = vsel %vm375, %v287, 0
        %v467 = vsel %vm375, %v288, 0
        %v470 = vsel %vm375, %v289, 0
        %vm472 = vcmask 1042432
        %v474 = vsel %vm472, %v374, 0
        %476 = vmatprep.subr.mxu0 0.0
        %477 = vmatpush1.msra.mxu0 0.0
        %478 = vmatprep.subr.mxu0 0.0
        %479 = vmatpush1.msra.mxu0 0.0
        %480 = vmatprep.subr.mxu0 0.0
        %481 = vmatpush1.msra.mxu0 0.0
        %482 = vmatprep.subr.mxu0 0.0
        %483 = vmatpush1.msra.mxu0 0.0
        %484 = vmatprep.subr.mxu0 0.0
        %485 = vmatpush1.msra.mxu0 0.0
        %486 = vmatprep.subr.mxu0 0.0
        %487 = vmatpush1.msra.mxu0 0.0
        %488 = vmatprep.subr.mxu0 0.0
        %489 = vmatpush1.msra.mxu0 0.0
        %490 = vmatprep.subr.mxu0 0.0
        %491 = vmatpush1.msra.mxu0 0.0
        %492 = vmatprep.subr.mxu0 0.0
        %493 = vmatpush1.msra.mxu0 0.0
        %494 = vmatprep.subr.mxu0 0.0
        %495 = vmatpush1.msra.mxu0 0.0
        %496 = vmatprep.subr.mxu0 0.0
        %497 = vmatpush1.msra.mxu0 0.0
        %498 = vmatprep.subr.mxu0 0.0
        %499 = vmatpush1.msra.mxu0 0.0
        %500 = vmatprep.subr.mxu0 0.0
        %501 = vmatpush1.msra.mxu0 0.0
        %502 = vmatprep.subr.mxu0 0.0
        %503 = vmatpush1.msra.mxu0 0.0
        %504 = vmatprep.subr.mxu0 0.0
        %505 = vmatpush1.msra.mxu0 0.0
        %506 = vmatprep.subr.mxu0 0.0
        %507 = vmatpush1.msra.mxu0 %v474
        %508 = vmatprep.subr.mxu0 0.0
        %509 = vmatpush2.msra.mxu0 0.0
        %510 = vmatprep.subr.mxu0 0.0
        %511 = vmatpush2.msra.mxu0 0.0
        %512 = vmatprep.subr.mxu0 0.0
        %513 = vmatpush2.msra.mxu0 0.0
        %514 = vmatprep.subr.mxu0 0.0
        %515 = vmatpush2.msra.mxu0 0.0
        %516 = vmatprep.subr.mxu0 0.0
        %517 = vmatpush2.msra.mxu0 0.0
        %518 = vmatprep.subr.mxu0 0.0
        %519 = vmatpush2.msra.mxu0 0.0
        %520 = vmatprep.subr.mxu0 0.0
        %521 = vmatpush2.msra.mxu0 0.0
        %522 = vmatprep.subr.mxu0 0.0
        %523 = vmatpush2.msra.mxu0 0.0
        %524 = vmatprep.subr.mxu0 0.0
        %525 = vmatpush2.msra.mxu0 0.0
        %526 = vmatprep.subr.mxu0 0.0
        %527 = vmatpush2.msra.mxu0 0.0
        %528 = vmatprep.subr.mxu0 0.0
        %529 = vmatpush2.msra.mxu0 0.0
        %530 = vmatprep.subr.mxu0 0.0
        %531 = vmatpush2.msra.mxu0 0.0
        %532 = vmatprep.subr.mxu0 0.0
        %533 = vmatpush2.msra.mxu0 0.0
        %534 = vmatprep.subr.mxu0 0.0
        %535 = vmatpush2.msra.mxu0 0.0
        %536 = vmatprep.subr.mxu0 0.0
        %537 = vmatpush2.msra.mxu0 0.0
        %538 = vmatprep.subr.mxu0 0.0
        %539 = vmatpush2.msra.mxu0 0.0
        %540 = vmatprep.mubr.f32.mxu0 0.0
        %541 = vmatmul.mubr.f32.gmra.mxu0 %v377
        %v542 = vpop.f32.mrf.mxu0
        %v543 = vadd.f32 0.0, %v542
        %v544 = vpop.f32.mrf.mxu0
        %545 = vmatprep.mubr.f32.mxu0 0.0
        %546 = vmatmul.mubr.f32.gmra.mxu0 %v380
        %v547 = vpop.f32.mrf.mxu0
        %v548 = vadd.f32 0.0, %v547
        %v549 = vpop.f32.mrf.mxu0
        %550 = vmatprep.mubr.f32.mxu0 0.0
        %551 = vmatmul.mubr.f32.gmra.mxu0 %v383
        %v552 = vpop.f32.mrf.mxu0
        %v553 = vadd.f32 0.0, %v552
        %v554 = vpop.f32.mrf.mxu0
        %555 = vmatprep.mubr.f32.mxu0 0.0
        %556 = vmatmul.mubr.f32.gmra.mxu0 %v386
        %v557 = vpop.f32.mrf.mxu0
        %v558 = vadd.f32 0.0, %v557
        %v559 = vpop.f32.mrf.mxu0
        %560 = vmatprep.mubr.f32.mxu0 0.0
        %561 = vmatmul.mubr.f32.gmra.mxu0 %v389
        %v562 = vpop.f32.mrf.mxu0
        %v563 = vadd.f32 0.0, %v562
        %v564 = vpop.f32.mrf.mxu0
        %565 = vmatprep.mubr.f32.mxu0 0.0
        %566 = vmatmul.mubr.f32.gmra.mxu0 %v392
        %v567 = vpop.f32.mrf.mxu0
        %v568 = vadd.f32 0.0, %v567
        %v569 = vpop.f32.mrf.mxu0
        %570 = vmatprep.mubr.f32.mxu0 0.0
        %571 = vmatmul.mubr.f32.gmra.mxu0 %v395
        %v572 = vpop.f32.mrf.mxu0
        %v573 = vadd.f32 0.0, %v572
        %v574 = vpop.f32.mrf.mxu0
        %575 = vmatprep.mubr.f32.mxu0 0.0
        %576 = vmatmul.mubr.f32.gmra.mxu0 %v398
        %v577 = vpop.f32.mrf.mxu0
        %v578 = vadd.f32 0.0, %v577
        %v579 = vpop.f32.mrf.mxu0
        %580 = vmatprep.mubr.f32.mxu0 0.0
        %581 = vmatmul.mubr.f32.gmra.mxu0 %v401
        %v582 = vpop.f32.mrf.mxu0
        %v583 = vadd.f32 0.0, %v582
        %v584 = vpop.f32.mrf.mxu0
        %585 = vmatprep.mubr.f32.mxu0 0.0
        %586 = vmatmul.mubr.f32.gmra.mxu0 %v404
        %v587 = vpop.f32.mrf.mxu0
        %v588 = vadd.f32 0.0, %v587
        %v589 = vpop.f32.mrf.mxu0
        %590 = vmatprep.mubr.f32.mxu0 0.0
        %591 = vmatmul.mubr.f32.gmra.mxu0 %v407
        %v592 = vpop.f32.mrf.mxu0
        %v593 = vadd.f32 0.0, %v592
        %v594 = vpop.f32.mrf.mxu0
        %595 = vmatprep.mubr.f32.mxu0 0.0
        %596 = vmatmul.mubr.f32.gmra.mxu0 %v410
        %v597 = vpop.f32.mrf.mxu0
        %v598 = vadd.f32 0.0, %v597
        %v599 = vpop.f32.mrf.mxu0
        %600 = vmatprep.mubr.f32.mxu0 0.0
        %601 = vmatmul.mubr.f32.gmra.mxu0 %v413
        %v602 = vpop.f32.mrf.mxu0
        %v603 = vadd.f32 0.0, %v602
        %v604 = vpop.f32.mrf.mxu0
        %605 = vmatprep.mubr.f32.mxu0 0.0
        %606 = vmatmul.mubr.f32.gmra.mxu0 %v416
        %v607 = vpop.f32.mrf.mxu0
        %v608 = vadd.f32 0.0, %v607
        %v609 = vpop.f32.mrf.mxu0
        %610 = vmatprep.mubr.f32.mxu0 0.0
        %611 = vmatmul.mubr.f32.gmra.mxu0 %v419
        %v612 = vpop.f32.mrf.mxu0
        %v613 = vadd.f32 0.0, %v612
        %v614 = vpop.f32.mrf.mxu0
        %615 = vmatprep.mubr.f32.mxu0 0.0
        %616 = vmatmul.mubr.f32.gmra.mxu0 %v422
        %v617 = vpop.f32.mrf.mxu0
        %v618 = vadd.f32 0.0, %v617
        %v619 = vpop.f32.mrf.mxu0
        %620 = vmatprep.mubr.f32.mxu0 0.0
        %621 = vmatmul.mubr.f32.gmra.mxu0 %v425
        %v622 = vpop.f32.mrf.mxu0
        %v623 = vadd.f32 0.0, %v622
        %v624 = vpop.f32.mrf.mxu0
        %625 = vmatprep.mubr.f32.mxu0 0.0
        %626 = vmatmul.mubr.f32.gmra.mxu0 %v428
        %v627 = vpop.f32.mrf.mxu0
        %v628 = vadd.f32 0.0, %v627
        %v629 = vpop.f32.mrf.mxu0
        %630 = vmatprep.mubr.f32.mxu0 0.0
        %631 = vmatmul.mubr.f32.gmra.mxu0 %v431
        %v632 = vpop.f32.mrf.mxu0
        %v633 = vadd.f32 0.0, %v632
        %v634 = vpop.f32.mrf.mxu0
        %635 = vmatprep.mubr.f32.mxu0 0.0
        %636 = vmatmul.mubr.f32.gmra.mxu0 %v434
        %v637 = vpop.f32.mrf.mxu0
        %v638 = vadd.f32 0.0, %v637
        %v639 = vpop.f32.mrf.mxu0
        %640 = vmatprep.mubr.f32.mxu0 0.0
        %641 = vmatmul.mubr.f32.gmra.mxu0 %v437
        %v642 = vpop.f32.mrf.mxu0
        %v643 = vadd.f32 0.0, %v642
        %v644 = vpop.f32.mrf.mxu0
        %645 = vmatprep.mubr.f32.mxu0 0.0
        %646 = vmatmul.mubr.f32.gmra.mxu0 %v440
        %v647 = vpop.f32.mrf.mxu0
        %v648 = vadd.f32 0.0, %v647
        %v649 = vpop.f32.mrf.mxu0
        %650 = vmatprep.mubr.f32.mxu0 0.0
        %651 = vmatmul.mubr.f32.gmra.mxu0 %v443
        %v652 = vpop.f32.mrf.mxu0
        %v653 = vadd.f32 0.0, %v652
        %v654 = vpop.f32.mrf.mxu0
        %655 = vmatprep.mubr.f32.mxu0 0.0
        %656 = vmatmul.mubr.f32.gmra.mxu0 %v446
        %v657 = vpop.f32.mrf.mxu0
        %v658 = vadd.f32 0.0, %v657
        %v659 = vpop.f32.mrf.mxu0
        %660 = vmatprep.mubr.f32.mxu0 0.0
        %661 = vmatmul.mubr.f32.gmra.mxu0 %v449
        %v662 = vpop.f32.mrf.mxu0
        %v663 = vadd.f32 0.0, %v662
        %v664 = vpop.f32.mrf.mxu0
        %665 = vmatprep.mubr.f32.mxu0 0.0
        %666 = vmatmul.mubr.f32.gmra.mxu0 %v452
        %v667 = vpop.f32.mrf.mxu0
        %v668 = vadd.f32 0.0, %v667
        %v669 = vpop.f32.mrf.mxu0
        %670 = vmatprep.mubr.f32.mxu0 0.0
        %671 = vmatmul.mubr.f32.gmra.mxu0 %v455
        %v672 = vpop.f32.mrf.mxu0
        %v673 = vadd.f32 0.0, %v672
        %v674 = vpop.f32.mrf.mxu0
        %675 = vmatprep.mubr.f32.mxu0 0.0
        %676 = vmatmul.mubr.f32.gmra.mxu0 %v458
        %v677 = vpop.f32.mrf.mxu0
        %v678 = vadd.f32 0.0, %v677
        %v679 = vpop.f32.mrf.mxu0
        %680 = vmatprep.mubr.f32.mxu0 0.0
        %681 = vmatmul.mubr.f32.gmra.mxu0 %v461
        %v682 = vpop.f32.mrf.mxu0
        %v683 = vadd.f32 0.0, %v682
        %v684 = vpop.f32.mrf.mxu0
        %685 = vmatprep.mubr.f32.mxu0 0.0
        %686 = vmatmul.mubr.f32.gmra.mxu0 %v464
        %v687 = vpop.f32.mrf.mxu0
        %v688 = vadd.f32 0.0, %v687
        %v689 = vpop.f32.mrf.mxu0
        %690 = vmatprep.mubr.f32.mxu0 0.0
        %691 = vmatmul.mubr.f32.gmra.mxu0 %v467
        %v692 = vpop.f32.mrf.mxu0
        %v693 = vadd.f32 0.0, %v692
        %v694 = vpop.f32.mrf.mxu0
        %695 = vmatprep.mubr.f32.mxu0 0.0
        %696 = vmatmul.mubr.f32.gmra.mxu0 %v470
        %v697 = vpop.f32.mrf.mxu0
        %v698 = vadd.f32 0.0, %v697
        %v699 = vpop.f32.mrf.mxu0
        %700 = vdwg.mxu0
        %v702 = vsel %vm375, %v207, 0
        %v705 = vsel %vm375, %v208, 0
        %v708 = vsel %vm375, %v210, 0
        %v711 = vsel %vm375, %v211, 0
        %v714 = vsel %vm375, %v213, 0
        %v717 = vsel %vm375, %v214, 0
        %v720 = vsel %vm375, %v216, 0
        %v723 = vsel %vm375, %v217, 0
        %v726 = vsel %vm375, %v219, 0
        %v729 = vsel %vm375, %v220, 0
        %v732 = vsel %vm375, %v222, 0
        %v735 = vsel %vm375, %v223, 0
        %v738 = vsel %vm375, %v225, 0
        %v741 = vsel %vm375, %v226, 0
        %v744 = vsel %vm375, %v228, 0
        %v747 = vsel %vm375, %v229, 0
        %v750 = vsel %vm375, %v231, 0
        %v753 = vsel %vm375, %v232, 0
        %v756 = vsel %vm375, %v234, 0
        %v759 = vsel %vm375, %v235, 0
        %v762 = vsel %vm375, %v237, 0
        %v765 = vsel %vm375, %v238, 0
        %v768 = vsel %vm375, %v240, 0
        %v771 = vsel %vm375, %v241, 0
        %v774 = vsel %vm375, %v243, 0
        %v777 = vsel %vm375, %v244, 0
        %v780 = vsel %vm375, %v246, 0
        %v783 = vsel %vm375, %v247, 0
        %v786 = vsel %vm375, %v249, 0
        %v789 = vsel %vm375, %v250, 0
        %v792 = vsel %vm375, %v252, 0
        %v795 = vsel %vm375, %v253, 0
        %v798 = vsel %vm472, %v372, 0
        %800 = vmatprep.subr.mxu0 0.0
        %801 = vmatpush1.msra.mxu0 0.0
        %802 = vmatprep.subr.mxu0 0.0
        %803 = vmatpush1.msra.mxu0 0.0
        %804 = vmatprep.subr.mxu0 0.0
        %805 = vmatpush1.msra.mxu0 0.0
        %806 = vmatprep.subr.mxu0 0.0
        %807 = vmatpush1.msra.mxu0 0.0
        %808 = vmatprep.subr.mxu0 0.0
        %809 = vmatpush1.msra.mxu0 0.0
        %810 = vmatprep.subr.mxu0 0.0
        %811 = vmatpush1.msra.mxu0 0.0
        %812 = vmatprep.subr.mxu0 0.0
        %813 = vmatpush1.msra.mxu0 0.0
        %814 = vmatprep.subr.mxu0 0.0
        %815 = vmatpush1.msra.mxu0 0.0
        %816 = vmatprep.subr.mxu0 0.0
        %817 = vmatpush1.msra.mxu0 0.0
        %818 = vmatprep.subr.mxu0 0.0
        %819 = vmatpush1.msra.mxu0 0.0
        %820 = vmatprep.subr.mxu0 0.0
        %821 = vmatpush1.msra.mxu0 0.0
        %822 = vmatprep.subr.mxu0 0.0
        %823 = vmatpush1.msra.mxu0 0.0
        %824 = vmatprep.subr.mxu0 0.0
        %825 = vmatpush1.msra.mxu0 0.0
        %826 = vmatprep.subr.mxu0 0.0
        %827 = vmatpush1.msra.mxu0 0.0
        %828 = vmatprep.subr.mxu0 0.0
        %829 = vmatpush1.msra.mxu0 0.0
        %830 = vmatprep.subr.mxu0 0.0
        %831 = vmatpush1.msra.mxu0 %v798
        %832 = vmatprep.subr.mxu0 0.0
        %833 = vmatpush2.msra.mxu0 0.0
        %834 = vmatprep.subr.mxu0 0.0
        %835 = vmatpush2.msra.mxu0 0.0
        %836 = vmatprep.subr.mxu0 0.0
        %837 = vmatpush2.msra.mxu0 0.0
        %838 = vmatprep.subr.mxu0 0.0
        %839 = vmatpush2.msra.mxu0 0.0
        %840 = vmatprep.subr.mxu0 0.0
        %841 = vmatpush2.msra.mxu0 0.0
        %842 = vmatprep.subr.mxu0 0.0
        %843 = vmatpush2.msra.mxu0 0.0
        %844 = vmatprep.subr.mxu0 0.0
        %845 = vmatpush2.msra.mxu0 0.0
        %846 = vmatprep.subr.mxu0 0.0
        %847 = vmatpush2.msra.mxu0 0.0
        %848 = vmatprep.subr.mxu0 0.0
        %849 = vmatpush2.msra.mxu0 0.0
        %850 = vmatprep.subr.mxu0 0.0
        %851 = vmatpush2.msra.mxu0 0.0
        %852 = vmatprep.subr.mxu0 0.0
        %853 = vmatpush2.msra.mxu0 0.0
        %854 = vmatprep.subr.mxu0 0.0
        %855 = vmatpush2.msra.mxu0 0.0
        %856 = vmatprep.subr.mxu0 0.0
        %857 = vmatpush2.msra.mxu0 0.0
        %858 = vmatprep.subr.mxu0 0.0
        %859 = vmatpush2.msra.mxu0 0.0
        %860 = vmatprep.subr.mxu0 0.0
        %861 = vmatpush2.msra.mxu0 0.0
        %862 = vmatprep.subr.mxu0 0.0
        %863 = vmatpush2.msra.mxu0 0.0
        %864 = vmatprep.mubr.f32.mxu0 0.0
        %865 = vmatmul.mubr.f32.gmra.mxu0 %v702
        %v866 = vpop.f32.mrf.mxu0
        %v867 = vadd.f32 %v543, %v866
        %v868 = vpop.f32.mrf.mxu0
        %869 = vmatprep.mubr.f32.mxu0 0.0
        %870 = vmatmul.mubr.f32.gmra.mxu0 %v705
        %v871 = vpop.f32.mrf.mxu0
        %v872 = vadd.f32 %v548, %v871
        %v873 = vpop.f32.mrf.mxu0
        %874 = vmatprep.mubr.f32.mxu0 0.0
        %875 = vmatmul.mubr.f32.gmra.mxu0 %v708
        %v876 = vpop.f32.mrf.mxu0
        %v877 = vadd.f32 %v553, %v876
        %v878 = vpop.f32.mrf.mxu0
        %879 = vmatprep.mubr.f32.mxu0 0.0
        %880 = vmatmul.mubr.f32.gmra.mxu0 %v711
        %v881 = vpop.f32.mrf.mxu0
        %v882 = vadd.f32 %v558, %v881
        %v883 = vpop.f32.mrf.mxu0
        %884 = vmatprep.mubr.f32.mxu0 0.0
        %885 = vmatmul.mubr.f32.gmra.mxu0 %v714
        %v886 = vpop.f32.mrf.mxu0
        %v887 = vadd.f32 %v563, %v886
        %v888 = vpop.f32.mrf.mxu0
        %889 = vmatprep.mubr.f32.mxu0 0.0
        %890 = vmatmul.mubr.f32.gmra.mxu0 %v717
        %v891 = vpop.f32.mrf.mxu0
        %v892 = vadd.f32 %v568, %v891
        %v893 = vpop.f32.mrf.mxu0
        %894 = vmatprep.mubr.f32.mxu0 0.0
        %895 = vmatmul.mubr.f32.gmra.mxu0 %v720
        %v896 = vpop.f32.mrf.mxu0
        %v897 = vadd.f32 %v573, %v896
        %v898 = vpop.f32.mrf.mxu0
        %899 = vmatprep.mubr.f32.mxu0 0.0
        %900 = vmatmul.mubr.f32.gmra.mxu0 %v723
        %v901 = vpop.f32.mrf.mxu0
        %v902 = vadd.f32 %v578, %v901
        %v903 = vpop.f32.mrf.mxu0
        %904 = vmatprep.mubr.f32.mxu0 0.0
        %905 = vmatmul.mubr.f32.gmra.mxu0 %v726
        %v906 = vpop.f32.mrf.mxu0
        %v907 = vadd.f32 %v583, %v906
        %v908 = vpop.f32.mrf.mxu0
        %909 = vmatprep.mubr.f32.mxu0 0.0
        %910 = vmatmul.mubr.f32.gmra.mxu0 %v729
        %v911 = vpop.f32.mrf.mxu0
        %v912 = vadd.f32 %v588, %v911
        %v913 = vpop.f32.mrf.mxu0
        %914 = vmatprep.mubr.f32.mxu0 0.0
        %915 = vmatmul.mubr.f32.gmra.mxu0 %v732
        %v916 = vpop.f32.mrf.mxu0
        %v917 = vadd.f32 %v593, %v916
        %v918 = vpop.f32.mrf.mxu0
        %919 = vmatprep.mubr.f32.mxu0 0.0
        %920 = vmatmul.mubr.f32.gmra.mxu0 %v735
        %v921 = vpop.f32.mrf.mxu0
        %v922 = vadd.f32 %v598, %v921
        %v923 = vpop.f32.mrf.mxu0
        %924 = vmatprep.mubr.f32.mxu0 0.0
        %925 = vmatmul.mubr.f32.gmra.mxu0 %v738
        %v926 = vpop.f32.mrf.mxu0
        %v927 = vadd.f32 %v603, %v926
        %v928 = vpop.f32.mrf.mxu0
        %929 = vmatprep.mubr.f32.mxu0 0.0
        %930 = vmatmul.mubr.f32.gmra.mxu0 %v741
        %v931 = vpop.f32.mrf.mxu0
        %v932 = vadd.f32 %v608, %v931
        %v933 = vpop.f32.mrf.mxu0
        %934 = vmatprep.mubr.f32.mxu0 0.0
        %935 = vmatmul.mubr.f32.gmra.mxu0 %v744
        %v936 = vpop.f32.mrf.mxu0
        %v937 = vadd.f32 %v613, %v936
        %v938 = vpop.f32.mrf.mxu0
        %939 = vmatprep.mubr.f32.mxu0 0.0
        %940 = vmatmul.mubr.f32.gmra.mxu0 %v747
        %v941 = vpop.f32.mrf.mxu0
        %v942 = vadd.f32 %v618, %v941
        %v943 = vpop.f32.mrf.mxu0
        %944 = vmatprep.mubr.f32.mxu0 0.0
        %945 = vmatmul.mubr.f32.gmra.mxu0 %v750
        %v946 = vpop.f32.mrf.mxu0
        %v947 = vadd.f32 %v623, %v946
        %v948 = vpop.f32.mrf.mxu0
        %949 = vmatprep.mubr.f32.mxu0 0.0
        %950 = vmatmul.mubr.f32.gmra.mxu0 %v753
        %v951 = vpop.f32.mrf.mxu0
        %v952 = vadd.f32 %v628, %v951
        %v953 = vpop.f32.mrf.mxu0
        %954 = vmatprep.mubr.f32.mxu0 0.0
        %955 = vmatmul.mubr.f32.gmra.mxu0 %v756
        %v956 = vpop.f32.mrf.mxu0
        %v957 = vadd.f32 %v633, %v956
        %v958 = vpop.f32.mrf.mxu0
        %959 = vmatprep.mubr.f32.mxu0 0.0
        %960 = vmatmul.mubr.f32.gmra.mxu0 %v759
        %v961 = vpop.f32.mrf.mxu0
        %v962 = vadd.f32 %v638, %v961
        %v963 = vpop.f32.mrf.mxu0
        %964 = vmatprep.mubr.f32.mxu0 0.0
        %965 = vmatmul.mubr.f32.gmra.mxu0 %v762
        %v966 = vpop.f32.mrf.mxu0
        %v967 = vadd.f32 %v643, %v966
        %v968 = vpop.f32.mrf.mxu0
        %969 = vmatprep.mubr.f32.mxu0 0.0
        %970 = vmatmul.mubr.f32.gmra.mxu0 %v765
        %v971 = vpop.f32.mrf.mxu0
        %v972 = vadd.f32 %v648, %v971
        %v973 = vpop.f32.mrf.mxu0
        %974 = vmatprep.mubr.f32.mxu0 0.0
        %975 = vmatmul.mubr.f32.gmra.mxu0 %v768
        %v976 = vpop.f32.mrf.mxu0
        %v977 = vadd.f32 %v653, %v976
        %v978 = vpop.f32.mrf.mxu0
        %979 = vmatprep.mubr.f32.mxu0 0.0
        %980 = vmatmul.mubr.f32.gmra.mxu0 %v771
        %v981 = vpop.f32.mrf.mxu0
        %v982 = vadd.f32 %v658, %v981
        %v983 = vpop.f32.mrf.mxu0
        %984 = vmatprep.mubr.f32.mxu0 0.0
        %985 = vmatmul.mubr.f32.gmra.mxu0 %v774
        %v986 = vpop.f32.mrf.mxu0
        %v987 = vadd.f32 %v663, %v986
        %v988 = vpop.f32.mrf.mxu0
        %989 = vmatprep.mubr.f32.mxu0 0.0
        %990 = vmatmul.mubr.f32.gmra.mxu0 %v777
        %v991 = vpop.f32.mrf.mxu0
        %v992 = vadd.f32 %v668, %v991
        %v993 = vpop.f32.mrf.mxu0
        %994 = vmatprep.mubr.f32.mxu0 0.0
        %995 = vmatmul.mubr.f32.gmra.mxu0 %v780
        %v996 = vpop.f32.mrf.mxu0
        %v997 = vadd.f32 %v673, %v996
        %v998 = vpop.f32.mrf.mxu0
        %999 = vmatprep.mubr.f32.mxu0 0.0
        %1000 = vmatmul.mubr.f32.gmra.mxu0 %v783
        %v1001 = vpop.f32.mrf.mxu0
        %v1002 = vadd.f32 %v678, %v1001
        %v1003 = vpop.f32.mrf.mxu0
        %1004 = vmatprep.mubr.f32.mxu0 0.0
        %1005 = vmatmul.mubr.f32.gmra.mxu0 %v786
        %v1006 = vpop.f32.mrf.mxu0
        %v1007 = vadd.f32 %v683, %v1006
        %v1008 = vpop.f32.mrf.mxu0
        %1009 = vmatprep.mubr.f32.mxu0 0.0
        %1010 = vmatmul.mubr.f32.gmra.mxu0 %v789
        %v1011 = vpop.f32.mrf.mxu0
        %v1012 = vadd.f32 %v688, %v1011
        %v1013 = vpop.f32.mrf.mxu0
        %1014 = vmatprep.mubr.f32.mxu0 0.0
        %1015 = vmatmul.mubr.f32.gmra.mxu0 %v792
        %v1016 = vpop.f32.mrf.mxu0
        %v1017 = vadd.f32 %v693, %v1016
        %v1018 = vpop.f32.mrf.mxu0
        %1019 = vmatprep.mubr.f32.mxu0 0.0
        %1020 = vmatmul.mubr.f32.gmra.mxu0 %v795
        %v1021 = vpop.f32.mrf.mxu0
        %v1022 = vadd.f32 %v698, %v1021
        %v1023 = vpop.f32.mrf.mxu0
        %1024 = vdwg.mxu0
        %vm1041 = vcmask 1046528
        %v1042 = vrot.slane %v207, 1
        %v1043 = vrot.slane %v208, 1
        %v1044 = vsel %vm1041, %v1042, %v1043
        %v1045 = vrot.slane %v209, 1
        %v1046 = vsel %vm1041, %v1043, %v1045
        %v1047 = vrot.slane %v210, 1
        %v1048 = vrot.slane %v211, 1
        %v1049 = vsel %vm1041, %v1047, %v1048
        %v1050 = vrot.slane %v212, 1
        %v1051 = vsel %vm1041, %v1048, %v1050
        %v1052 = vrot.slane %v213, 1
        %v1053 = vrot.slane %v214, 1
        %v1054 = vsel %vm1041, %v1052, %v1053
        %v1055 = vrot.slane %v215, 1
        %v1056 = vsel %vm1041, %v1053, %v1055
        %v1057 = vrot.slane %v216, 1
        %v1058 = vrot.slane %v217, 1
        %v1059 = vsel %vm1041, %v1057, %v1058
        %v1060 = vrot.slane %v218, 1
        %v1061 = vsel %vm1041, %v1058, %v1060
        %v1062 = vrot.slane %v219, 1
        %v1063 = vrot.slane %v220, 1
        %v1064 = vsel %vm1041, %v1062, %v1063
        %v1065 = vrot.slane %v221, 1
        %v1066 = vsel %vm1041, %v1063, %v1065
        %v1067 = vrot.slane %v222, 1
        %v1068 = vrot.slane %v223, 1
        %v1069 = vsel %vm1041, %v1067, %v1068
        %v1070 = vrot.slane %v224, 1
        %v1071 = vsel %vm1041, %v1068, %v1070
        %v1072 = vrot.slane %v225, 1
        %v1073 = vrot.slane %v226, 1
        %v1074 = vsel %vm1041, %v1072, %v1073
        %v1075 = vrot.slane %v227, 1
        %v1076 = vsel %vm1041, %v1073, %v1075
        %v1077 = vrot.slane %v228, 1
        %v1078 = vrot.slane %v229, 1
        %v1079 = vsel %vm1041, %v1077, %v1078
        %v1080 = vrot.slane %v230, 1
        %v1081 = vsel %vm1041, %v1078, %v1080
        %v1082 = vrot.slane %v231, 1
        %v1083 = vrot.slane %v232, 1
        %v1084 = vsel %vm1041, %v1082, %v1083
        %v1085 = vrot.slane %v233, 1
        %v1086 = vsel %vm1041, %v1083, %v1085
        %v1087 = vrot.slane %v234, 1
        %v1088 = vrot.slane %v235, 1
        %v1089 = vsel %vm1041, %v1087, %v1088
        %v1090 = vrot.slane %v236, 1
        %v1091 = vsel %vm1041, %v1088, %v1090
        %v1092 = vrot.slane %v237, 1
        %v1093 = vrot.slane %v238, 1
        %v1094 = vsel %vm1041, %v1092, %v1093
        %v1095 = vrot.slane %v239, 1
        %v1096 = vsel %vm1041, %v1093, %v1095
        %v1097 = vrot.slane %v240, 1
        %v1098 = vrot.slane %v241, 1
        %v1099 = vsel %vm1041, %v1097, %v1098
        %v1100 = vrot.slane %v242, 1
        %v1101 = vsel %vm1041, %v1098, %v1100
        %v1102 = vrot.slane %v243, 1
        %v1103 = vrot.slane %v244, 1
        %v1104 = vsel %vm1041, %v1102, %v1103
        %v1105 = vrot.slane %v245, 1
        %v1106 = vsel %vm1041, %v1103, %v1105
        %v1107 = vrot.slane %v246, 1
        %v1108 = vrot.slane %v247, 1
        %v1109 = vsel %vm1041, %v1107, %v1108
        %v1110 = vrot.slane %v248, 1
        %v1111 = vsel %vm1041, %v1108, %v1110
        %v1112 = vrot.slane %v249, 1
        %v1113 = vrot.slane %v250, 1
        %v1114 = vsel %vm1041, %v1112, %v1113
        %v1115 = vrot.slane %v251, 1
        %v1116 = vsel %vm1041, %v1113, %v1115
        %v1117 = vrot.slane %v252, 1
        %v1118 = vrot.slane %v253, 1
        %v1119 = vsel %vm1041, %v1117, %v1118
        %v1120 = vrot.slane %v254, 1
        %v1121 = vsel %vm1041, %v1118, %v1120
        %s1122 = scalar_lea.vmem %s1, 8
        %v1123 = vld [vmem:[%s1122] sm:$0x7]
        %v1124 = vsel %vm375, %v1044, 0
        %v1126 = vsel %vm375, %v1046, 0
        %v1128 = vsel %vm375, %v1049, 0
        %v1130 = vsel %vm375, %v1051, 0
        %v1132 = vsel %vm375, %v1054, 0
        %v1134 = vsel %vm375, %v1056, 0
        %v1136 = vsel %vm375, %v1059, 0
        %v1138 = vsel %vm375, %v1061, 0
        %v1140 = vsel %vm375, %v1064, 0
        %v1142 = vsel %vm375, %v1066, 0
        %v1144 = vsel %vm375, %v1069, 0
        %v1146 = vsel %vm375, %v1071, 0
        %v1148 = vsel %vm375, %v1074, 0
        %v1150 = vsel %vm375, %v1076, 0
        %v1152 = vsel %vm375, %v1079, 0
        %v1154 = vsel %vm375, %v1081, 0
        %v1156 = vsel %vm375, %v1084, 0
        %v1158 = vsel %vm375, %v1086, 0
        %v1160 = vsel %vm375, %v1089, 0
        %v1162 = vsel %vm375, %v1091, 0
        %v1164 = vsel %vm375, %v1094, 0
        %v1166 = vsel %vm375, %v1096, 0
        %v1168 = vsel %vm375, %v1099, 0
        %v1170 = vsel %vm375, %v1101, 0
        %v1172 = vsel %vm375, %v1104, 0
        %v1174 = vsel %vm375, %v1106, 0
        %v1176 = vsel %vm375, %v1109, 0
        %v1178 = vsel %vm375, %v1111, 0
        %v1180 = vsel %vm375, %v1114, 0
        %v1182 = vsel %vm375, %v1116, 0
        %v1184 = vsel %vm375, %v1119, 0
        %v1186 = vsel %vm375, %v1121, 0
        %v1189 = vsel %vm472, %v1123, 0
        %1191 = vmatprep.subr.mxu0 0.0
        %1192 = vmatpush1.msra.mxu0 0.0
        %1193 = vmatprep.subr.mxu0 0.0
        %1194 = vmatpush1.msra.mxu0 0.0
        %1195 = vmatprep.subr.mxu0 0.0
        %1196 = vmatpush1.msra.mxu0 0.0
        %1197 = vmatprep.subr.mxu0 0.0
        %1198 = vmatpush1.msra.mxu0 0.0
        %1199 = vmatprep.subr.mxu0 0.0
        %1200 = vmatpush1.msra.mxu0 0.0
        %1201 = vmatprep.subr.mxu0 0.0
        %1202 = vmatpush1.msra.mxu0 0.0
        %1203 = vmatprep.subr.mxu0 0.0
        %1204 = vmatpush1.msra.mxu0 0.0
        %1205 = vmatprep.subr.mxu0 0.0
        %1206 = vmatpush1.msra.mxu0 0.0
        %1207 = vmatprep.subr.mxu0 0.0
        %1208 = vmatpush1.msra.mxu0 0.0
        %1209 = vmatprep.subr.mxu0 0.0
        %1210 = vmatpush1.msra.mxu0 0.0
        %1211 = vmatprep.subr.mxu0 0.0
        %1212 = vmatpush1.msra.mxu0 0.0
        %1213 = vmatprep.subr.mxu0 0.0
        %1214 = vmatpush1.msra.mxu0 0.0
        %1215 = vmatprep.subr.mxu0 0.0
        %1216 = vmatpush1.msra.mxu0 0.0
        %1217 = vmatprep.subr.mxu0 0.0
        %1218 = vmatpush1.msra.mxu0 0.0
        %1219 = vmatprep.subr.mxu0 0.0
        %1220 = vmatpush1.msra.mxu0 0.0
        %1221 = vmatprep.subr.mxu0 0.0
        %1222 = vmatpush1.msra.mxu0 %v1189
        %1223 = vmatprep.subr.mxu0 0.0
        %1224 = vmatpush2.msra.mxu0 0.0
        %1225 = vmatprep.subr.mxu0 0.0
        %1226 = vmatpush2.msra.mxu0 0.0
        %1227 = vmatprep.subr.mxu0 0.0
        %1228 = vmatpush2.msra.mxu0 0.0
        %1229 = vmatprep.subr.mxu0 0.0
        %1230 = vmatpush2.msra.mxu0 0.0
        %1231 = vmatprep.subr.mxu0 0.0
        %1232 = vmatpush2.msra.mxu0 0.0
        %1233 = vmatprep.subr.mxu0 0.0
        %1234 = vmatpush2.msra.mxu0 0.0
        %1235 = vmatprep.subr.mxu0 0.0
        %1236 = vmatpush2.msra.mxu0 0.0
        %1237 = vmatprep.subr.mxu0 0.0
        %1238 = vmatpush2.msra.mxu0 0.0
        %1239 = vmatprep.subr.mxu0 0.0
        %1240 = vmatpush2.msra.mxu0 0.0
        %1241 = vmatprep.subr.mxu0 0.0
        %1242 = vmatpush2.msra.mxu0 0.0
        %1243 = vmatprep.subr.mxu0 0.0
        %1244 = vmatpush2.msra.mxu0 0.0
        %1245 = vmatprep.subr.mxu0 0.0
        %1246 = vmatpush2.msra.mxu0 0.0
        %1247 = vmatprep.subr.mxu0 0.0
        %1248 = vmatpush2.msra.mxu0 0.0
        %1249 = vmatprep.subr.mxu0 0.0
        %1250 = vmatpush2.msra.mxu0 0.0
        %1251 = vmatprep.subr.mxu0 0.0
        %1252 = vmatpush2.msra.mxu0 0.0
        %1253 = vmatprep.subr.mxu0 0.0
        %1254 = vmatpush2.msra.mxu0 0.0
        %1255 = vmatprep.mubr.f32.mxu0 0.0
        %1256 = vmatmul.mubr.f32.gmra.mxu0 %v1124
        %v1257 = vpop.f32.mrf.mxu0
        %v1258 = vadd.f32 0.0, %v1257
        %v1259 = vpop.f32.mrf.mxu0
        %1260 = vmatprep.mubr.f32.mxu0 0.0
        %1261 = vmatmul.mubr.f32.gmra.mxu0 %v1126
        %v1262 = vpop.f32.mrf.mxu0
        %v1263 = vadd.f32 0.0, %v1262
        %v1264 = vpop.f32.mrf.mxu0
        %1265 = vmatprep.mubr.f32.mxu0 0.0
        %1266 = vmatmul.mubr.f32.gmra.mxu0 %v1128
        %v1267 = vpop.f32.mrf.mxu0
        %v1268 = vadd.f32 0.0, %v1267
        %v1269 = vpop.f32.mrf.mxu0
        %1270 = vmatprep.mubr.f32.mxu0 0.0
        %1271 = vmatmul.mubr.f32.gmra.mxu0 %v1130
        %v1272 = vpop.f32.mrf.mxu0
        %v1273 = vadd.f32 0.0, %v1272
        %v1274 = vpop.f32.mrf.mxu0
        %1275 = vmatprep.mubr.f32.mxu0 0.0
        %1276 = vmatmul.mubr.f32.gmra.mxu0 %v1132
        %v1277 = vpop.f32.mrf.mxu0
        %v1278 = vadd.f32 0.0, %v1277
        %v1279 = vpop.f32.mrf.mxu0
        %1280 = vmatprep.mubr.f32.mxu0 0.0
        %1281 = vmatmul.mubr.f32.gmra.mxu0 %v1134
        %v1282 = vpop.f32.mrf.mxu0
        %v1283 = vadd.f32 0.0, %v1282
        %v1284 = vpop.f32.mrf.mxu0
        %1285 = vmatprep.mubr.f32.mxu0 0.0
        %1286 = vmatmul.mubr.f32.gmra.mxu0 %v1136
        %v1287 = vpop.f32.mrf.mxu0
        %v1288 = vadd.f32 0.0, %v1287
        %v1289 = vpop.f32.mrf.mxu0
        %1290 = vmatprep.mubr.f32.mxu0 0.0
        %1291 = vmatmul.mubr.f32.gmra.mxu0 %v1138
        %v1292 = vpop.f32.mrf.mxu0
        %v1293 = vadd.f32 0.0, %v1292
        %v1294 = vpop.f32.mrf.mxu0
        %1295 = vmatprep.mubr.f32.mxu0 0.0
        %1296 = vmatmul.mubr.f32.gmra.mxu0 %v1140
        %v1297 = vpop.f32.mrf.mxu0
        %v1298 = vadd.f32 0.0, %v1297
        %v1299 = vpop.f32.mrf.mxu0
        %1300 = vmatprep.mubr.f32.mxu0 0.0
        %1301 = vmatmul.mubr.f32.gmra.mxu0 %v1142
        %v1302 = vpop.f32.mrf.mxu0
        %v1303 = vadd.f32 0.0, %v1302
        %v1304 = vpop.f32.mrf.mxu0
        %1305 = vmatprep.mubr.f32.mxu0 0.0
        %1306 = vmatmul.mubr.f32.gmra.mxu0 %v1144
        %v1307 = vpop.f32.mrf.mxu0
        %v1308 = vadd.f32 0.0, %v1307
        %v1309 = vpop.f32.mrf.mxu0
        %1310 = vmatprep.mubr.f32.mxu0 0.0
        %1311 = vmatmul.mubr.f32.gmra.mxu0 %v1146
        %v1312 = vpop.f32.mrf.mxu0
        %v1313 = vadd.f32 0.0, %v1312
        %v1314 = vpop.f32.mrf.mxu0
        %1315 = vmatprep.mubr.f32.mxu0 0.0
        %1316 = vmatmul.mubr.f32.gmra.mxu0 %v1148
        %v1317 = vpop.f32.mrf.mxu0
        %v1318 = vadd.f32 0.0, %v1317
        %v1319 = vpop.f32.mrf.mxu0
        %1320 = vmatprep.mubr.f32.mxu0 0.0
        %1321 = vmatmul.mubr.f32.gmra.mxu0 %v1150
        %v1322 = vpop.f32.mrf.mxu0
        %v1323 = vadd.f32 0.0, %v1322
        %v1324 = vpop.f32.mrf.mxu0
        %1325 = vmatprep.mubr.f32.mxu0 0.0
        %1326 = vmatmul.mubr.f32.gmra.mxu0 %v1152
        %v1327 = vpop.f32.mrf.mxu0
        %v1328 = vadd.f32 0.0, %v1327
        %v1329 = vpop.f32.mrf.mxu0
        %1330 = vmatprep.mubr.f32.mxu0 0.0
        %1331 = vmatmul.mubr.f32.gmra.mxu0 %v1154
        %v1332 = vpop.f32.mrf.mxu0
        %v1333 = vadd.f32 0.0, %v1332
        %v1334 = vpop.f32.mrf.mxu0
        %1335 = vmatprep.mubr.f32.mxu0 0.0
        %1336 = vmatmul.mubr.f32.gmra.mxu0 %v1156
        %v1337 = vpop.f32.mrf.mxu0
        %v1338 = vadd.f32 0.0, %v1337
        %v1339 = vpop.f32.mrf.mxu0
        %1340 = vmatprep.mubr.f32.mxu0 0.0
        %1341 = vmatmul.mubr.f32.gmra.mxu0 %v1158
        %v1342 = vpop.f32.mrf.mxu0
        %v1343 = vadd.f32 0.0, %v1342
        %v1344 = vpop.f32.mrf.mxu0
        %1345 = vmatprep.mubr.f32.mxu0 0.0
        %1346 = vmatmul.mubr.f32.gmra.mxu0 %v1160
        %v1347 = vpop.f32.mrf.mxu0
        %v1348 = vadd.f32 0.0, %v1347
        %v1349 = vpop.f32.mrf.mxu0
        %1350 = vmatprep.mubr.f32.mxu0 0.0
        %1351 = vmatmul.mubr.f32.gmra.mxu0 %v1162
        %v1352 = vpop.f32.mrf.mxu0
        %v1353 = vadd.f32 0.0, %v1352
        %v1354 = vpop.f32.mrf.mxu0
        %1355 = vmatprep.mubr.f32.mxu0 0.0
        %1356 = vmatmul.mubr.f32.gmra.mxu0 %v1164
        %v1357 = vpop.f32.mrf.mxu0
        %v1358 = vadd.f32 0.0, %v1357
        %v1359 = vpop.f32.mrf.mxu0
        %1360 = vmatprep.mubr.f32.mxu0 0.0
        %1361 = vmatmul.mubr.f32.gmra.mxu0 %v1166
        %v1362 = vpop.f32.mrf.mxu0
        %v1363 = vadd.f32 0.0, %v1362
        %v1364 = vpop.f32.mrf.mxu0
        %1365 = vmatprep.mubr.f32.mxu0 0.0
        %1366 = vmatmul.mubr.f32.gmra.mxu0 %v1168
        %v1367 = vpop.f32.mrf.mxu0
        %v1368 = vadd.f32 0.0, %v1367
        %v1369 = vpop.f32.mrf.mxu0
        %1370 = vmatprep.mubr.f32.mxu0 0.0
        %1371 = vmatmul.mubr.f32.gmra.mxu0 %v1170
        %v1372 = vpop.f32.mrf.mxu0
        %v1373 = vadd.f32 0.0, %v1372
        %v1374 = vpop.f32.mrf.mxu0
        %1375 = vmatprep.mubr.f32.mxu0 0.0
        %1376 = vmatmul.mubr.f32.gmra.mxu0 %v1172
        %v1377 = vpop.f32.mrf.mxu0
        %v1378 = vadd.f32 0.0, %v1377
        %v1379 = vpop.f32.mrf.mxu0
        %1380 = vmatprep.mubr.f32.mxu0 0.0
        %1381 = vmatmul.mubr.f32.gmra.mxu0 %v1174
        %v1382 = vpop.f32.mrf.mxu0
        %v1383 = vadd.f32 0.0, %v1382
        %v1384 = vpop.f32.mrf.mxu0
        %1385 = vmatprep.mubr.f32.mxu0 0.0
        %1386 = vmatmul.mubr.f32.gmra.mxu0 %v1176
        %v1387 = vpop.f32.mrf.mxu0
        %v1388 = vadd.f32 0.0, %v1387
        %v1389 = vpop.f32.mrf.mxu0
        %1390 = vmatprep.mubr.f32.mxu0 0.0
        %1391 = vmatmul.mubr.f32.gmra.mxu0 %v1178
        %v1392 = vpop.f32.mrf.mxu0
        %v1393 = vadd.f32 0.0, %v1392
        %v1394 = vpop.f32.mrf.mxu0
        %1395 = vmatprep.mubr.f32.mxu0 0.0
        %1396 = vmatmul.mubr.f32.gmra.mxu0 %v1180
        %v1397 = vpop.f32.mrf.mxu0
        %v1398 = vadd.f32 0.0, %v1397
        %v1399 = vpop.f32.mrf.mxu0
        %1400 = vmatprep.mubr.f32.mxu0 0.0
        %1401 = vmatmul.mubr.f32.gmra.mxu0 %v1182
        %v1402 = vpop.f32.mrf.mxu0
        %v1403 = vadd.f32 0.0, %v1402
        %v1404 = vpop.f32.mrf.mxu0
        %1405 = vmatprep.mubr.f32.mxu0 0.0
        %1406 = vmatmul.mubr.f32.gmra.mxu0 %v1184
        %v1407 = vpop.f32.mrf.mxu0
        %v1408 = vadd.f32 0.0, %v1407
        %v1409 = vpop.f32.mrf.mxu0
        %1410 = vmatprep.mubr.f32.mxu0 0.0
        %1411 = vmatmul.mubr.f32.gmra.mxu0 %v1186
        %v1412 = vpop.f32.mrf.mxu0
        %v1413 = vadd.f32 0.0, %v1412
        %v1414 = vpop.f32.mrf.mxu0
        %1415 = vdwg.mxu0
        %v1416 = vadd.f32 %v867, %v1258
        %v1417 = vadd.f32 %v872, %v1263
        %v1418 = vadd.f32 %v877, %v1268
        %v1419 = vadd.f32 %v882, %v1273
        %v1420 = vadd.f32 %v887, %v1278
        %v1421 = vadd.f32 %v892, %v1283
        %v1422 = vadd.f32 %v897, %v1288
        %v1423 = vadd.f32 %v902, %v1293
        %v1424 = vadd.f32 %v907, %v1298
        %v1425 = vadd.f32 %v912, %v1303
        %v1426 = vadd.f32 %v917, %v1308
        %v1427 = vadd.f32 %v922, %v1313
        %v1428 = vadd.f32 %v927, %v1318
        %v1429 = vadd.f32 %v932, %v1323
        %v1430 = vadd.f32 %v937, %v1328
        %v1431 = vadd.f32 %v942, %v1333
        %v1432 = vadd.f32 %v947, %v1338
        %v1433 = vadd.f32 %v952, %v1343
        %v1434 = vadd.f32 %v957, %v1348
        %v1435 = vadd.f32 %v962, %v1353
        %v1436 = vadd.f32 %v967, %v1358
        %v1437 = vadd.f32 %v972, %v1363
        %v1438 = vadd.f32 %v977, %v1368
        %v1439 = vadd.f32 %v982, %v1373
        %v1440 = vadd.f32 %v987, %v1378
        %v1441 = vadd.f32 %v992, %v1383
        %v1442 = vadd.f32 %v997, %v1388
        %v1443 = vadd.f32 %v1002, %v1393
        %v1444 = vadd.f32 %v1007, %v1398
        %v1445 = vadd.f32 %v1012, %v1403
        %v1446 = vadd.f32 %v1017, %v1408
        %v1447 = vadd.f32 %v1022, %v1413
        %s1448 = scalar_lea.vmem %s1, 12
        %v1449 = vld [vmem:[%s1448] sm:$0x7]
        %v1451 = vsel %vm375, %v292, 0
        %v1454 = vsel %vm375, %v293, 0
        %v1457 = vsel %vm375, %v295, 0
        %v1460 = vsel %vm375, %v296, 0
        %v1463 = vsel %vm375, %v298, 0
        %v1466 = vsel %vm375, %v299, 0
        %v1469 = vsel %vm375, %v301, 0
        %v1472 = vsel %vm375, %v302, 0
        %v1475 = vsel %vm375, %v304, 0
        %v1478 = vsel %vm375, %v305, 0
        %v1481 = vsel %vm375, %v307, 0
        %v1484 = vsel %vm375, %v308, 0
        %v1487 = vsel %vm375, %v310, 0
        %v1490 = vsel %vm375, %v311, 0
        %v1493 = vsel %vm375, %v313, 0
        %v1496 = vsel %vm375, %v314, 0
        %v1499 = vsel %vm375, %v316, 0
        %v1502 = vsel %vm375, %v317, 0
        %v1505 = vsel %vm375, %v319, 0
        %v1508 = vsel %vm375, %v320, 0
        %v1511 = vsel %vm375, %v322, 0
        %v1514 = vsel %vm375, %v323, 0
        %v1517 = vsel %vm375, %v325, 0
        %v1520 = vsel %vm375, %v326, 0
        %v1523 = vsel %vm375, %v328, 0
        %v1526 = vsel %vm375, %v329, 0
        %v1529 = vsel %vm375, %v331, 0
        %v1532 = vsel %vm375, %v332, 0
        %v1535 = vsel %vm375, %v334, 0
        %v1538 = vsel %vm375, %v335, 0
        %v1541 = vsel %vm375, %v337, 0
        %v1544 = vsel %vm375, %v338, 0
        %v1547 = vsel %vm472, %v1449, 0
        %1549 = vmatprep.subr.mxu0 0.0
        %1550 = vmatpush1.msra.mxu0 0.0
        %1551 = vmatprep.subr.mxu0 0.0
        %1552 = vmatpush1.msra.mxu0 0.0
        %1553 = vmatprep.subr.mxu0 0.0
        %1554 = vmatpush1.msra.mxu0 0.0
        %1555 = vmatprep.subr.mxu0 0.0
        %1556 = vmatpush1.msra.mxu0 0.0
        %1557 = vmatprep.subr.mxu0 0.0
        %1558 = vmatpush1.msra.mxu0 0.0
        %1559 = vmatprep.subr.mxu0 0.0
        %1560 = vmatpush1.msra.mxu0 0.0
        %1561 = vmatprep.subr.mxu0 0.0
        %1562 = vmatpush1.msra.mxu0 0.0
        %1563 = vmatprep.subr.mxu0 0.0
        %1564 = vmatpush1.msra.mxu0 0.0
        %1565 = vmatprep.subr.mxu0 0.0
        %1566 = vmatpush1.msra.mxu0 0.0
        %1567 = vmatprep.subr.mxu0 0.0
        %1568 = vmatpush1.msra.mxu0 0.0
        %1569 = vmatprep.subr.mxu0 0.0
        %1570 = vmatpush1.msra.mxu0 0.0
        %1571 = vmatprep.subr.mxu0 0.0
        %1572 = vmatpush1.msra.mxu0 0.0
        %1573 = vmatprep.subr.mxu0 0.0
        %1574 = vmatpush1.msra.mxu0 0.0
        %1575 = vmatprep.subr.mxu0 0.0
        %1576 = vmatpush1.msra.mxu0 0.0
        %1577 = vmatprep.subr.mxu0 0.0
        %1578 = vmatpush1.msra.mxu0 0.0
        %1579 = vmatprep.subr.mxu0 0.0
        %1580 = vmatpush1.msra.mxu0 %v1547
        %1581 = vmatprep.subr.mxu0 0.0
        %1582 = vmatpush2.msra.mxu0 0.0
        %1583 = vmatprep.subr.mxu0 0.0
        %1584 = vmatpush2.msra.mxu0 0.0
        %1585 = vmatprep.subr.mxu0 0.0
        %1586 = vmatpush2.msra.mxu0 0.0
        %1587 = vmatprep.subr.mxu0 0.0
        %1588 = vmatpush2.msra.mxu0 0.0
        %1589 = vmatprep.subr.mxu0 0.0
        %1590 = vmatpush2.msra.mxu0 0.0
        %1591 = vmatprep.subr.mxu0 0.0
        %1592 = vmatpush2.msra.mxu0 0.0
        %1593 = vmatprep.subr.mxu0 0.0
        %1594 = vmatpush2.msra.mxu0 0.0
        %1595 = vmatprep.subr.mxu0 0.0
        %1596 = vmatpush2.msra.mxu0 0.0
        %1597 = vmatprep.subr.mxu0 0.0
        %1598 = vmatpush2.msra.mxu0 0.0
        %1599 = vmatprep.subr.mxu0 0.0
        %1600 = vmatpush2.msra.mxu0 0.0
        %1601 = vmatprep.subr.mxu0 0.0
        %1602 = vmatpush2.msra.mxu0 0.0
        %1603 = vmatprep.subr.mxu0 0.0
        %1604 = vmatpush2.msra.mxu0 0.0
        %1605 = vmatprep.subr.mxu0 0.0
        %1606 = vmatpush2.msra.mxu0 0.0
        %1607 = vmatprep.subr.mxu0 0.0
        %1608 = vmatpush2.msra.mxu0 0.0
        %1609 = vmatprep.subr.mxu0 0.0
        %1610 = vmatpush2.msra.mxu0 0.0
        %1611 = vmatprep.subr.mxu0 0.0
        %1612 = vmatpush2.msra.mxu0 0.0
        %1613 = vmatprep.mubr.f32.mxu0 0.0
        %1614 = vmatmul.mubr.f32.gmra.mxu0 %v1451
        %v1615 = vpop.f32.mrf.mxu0
        %v1616 = vadd.f32 0.0, %v1615
        %v1617 = vpop.f32.mrf.mxu0
        %1618 = vmatprep.mubr.f32.mxu0 0.0
        %1619 = vmatmul.mubr.f32.gmra.mxu0 %v1454
        %v1620 = vpop.f32.mrf.mxu0
        %v1621 = vadd.f32 0.0, %v1620
        %v1622 = vpop.f32.mrf.mxu0
        %1623 = vmatprep.mubr.f32.mxu0 0.0
        %1624 = vmatmul.mubr.f32.gmra.mxu0 %v1457
        %v1625 = vpop.f32.mrf.mxu0
        %v1626 = vadd.f32 0.0, %v1625
        %v1627 = vpop.f32.mrf.mxu0
        %1628 = vmatprep.mubr.f32.mxu0 0.0
        %1629 = vmatmul.mubr.f32.gmra.mxu0 %v1460
        %v1630 = vpop.f32.mrf.mxu0
        %v1631 = vadd.f32 0.0, %v1630
        %v1632 = vpop.f32.mrf.mxu0
        %1633 = vmatprep.mubr.f32.mxu0 0.0
        %1634 = vmatmul.mubr.f32.gmra.mxu0 %v1463
        %v1635 = vpop.f32.mrf.mxu0
        %v1636 = vadd.f32 0.0, %v1635
        %v1637 = vpop.f32.mrf.mxu0
        %1638 = vmatprep.mubr.f32.mxu0 0.0
        %1639 = vmatmul.mubr.f32.gmra.mxu0 %v1466
        %v1640 = vpop.f32.mrf.mxu0
        %v1641 = vadd.f32 0.0, %v1640
        %v1642 = vpop.f32.mrf.mxu0
        %1643 = vmatprep.mubr.f32.mxu0 0.0
        %1644 = vmatmul.mubr.f32.gmra.mxu0 %v1469
        %v1645 = vpop.f32.mrf.mxu0
        %v1646 = vadd.f32 0.0, %v1645
        %v1647 = vpop.f32.mrf.mxu0
        %1648 = vmatprep.mubr.f32.mxu0 0.0
        %1649 = vmatmul.mubr.f32.gmra.mxu0 %v1472
        %v1650 = vpop.f32.mrf.mxu0
        %v1651 = vadd.f32 0.0, %v1650
        %v1652 = vpop.f32.mrf.mxu0
        %1653 = vmatprep.mubr.f32.mxu0 0.0
        %1654 = vmatmul.mubr.f32.gmra.mxu0 %v1475
        %v1655 = vpop.f32.mrf.mxu0
        %v1656 = vadd.f32 0.0, %v1655
        %v1657 = vpop.f32.mrf.mxu0
        %1658 = vmatprep.mubr.f32.mxu0 0.0
        %1659 = vmatmul.mubr.f32.gmra.mxu0 %v1478
        %v1660 = vpop.f32.mrf.mxu0
        %v1661 = vadd.f32 0.0, %v1660
        %v1662 = vpop.f32.mrf.mxu0
        %1663 = vmatprep.mubr.f32.mxu0 0.0
        %1664 = vmatmul.mubr.f32.gmra.mxu0 %v1481
        %v1665 = vpop.f32.mrf.mxu0
        %v1666 = vadd.f32 0.0, %v1665
        %v1667 = vpop.f32.mrf.mxu0
        %1668 = vmatprep.mubr.f32.mxu0 0.0
        %1669 = vmatmul.mubr.f32.gmra.mxu0 %v1484
        %v1670 = vpop.f32.mrf.mxu0
        %v1671 = vadd.f32 0.0, %v1670
        %v1672 = vpop.f32.mrf.mxu0
        %1673 = vmatprep.mubr.f32.mxu0 0.0
        %1674 = vmatmul.mubr.f32.gmra.mxu0 %v1487
        %v1675 = vpop.f32.mrf.mxu0
        %v1676 = vadd.f32 0.0, %v1675
        %v1677 = vpop.f32.mrf.mxu0
        %1678 = vmatprep.mubr.f32.mxu0 0.0
        %1679 = vmatmul.mubr.f32.gmra.mxu0 %v1490
        %v1680 = vpop.f32.mrf.mxu0
        %v1681 = vadd.f32 0.0, %v1680
        %v1682 = vpop.f32.mrf.mxu0
        %1683 = vmatprep.mubr.f32.mxu0 0.0
        %1684 = vmatmul.mubr.f32.gmra.mxu0 %v1493
        %v1685 = vpop.f32.mrf.mxu0
        %v1686 = vadd.f32 0.0, %v1685
        %v1687 = vpop.f32.mrf.mxu0
        %1688 = vmatprep.mubr.f32.mxu0 0.0
        %1689 = vmatmul.mubr.f32.gmra.mxu0 %v1496
        %v1690 = vpop.f32.mrf.mxu0
        %v1691 = vadd.f32 0.0, %v1690
        %v1692 = vpop.f32.mrf.mxu0
        %1693 = vmatprep.mubr.f32.mxu0 0.0
        %1694 = vmatmul.mubr.f32.gmra.mxu0 %v1499
        %v1695 = vpop.f32.mrf.mxu0
        %v1696 = vadd.f32 0.0, %v1695
        %v1697 = vpop.f32.mrf.mxu0
        %1698 = vmatprep.mubr.f32.mxu0 0.0
        %1699 = vmatmul.mubr.f32.gmra.mxu0 %v1502
        %v1700 = vpop.f32.mrf.mxu0
        %v1701 = vadd.f32 0.0, %v1700
        %v1702 = vpop.f32.mrf.mxu0
        %1703 = vmatprep.mubr.f32.mxu0 0.0
        %1704 = vmatmul.mubr.f32.gmra.mxu0 %v1505
        %v1705 = vpop.f32.mrf.mxu0
        %v1706 = vadd.f32 0.0, %v1705
        %v1707 = vpop.f32.mrf.mxu0
        %1708 = vmatprep.mubr.f32.mxu0 0.0
        %1709 = vmatmul.mubr.f32.gmra.mxu0 %v1508
        %v1710 = vpop.f32.mrf.mxu0
        %v1711 = vadd.f32 0.0, %v1710
        %v1712 = vpop.f32.mrf.mxu0
        %1713 = vmatprep.mubr.f32.mxu0 0.0
        %1714 = vmatmul.mubr.f32.gmra.mxu0 %v1511
        %v1715 = vpop.f32.mrf.mxu0
        %v1716 = vadd.f32 0.0, %v1715
        %v1717 = vpop.f32.mrf.mxu0
        %1718 = vmatprep.mubr.f32.mxu0 0.0
        %1719 = vmatmul.mubr.f32.gmra.mxu0 %v1514
        %v1720 = vpop.f32.mrf.mxu0
        %v1721 = vadd.f32 0.0, %v1720
        %v1722 = vpop.f32.mrf.mxu0
        %1723 = vmatprep.mubr.f32.mxu0 0.0
        %1724 = vmatmul.mubr.f32.gmra.mxu0 %v1517
        %v1725 = vpop.f32.mrf.mxu0
        %v1726 = vadd.f32 0.0, %v1725
        %v1727 = vpop.f32.mrf.mxu0
        %1728 = vmatprep.mubr.f32.mxu0 0.0
        %1729 = vmatmul.mubr.f32.gmra.mxu0 %v1520
        %v1730 = vpop.f32.mrf.mxu0
        %v1731 = vadd.f32 0.0, %v1730
        %v1732 = vpop.f32.mrf.mxu0
        %1733 = vmatprep.mubr.f32.mxu0 0.0
        %1734 = vmatmul.mubr.f32.gmra.mxu0 %v1523
        %v1735 = vpop.f32.mrf.mxu0
        %v1736 = vadd.f32 0.0, %v1735
        %v1737 = vpop.f32.mrf.mxu0
        %1738 = vmatprep.mubr.f32.mxu0 0.0
        %1739 = vmatmul.mubr.f32.gmra.mxu0 %v1526
        %v1740 = vpop.f32.mrf.mxu0
        %v1741 = vadd.f32 0.0, %v1740
        %v1742 = vpop.f32.mrf.mxu0
        %1743 = vmatprep.mubr.f32.mxu0 0.0
        %1744 = vmatmul.mubr.f32.gmra.mxu0 %v1529
        %v1745 = vpop.f32.mrf.mxu0
        %v1746 = vadd.f32 0.0, %v1745
        %v1747 = vpop.f32.mrf.mxu0
        %1748 = vmatprep.mubr.f32.mxu0 0.0
        %1749 = vmatmul.mubr.f32.gmra.mxu0 %v1532
        %v1750 = vpop.f32.mrf.mxu0
        %v1751 = vadd.f32 0.0, %v1750
        %v1752 = vpop.f32.mrf.mxu0
        %1753 = vmatprep.mubr.f32.mxu0 0.0
        %1754 = vmatmul.mubr.f32.gmra.mxu0 %v1535
        %v1755 = vpop.f32.mrf.mxu0
        %v1756 = vadd.f32 0.0, %v1755
        %v1757 = vpop.f32.mrf.mxu0
        %1758 = vmatprep.mubr.f32.mxu0 0.0
        %1759 = vmatmul.mubr.f32.gmra.mxu0 %v1538
        %v1760 = vpop.f32.mrf.mxu0
        %v1761 = vadd.f32 0.0, %v1760
        %v1762 = vpop.f32.mrf.mxu0
        %1763 = vmatprep.mubr.f32.mxu0 0.0
        %1764 = vmatmul.mubr.f32.gmra.mxu0 %v1541
        %v1765 = vpop.f32.mrf.mxu0
        %v1766 = vadd.f32 0.0, %v1765
        %v1767 = vpop.f32.mrf.mxu0
        %1768 = vmatprep.mubr.f32.mxu0 0.0
        %1769 = vmatmul.mubr.f32.gmra.mxu0 %v1544
        %v1770 = vpop.f32.mrf.mxu0
        %v1771 = vadd.f32 0.0, %v1770
        %v1772 = vpop.f32.mrf.mxu0
        %1773 = vdwg.mxu0
        %v1774 = vadd.f32 %v1416, %v1616
        %v1775 = vadd.f32 %v1417, %v1621
        %v1776 = vadd.f32 %v1418, %v1626
        %v1777 = vadd.f32 %v1419, %v1631
        %v1778 = vadd.f32 %v1420, %v1636
        %v1779 = vadd.f32 %v1421, %v1641
        %v1780 = vadd.f32 %v1422, %v1646
        %v1781 = vadd.f32 %v1423, %v1651
        %v1782 = vadd.f32 %v1424, %v1656
        %v1783 = vadd.f32 %v1425, %v1661
        %v1784 = vadd.f32 %v1426, %v1666
        %v1785 = vadd.f32 %v1427, %v1671
        %v1786 = vadd.f32 %v1428, %v1676
        %v1787 = vadd.f32 %v1429, %v1681
        %v1788 = vadd.f32 %v1430, %v1686
        %v1789 = vadd.f32 %v1431, %v1691
        %v1790 = vadd.f32 %v1432, %v1696
        %v1791 = vadd.f32 %v1433, %v1701
        %v1792 = vadd.f32 %v1434, %v1706
        %v1793 = vadd.f32 %v1435, %v1711
        %v1794 = vadd.f32 %v1436, %v1716
        %v1795 = vadd.f32 %v1437, %v1721
        %v1796 = vadd.f32 %v1438, %v1726
        %v1797 = vadd.f32 %v1439, %v1731
        %v1798 = vadd.f32 %v1440, %v1736
        %v1799 = vadd.f32 %v1441, %v1741
        %v1800 = vadd.f32 %v1442, %v1746
        %v1801 = vadd.f32 %v1443, %v1751
        %v1802 = vadd.f32 %v1444, %v1756
        %v1803 = vadd.f32 %v1445, %v1761
        %v1804 = vadd.f32 %v1446, %v1766
        %v1805 = vadd.f32 %v1447, %v1771
        %s1806 = scalar_lea.vmem %s1, 16
        %v1807 = vld [vmem:[%s1806] sm:$0x7]
        %v1809 = vsel %vm375, %v340, 0
        %v1812 = vsel %vm375, %v341, 0
        %v1815 = vsel %vm375, %v342, 0
        %v1818 = vsel %vm375, %v343, 0
        %v1821 = vsel %vm375, %v344, 0
        %v1824 = vsel %vm375, %v345, 0
        %v1827 = vsel %vm375, %v346, 0
        %v1830 = vsel %vm375, %v347, 0
        %v1833 = vsel %vm375, %v348, 0
        %v1836 = vsel %vm375, %v349, 0
        %v1839 = vsel %vm375, %v350, 0
        %v1842 = vsel %vm375, %v351, 0
        %v1845 = vsel %vm375, %v352, 0
        %v1848 = vsel %vm375, %v353, 0
        %v1851 = vsel %vm375, %v354, 0
        %v1854 = vsel %vm375, %v355, 0
        %v1857 = vsel %vm375, %v356, 0
        %v1860 = vsel %vm375, %v357, 0
        %v1863 = vsel %vm375, %v358, 0
        %v1866 = vsel %vm375, %v359, 0
        %v1869 = vsel %vm375, %v360, 0
        %v1872 = vsel %vm375, %v361, 0
        %v1875 = vsel %vm375, %v362, 0
        %v1878 = vsel %vm375, %v363, 0
        %v1881 = vsel %vm375, %v364, 0
        %v1884 = vsel %vm375, %v365, 0
        %v1887 = vsel %vm375, %v366, 0
        %v1890 = vsel %vm375, %v367, 0
        %v1893 = vsel %vm375, %v368, 0
        %v1896 = vsel %vm375, %v369, 0
        %v1899 = vsel %vm375, %v370, 0
        %v1902 = vsel %vm375, %v371, 0
        %v1905 = vsel %vm472, %v1807, 0
        %1907 = vmatprep.subr.mxu0 0.0
        %1908 = vmatpush1.msra.mxu0 0.0
        %1909 = vmatprep.subr.mxu0 0.0
        %1910 = vmatpush1.msra.mxu0 0.0
        %1911 = vmatprep.subr.mxu0 0.0
        %1912 = vmatpush1.msra.mxu0 0.0
        %1913 = vmatprep.subr.mxu0 0.0
        %1914 = vmatpush1.msra.mxu0 0.0
        %1915 = vmatprep.subr.mxu0 0.0
        %1916 = vmatpush1.msra.mxu0 0.0
        %1917 = vmatprep.subr.mxu0 0.0
        %1918 = vmatpush1.msra.mxu0 0.0
        %1919 = vmatprep.subr.mxu0 0.0
        %1920 = vmatpush1.msra.mxu0 0.0
        %1921 = vmatprep.subr.mxu0 0.0
        %1922 = vmatpush1.msra.mxu0 0.0
        %1923 = vmatprep.subr.mxu0 0.0
        %1924 = vmatpush1.msra.mxu0 0.0
        %1925 = vmatprep.subr.mxu0 0.0
        %1926 = vmatpush1.msra.mxu0 0.0
        %1927 = vmatprep.subr.mxu0 0.0
        %1928 = vmatpush1.msra.mxu0 0.0
        %1929 = vmatprep.subr.mxu0 0.0
        %1930 = vmatpush1.msra.mxu0 0.0
        %1931 = vmatprep.subr.mxu0 0.0
        %1932 = vmatpush1.msra.mxu0 0.0
        %1933 = vmatprep.subr.mxu0 0.0
        %1934 = vmatpush1.msra.mxu0 0.0
        %1935 = vmatprep.subr.mxu0 0.0
        %1936 = vmatpush1.msra.mxu0 0.0
        %1937 = vmatprep.subr.mxu0 0.0
        %1938 = vmatpush1.msra.mxu0 %v1905
        %1939 = vmatprep.subr.mxu0 0.0
        %1940 = vmatpush2.msra.mxu0 0.0
        %1941 = vmatprep.subr.mxu0 0.0
        %1942 = vmatpush2.msra.mxu0 0.0
        %1943 = vmatprep.subr.mxu0 0.0
        %1944 = vmatpush2.msra.mxu0 0.0
        %1945 = vmatprep.subr.mxu0 0.0
        %1946 = vmatpush2.msra.mxu0 0.0
        %1947 = vmatprep.subr.mxu0 0.0
        %1948 = vmatpush2.msra.mxu0 0.0
        %1949 = vmatprep.subr.mxu0 0.0
        %1950 = vmatpush2.msra.mxu0 0.0
        %1951 = vmatprep.subr.mxu0 0.0
        %1952 = vmatpush2.msra.mxu0 0.0
        %1953 = vmatprep.subr.mxu0 0.0
        %1954 = vmatpush2.msra.mxu0 0.0
        %1955 = vmatprep.subr.mxu0 0.0
        %1956 = vmatpush2.msra.mxu0 0.0
        %1957 = vmatprep.subr.mxu0 0.0
        %1958 = vmatpush2.msra.mxu0 0.0
        %1959 = vmatprep.subr.mxu0 0.0
        %1960 = vmatpush2.msra.mxu0 0.0
        %1961 = vmatprep.subr.mxu0 0.0
        %1962 = vmatpush2.msra.mxu0 0.0
        %1963 = vmatprep.subr.mxu0 0.0
        %1964 = vmatpush2.msra.mxu0 0.0
        %1965 = vmatprep.subr.mxu0 0.0
        %1966 = vmatpush2.msra.mxu0 0.0
        %1967 = vmatprep.subr.mxu0 0.0
        %1968 = vmatpush2.msra.mxu0 0.0
        %1969 = vmatprep.subr.mxu0 0.0
        %1970 = vmatpush2.msra.mxu0 0.0
        %1971 = vmatprep.mubr.f32.mxu0 0.0
        %1972 = vmatmul.mubr.f32.gmra.mxu0 %v1809
        %v1973 = vpop.f32.mrf.mxu0
        %v1974 = vadd.f32 0.0, %v1973
        %v1975 = vpop.f32.mrf.mxu0
        %1976 = vmatprep.mubr.f32.mxu0 0.0
        %1977 = vmatmul.mubr.f32.gmra.mxu0 %v1812
        %v1978 = vpop.f32.mrf.mxu0
        %v1979 = vadd.f32 0.0, %v1978
        %v1980 = vpop.f32.mrf.mxu0
        %1981 = vmatprep.mubr.f32.mxu0 0.0
        %1982 = vmatmul.mubr.f32.gmra.mxu0 %v1815
        %v1983 = vpop.f32.mrf.mxu0
        %v1984 = vadd.f32 0.0, %v1983
        %v1985 = vpop.f32.mrf.mxu0
        %1986 = vmatprep.mubr.f32.mxu0 0.0
        %1987 = vmatmul.mubr.f32.gmra.mxu0 %v1818
        %v1988 = vpop.f32.mrf.mxu0
        %v1989 = vadd.f32 0.0, %v1988
        %v1990 = vpop.f32.mrf.mxu0
        %1991 = vmatprep.mubr.f32.mxu0 0.0
        %1992 = vmatmul.mubr.f32.gmra.mxu0 %v1821
        %v1993 = vpop.f32.mrf.mxu0
        %v1994 = vadd.f32 0.0, %v1993
        %v1995 = vpop.f32.mrf.mxu0
        %1996 = vmatprep.mubr.f32.mxu0 0.0
        %1997 = vmatmul.mubr.f32.gmra.mxu0 %v1824
        %v1998 = vpop.f32.mrf.mxu0
        %v1999 = vadd.f32 0.0, %v1998
        %v2000 = vpop.f32.mrf.mxu0
        %2001 = vmatprep.mubr.f32.mxu0 0.0
        %2002 = vmatmul.mubr.f32.gmra.mxu0 %v1827
        %v2003 = vpop.f32.mrf.mxu0
        %v2004 = vadd.f32 0.0, %v2003
        %v2005 = vpop.f32.mrf.mxu0
        %2006 = vmatprep.mubr.f32.mxu0 0.0
        %2007 = vmatmul.mubr.f32.gmra.mxu0 %v1830
        %v2008 = vpop.f32.mrf.mxu0
        %v2009 = vadd.f32 0.0, %v2008
        %v2010 = vpop.f32.mrf.mxu0
        %2011 = vmatprep.mubr.f32.mxu0 0.0
        %2012 = vmatmul.mubr.f32.gmra.mxu0 %v1833
        %v2013 = vpop.f32.mrf.mxu0
        %v2014 = vadd.f32 0.0, %v2013
        %v2015 = vpop.f32.mrf.mxu0
        %2016 = vmatprep.mubr.f32.mxu0 0.0
        %2017 = vmatmul.mubr.f32.gmra.mxu0 %v1836
        %v2018 = vpop.f32.mrf.mxu0
        %v2019 = vadd.f32 0.0, %v2018
        %v2020 = vpop.f32.mrf.mxu0
        %2021 = vmatprep.mubr.f32.mxu0 0.0
        %2022 = vmatmul.mubr.f32.gmra.mxu0 %v1839
        %v2023 = vpop.f32.mrf.mxu0
        %v2024 = vadd.f32 0.0, %v2023
        %v2025 = vpop.f32.mrf.mxu0
        %2026 = vmatprep.mubr.f32.mxu0 0.0
        %2027 = vmatmul.mubr.f32.gmra.mxu0 %v1842
        %v2028 = vpop.f32.mrf.mxu0
        %v2029 = vadd.f32 0.0, %v2028
        %v2030 = vpop.f32.mrf.mxu0
        %2031 = vmatprep.mubr.f32.mxu0 0.0
        %2032 = vmatmul.mubr.f32.gmra.mxu0 %v1845
        %v2033 = vpop.f32.mrf.mxu0
        %v2034 = vadd.f32 0.0, %v2033
        %v2035 = vpop.f32.mrf.mxu0
        %2036 = vmatprep.mubr.f32.mxu0 0.0
        %2037 = vmatmul.mubr.f32.gmra.mxu0 %v1848
        %v2038 = vpop.f32.mrf.mxu0
        %v2039 = vadd.f32 0.0, %v2038
        %v2040 = vpop.f32.mrf.mxu0
        %2041 = vmatprep.mubr.f32.mxu0 0.0
        %2042 = vmatmul.mubr.f32.gmra.mxu0 %v1851
        %v2043 = vpop.f32.mrf.mxu0
        %v2044 = vadd.f32 0.0, %v2043
        %v2045 = vpop.f32.mrf.mxu0
        %2046 = vmatprep.mubr.f32.mxu0 0.0
        %2047 = vmatmul.mubr.f32.gmra.mxu0 %v1854
        %v2048 = vpop.f32.mrf.mxu0
        %v2049 = vadd.f32 0.0, %v2048
        %v2050 = vpop.f32.mrf.mxu0
        %2051 = vmatprep.mubr.f32.mxu0 0.0
        %2052 = vmatmul.mubr.f32.gmra.mxu0 %v1857
        %v2053 = vpop.f32.mrf.mxu0
        %v2054 = vadd.f32 0.0, %v2053
        %v2055 = vpop.f32.mrf.mxu0
        %2056 = vmatprep.mubr.f32.mxu0 0.0
        %2057 = vmatmul.mubr.f32.gmra.mxu0 %v1860
        %v2058 = vpop.f32.mrf.mxu0
        %v2059 = vadd.f32 0.0, %v2058
        %v2060 = vpop.f32.mrf.mxu0
        %2061 = vmatprep.mubr.f32.mxu0 0.0
        %2062 = vmatmul.mubr.f32.gmra.mxu0 %v1863
        %v2063 = vpop.f32.mrf.mxu0
        %v2064 = vadd.f32 0.0, %v2063
        %v2065 = vpop.f32.mrf.mxu0
        %2066 = vmatprep.mubr.f32.mxu0 0.0
        %2067 = vmatmul.mubr.f32.gmra.mxu0 %v1866
        %v2068 = vpop.f32.mrf.mxu0
        %v2069 = vadd.f32 0.0, %v2068
        %v2070 = vpop.f32.mrf.mxu0
        %2071 = vmatprep.mubr.f32.mxu0 0.0
        %2072 = vmatmul.mubr.f32.gmra.mxu0 %v1869
        %v2073 = vpop.f32.mrf.mxu0
        %v2074 = vadd.f32 0.0, %v2073
        %v2075 = vpop.f32.mrf.mxu0
        %2076 = vmatprep.mubr.f32.mxu0 0.0
        %2077 = vmatmul.mubr.f32.gmra.mxu0 %v1872
        %v2078 = vpop.f32.mrf.mxu0
        %v2079 = vadd.f32 0.0, %v2078
        %v2080 = vpop.f32.mrf.mxu0
        %2081 = vmatprep.mubr.f32.mxu0 0.0
        %2082 = vmatmul.mubr.f32.gmra.mxu0 %v1875
        %v2083 = vpop.f32.mrf.mxu0
        %v2084 = vadd.f32 0.0, %v2083
        %v2085 = vpop.f32.mrf.mxu0
        %2086 = vmatprep.mubr.f32.mxu0 0.0
        %2087 = vmatmul.mubr.f32.gmra.mxu0 %v1878
        %v2088 = vpop.f32.mrf.mxu0
        %v2089 = vadd.f32 0.0, %v2088
        %v2090 = vpop.f32.mrf.mxu0
        %2091 = vmatprep.mubr.f32.mxu0 0.0
        %2092 = vmatmul.mubr.f32.gmra.mxu0 %v1881
        %v2093 = vpop.f32.mrf.mxu0
        %v2094 = vadd.f32 0.0, %v2093
        %v2095 = vpop.f32.mrf.mxu0
        %2096 = vmatprep.mubr.f32.mxu0 0.0
        %2097 = vmatmul.mubr.f32.gmra.mxu0 %v1884
        %v2098 = vpop.f32.mrf.mxu0
        %v2099 = vadd.f32 0.0, %v2098
        %v2100 = vpop.f32.mrf.mxu0
        %2101 = vmatprep.mubr.f32.mxu0 0.0
        %2102 = vmatmul.mubr.f32.gmra.mxu0 %v1887
        %v2103 = vpop.f32.mrf.mxu0
        %v2104 = vadd.f32 0.0, %v2103
        %v2105 = vpop.f32.mrf.mxu0
        %2106 = vmatprep.mubr.f32.mxu0 0.0
        %2107 = vmatmul.mubr.f32.gmra.mxu0 %v1890
        %v2108 = vpop.f32.mrf.mxu0
        %v2109 = vadd.f32 0.0, %v2108
        %v2110 = vpop.f32.mrf.mxu0
        %2111 = vmatprep.mubr.f32.mxu0 0.0
        %2112 = vmatmul.mubr.f32.gmra.mxu0 %v1893
        %v2113 = vpop.f32.mrf.mxu0
        %v2114 = vadd.f32 0.0, %v2113
        %v2115 = vpop.f32.mrf.mxu0
        %2116 = vmatprep.mubr.f32.mxu0 0.0
        %2117 = vmatmul.mubr.f32.gmra.mxu0 %v1896
        %v2118 = vpop.f32.mrf.mxu0
        %v2119 = vadd.f32 0.0, %v2118
        %v2120 = vpop.f32.mrf.mxu0
        %2121 = vmatprep.mubr.f32.mxu0 0.0
        %2122 = vmatmul.mubr.f32.gmra.mxu0 %v1899
        %v2123 = vpop.f32.mrf.mxu0
        %v2124 = vadd.f32 0.0, %v2123
        %v2125 = vpop.f32.mrf.mxu0
        %2126 = vmatprep.mubr.f32.mxu0 0.0
        %2127 = vmatmul.mubr.f32.gmra.mxu0 %v1902
        %v2128 = vpop.f32.mrf.mxu0
        %v2129 = vadd.f32 0.0, %v2128
        %v2130 = vpop.f32.mrf.mxu0
        %2131 = vdwg.mxu0
        %v2132 = vadd.f32 %v1774, %v1974
        %v2133 = vadd.f32 %v1775, %v1979
        %v2134 = vadd.f32 %v1776, %v1984
        %v2135 = vadd.f32 %v1777, %v1989
        %v2136 = vadd.f32 %v1778, %v1994
        %v2137 = vadd.f32 %v1779, %v1999
        %v2138 = vadd.f32 %v1780, %v2004
        %v2139 = vadd.f32 %v1781, %v2009
        %v2140 = vadd.f32 %v1782, %v2014
        %v2141 = vadd.f32 %v1783, %v2019
        %v2142 = vadd.f32 %v1784, %v2024
        %v2143 = vadd.f32 %v1785, %v2029
        %v2144 = vadd.f32 %v1786, %v2034
        %v2145 = vadd.f32 %v1787, %v2039
        %v2146 = vadd.f32 %v1788, %v2044
        %v2147 = vadd.f32 %v1789, %v2049
        %v2148 = vadd.f32 %v1790, %v2054
        %v2149 = vadd.f32 %v1791, %v2059
        %v2150 = vadd.f32 %v1792, %v2064
        %v2151 = vadd.f32 %v1793, %v2069
        %v2152 = vadd.f32 %v1794, %v2074
        %v2153 = vadd.f32 %v1795, %v2079
        %v2154 = vadd.f32 %v1796, %v2084
        %v2155 = vadd.f32 %v1797, %v2089
        %v2156 = vadd.f32 %v1798, %v2094
        %v2157 = vadd.f32 %v1799, %v2099
        %v2158 = vadd.f32 %v1800, %v2104
        %v2159 = vadd.f32 %v1801, %v2109
        %v2160 = vadd.f32 %v1802, %v2114
        %v2161 = vadd.f32 %v1803, %v2119
        %v2162 = vadd.f32 %v1804, %v2124
        %v2163 = vadd.f32 %v1805, %v2129
        %v2180 = vrot.slane %v292, 1
        %v2181 = vrot.slane %v293, 1
        %v2182 = vsel %vm1041, %v2180, %v2181
        %v2183 = vrot.slane %v294, 1
        %v2184 = vsel %vm1041, %v2181, %v2183
        %v2185 = vrot.slane %v295, 1
        %v2186 = vrot.slane %v296, 1
        %v2187 = vsel %vm1041, %v2185, %v2186
        %v2188 = vrot.slane %v297, 1
        %v2189 = vsel %vm1041, %v2186, %v2188
        %v2190 = vrot.slane %v298, 1
        %v2191 = vrot.slane %v299, 1
        %v2192 = vsel %vm1041, %v2190, %v2191
        %v2193 = vrot.slane %v300, 1
        %v2194 = vsel %vm1041, %v2191, %v2193
        %v2195 = vrot.slane %v301, 1
        %v2196 = vrot.slane %v302, 1
        %v2197 = vsel %vm1041, %v2195, %v2196
        %v2198 = vrot.slane %v303, 1
        %v2199 = vsel %vm1041, %v2196, %v2198
        %v2200 = vrot.slane %v304, 1
        %v2201 = vrot.slane %v305, 1
        %v2202 = vsel %vm1041, %v2200, %v2201
        %v2203 = vrot.slane %v306, 1
        %v2204 = vsel %vm1041, %v2201, %v2203
        %v2205 = vrot.slane %v307, 1
        %v2206 = vrot.slane %v308, 1
        %v2207 = vsel %vm1041, %v2205, %v2206
        %v2208 = vrot.slane %v309, 1
        %v2209 = vsel %vm1041, %v2206, %v2208
        %v2210 = vrot.slane %v310, 1
        %v2211 = vrot.slane %v311, 1
        %v2212 = vsel %vm1041, %v2210, %v2211
        %v2213 = vrot.slane %v312, 1
        %v2214 = vsel %vm1041, %v2211, %v2213
        %v2215 = vrot.slane %v313, 1
        %v2216 = vrot.slane %v314, 1
        %v2217 = vsel %vm1041, %v2215, %v2216
        %v2218 = vrot.slane %v315, 1
        %v2219 = vsel %vm1041, %v2216, %v2218
        %v2220 = vrot.slane %v316, 1
        %v2221 = vrot.slane %v317, 1
        %v2222 = vsel %vm1041, %v2220, %v2221
        %v2223 = vrot.slane %v318, 1
        %v2224 = vsel %vm1041, %v2221, %v2223
        %v2225 = vrot.slane %v319, 1
        %v2226 = vrot.slane %v320, 1
        %v2227 = vsel %vm1041, %v2225, %v2226
        %v2228 = vrot.slane %v321, 1
        %v2229 = vsel %vm1041, %v2226, %v2228
        %v2230 = vrot.slane %v322, 1
        %v2231 = vrot.slane %v323, 1
        %v2232 = vsel %vm1041, %v2230, %v2231
        %v2233 = vrot.slane %v324, 1
        %v2234 = vsel %vm1041, %v2231, %v2233
        %v2235 = vrot.slane %v325, 1
        %v2236 = vrot.slane %v326, 1
        %v2237 = vsel %vm1041, %v2235, %v2236
        %v2238 = vrot.slane %v327, 1
        %v2239 = vsel %vm1041, %v2236, %v2238
        %v2240 = vrot.slane %v328, 1
        %v2241 = vrot.slane %v329, 1
        %v2242 = vsel %vm1041, %v2240, %v2241
        %v2243 = vrot.slane %v330, 1
        %v2244 = vsel %vm1041, %v2241, %v2243
        %v2245 = vrot.slane %v331, 1
        %v2246 = vrot.slane %v332, 1
        %v2247 = vsel %vm1041, %v2245, %v2246
        %v2248 = vrot.slane %v333, 1
        %v2249 = vsel %vm1041, %v2246, %v2248
        %v2250 = vrot.slane %v334, 1
        %v2251 = vrot.slane %v335, 1
        %v2252 = vsel %vm1041, %v2250, %v2251
        %v2253 = vrot.slane %v336, 1
        %v2254 = vsel %vm1041, %v2251, %v2253
        %v2255 = vrot.slane %v337, 1
        %v2256 = vrot.slane %v338, 1
        %v2257 = vsel %vm1041, %v2255, %v2256
        %v2258 = vrot.slane %v339, 1
        %v2259 = vsel %vm1041, %v2256, %v2258
        %s2260 = scalar_lea.vmem %s1, 20
        %v2261 = vld [vmem:[%s2260] sm:$0x7]
        %v2262 = vsel %vm375, %v2182, 0
        %v2264 = vsel %vm375, %v2184, 0
        %v2266 = vsel %vm375, %v2187, 0
        %v2268 = vsel %vm375, %v2189, 0
        %v2270 = vsel %vm375, %v2192, 0
        %v2272 = vsel %vm375, %v2194, 0
        %v2274 = vsel %vm375, %v2197, 0
        %v2276 = vsel %vm375, %v2199, 0
        %v2278 = vsel %vm375, %v2202, 0
        %v2280 = vsel %vm375, %v2204, 0
        %v2282 = vsel %vm375, %v2207, 0
        %v2284 = vsel %vm375, %v2209, 0
        %v2286 = vsel %vm375, %v2212, 0
        %v2288 = vsel %vm375, %v2214, 0
        %v2290 = vsel %vm375, %v2217, 0
        %v2292 = vsel %vm375, %v2219, 0
        %v2294 = vsel %vm375, %v2222, 0
        %v2296 = vsel %vm375, %v2224, 0
        %v2298 = vsel %vm375, %v2227, 0
        %v2300 = vsel %vm375, %v2229, 0
        %v2302 = vsel %vm375, %v2232, 0
        %v2304 = vsel %vm375, %v2234, 0
        %v2306 = vsel %vm375, %v2237, 0
        %v2308 = vsel %vm375, %v2239, 0
        %v2310 = vsel %vm375, %v2242, 0
        %v2312 = vsel %vm375, %v2244, 0
        %v2314 = vsel %vm375, %v2247, 0
        %v2316 = vsel %vm375, %v2249, 0
        %v2318 = vsel %vm375, %v2252, 0
        %v2320 = vsel %vm375, %v2254, 0
        %v2322 = vsel %vm375, %v2257, 0
        %v2324 = vsel %vm375, %v2259, 0
        %v2327 = vsel %vm472, %v2261, 0
        %2329 = vmatprep.subr.mxu0 0.0
        %2330 = vmatpush1.msra.mxu0 0.0
        %2331 = vmatprep.subr.mxu0 0.0
        %2332 = vmatpush1.msra.mxu0 0.0
        %2333 = vmatprep.subr.mxu0 0.0
        %2334 = vmatpush1.msra.mxu0 0.0
        %2335 = vmatprep.subr.mxu0 0.0
        %2336 = vmatpush1.msra.mxu0 0.0
        %2337 = vmatprep.subr.mxu0 0.0
        %2338 = vmatpush1.msra.mxu0 0.0
        %2339 = vmatprep.subr.mxu0 0.0
        %2340 = vmatpush1.msra.mxu0 0.0
        %2341 = vmatprep.subr.mxu0 0.0
        %2342 = vmatpush1.msra.mxu0 0.0
        %2343 = vmatprep.subr.mxu0 0.0
        %2344 = vmatpush1.msra.mxu0 0.0
        %2345 = vmatprep.subr.mxu0 0.0
        %2346 = vmatpush1.msra.mxu0 0.0
        %2347 = vmatprep.subr.mxu0 0.0
        %2348 = vmatpush1.msra.mxu0 0.0
        %2349 = vmatprep.subr.mxu0 0.0
        %2350 = vmatpush1.msra.mxu0 0.0
        %2351 = vmatprep.subr.mxu0 0.0
        %2352 = vmatpush1.msra.mxu0 0.0
        %2353 = vmatprep.subr.mxu0 0.0
        %2354 = vmatpush1.msra.mxu0 0.0
        %2355 = vmatprep.subr.mxu0 0.0
        %2356 = vmatpush1.msra.mxu0 0.0
        %2357 = vmatprep.subr.mxu0 0.0
        %2358 = vmatpush1.msra.mxu0 0.0
        %2359 = vmatprep.subr.mxu0 0.0
        %2360 = vmatpush1.msra.mxu0 %v2327
        %2361 = vmatprep.subr.mxu0 0.0
        %2362 = vmatpush2.msra.mxu0 0.0
        %2363 = vmatprep.subr.mxu0 0.0
        %2364 = vmatpush2.msra.mxu0 0.0
        %2365 = vmatprep.subr.mxu0 0.0
        %2366 = vmatpush2.msra.mxu0 0.0
        %2367 = vmatprep.subr.mxu0 0.0
        %2368 = vmatpush2.msra.mxu0 0.0
        %2369 = vmatprep.subr.mxu0 0.0
        %2370 = vmatpush2.msra.mxu0 0.0
        %2371 = vmatprep.subr.mxu0 0.0
        %2372 = vmatpush2.msra.mxu0 0.0
        %2373 = vmatprep.subr.mxu0 0.0
        %2374 = vmatpush2.msra.mxu0 0.0
        %2375 = vmatprep.subr.mxu0 0.0
        %2376 = vmatpush2.msra.mxu0 0.0
        %2377 = vmatprep.subr.mxu0 0.0
        %2378 = vmatpush2.msra.mxu0 0.0
        %2379 = vmatprep.subr.mxu0 0.0
        %2380 = vmatpush2.msra.mxu0 0.0
        %2381 = vmatprep.subr.mxu0 0.0
        %2382 = vmatpush2.msra.mxu0 0.0
        %2383 = vmatprep.subr.mxu0 0.0
        %2384 = vmatpush2.msra.mxu0 0.0
        %2385 = vmatprep.subr.mxu0 0.0
        %2386 = vmatpush2.msra.mxu0 0.0
        %2387 = vmatprep.subr.mxu0 0.0
        %2388 = vmatpush2.msra.mxu0 0.0
        %2389 = vmatprep.subr.mxu0 0.0
        %2390 = vmatpush2.msra.mxu0 0.0
        %2391 = vmatprep.subr.mxu0 0.0
        %2392 = vmatpush2.msra.mxu0 0.0
        %2393 = vmatprep.mubr.f32.mxu0 0.0
        %2394 = vmatmul.mubr.f32.gmra.mxu0 %v2262
        %v2395 = vpop.f32.mrf.mxu0
        %v2396 = vadd.f32 0.0, %v2395
        %v2397 = vpop.f32.mrf.mxu0
        %2398 = vmatprep.mubr.f32.mxu0 0.0
        %2399 = vmatmul.mubr.f32.gmra.mxu0 %v2264
        %v2400 = vpop.f32.mrf.mxu0
        %v2401 = vadd.f32 0.0, %v2400
        %v2402 = vpop.f32.mrf.mxu0
        %2403 = vmatprep.mubr.f32.mxu0 0.0
        %2404 = vmatmul.mubr.f32.gmra.mxu0 %v2266
        %v2405 = vpop.f32.mrf.mxu0
        %v2406 = vadd.f32 0.0, %v2405
        %v2407 = vpop.f32.mrf.mxu0
        %2408 = vmatprep.mubr.f32.mxu0 0.0
        %2409 = vmatmul.mubr.f32.gmra.mxu0 %v2268
        %v2410 = vpop.f32.mrf.mxu0
        %v2411 = vadd.f32 0.0, %v2410
        %v2412 = vpop.f32.mrf.mxu0
        %2413 = vmatprep.mubr.f32.mxu0 0.0
        %2414 = vmatmul.mubr.f32.gmra.mxu0 %v2270
        %v2415 = vpop.f32.mrf.mxu0
        %v2416 = vadd.f32 0.0, %v2415
        %v2417 = vpop.f32.mrf.mxu0
        %2418 = vmatprep.mubr.f32.mxu0 0.0
        %2419 = vmatmul.mubr.f32.gmra.mxu0 %v2272
        %v2420 = vpop.f32.mrf.mxu0
        %v2421 = vadd.f32 0.0, %v2420
        %v2422 = vpop.f32.mrf.mxu0
        %2423 = vmatprep.mubr.f32.mxu0 0.0
        %2424 = vmatmul.mubr.f32.gmra.mxu0 %v2274
        %v2425 = vpop.f32.mrf.mxu0
        %v2426 = vadd.f32 0.0, %v2425
        %v2427 = vpop.f32.mrf.mxu0
        %2428 = vmatprep.mubr.f32.mxu0 0.0
        %2429 = vmatmul.mubr.f32.gmra.mxu0 %v2276
        %v2430 = vpop.f32.mrf.mxu0
        %v2431 = vadd.f32 0.0, %v2430
        %v2432 = vpop.f32.mrf.mxu0
        %2433 = vmatprep.mubr.f32.mxu0 0.0
        %2434 = vmatmul.mubr.f32.gmra.mxu0 %v2278
        %v2435 = vpop.f32.mrf.mxu0
        %v2436 = vadd.f32 0.0, %v2435
        %v2437 = vpop.f32.mrf.mxu0
        %2438 = vmatprep.mubr.f32.mxu0 0.0
        %2439 = vmatmul.mubr.f32.gmra.mxu0 %v2280
        %v2440 = vpop.f32.mrf.mxu0
        %v2441 = vadd.f32 0.0, %v2440
        %v2442 = vpop.f32.mrf.mxu0
        %2443 = vmatprep.mubr.f32.mxu0 0.0
        %2444 = vmatmul.mubr.f32.gmra.mxu0 %v2282
        %v2445 = vpop.f32.mrf.mxu0
        %v2446 = vadd.f32 0.0, %v2445
        %v2447 = vpop.f32.mrf.mxu0
        %2448 = vmatprep.mubr.f32.mxu0 0.0
        %2449 = vmatmul.mubr.f32.gmra.mxu0 %v2284
        %v2450 = vpop.f32.mrf.mxu0
        %v2451 = vadd.f32 0.0, %v2450
        %v2452 = vpop.f32.mrf.mxu0
        %2453 = vmatprep.mubr.f32.mxu0 0.0
        %2454 = vmatmul.mubr.f32.gmra.mxu0 %v2286
        %v2455 = vpop.f32.mrf.mxu0
        %v2456 = vadd.f32 0.0, %v2455
        %v2457 = vpop.f32.mrf.mxu0
        %2458 = vmatprep.mubr.f32.mxu0 0.0
        %2459 = vmatmul.mubr.f32.gmra.mxu0 %v2288
        %v2460 = vpop.f32.mrf.mxu0
        %v2461 = vadd.f32 0.0, %v2460
        %v2462 = vpop.f32.mrf.mxu0
        %2463 = vmatprep.mubr.f32.mxu0 0.0
        %2464 = vmatmul.mubr.f32.gmra.mxu0 %v2290
        %v2465 = vpop.f32.mrf.mxu0
        %v2466 = vadd.f32 0.0, %v2465
        %v2467 = vpop.f32.mrf.mxu0
        %2468 = vmatprep.mubr.f32.mxu0 0.0
        %2469 = vmatmul.mubr.f32.gmra.mxu0 %v2292
        %v2470 = vpop.f32.mrf.mxu0
        %v2471 = vadd.f32 0.0, %v2470
        %v2472 = vpop.f32.mrf.mxu0
        %2473 = vmatprep.mubr.f32.mxu0 0.0
        %2474 = vmatmul.mubr.f32.gmra.mxu0 %v2294
        %v2475 = vpop.f32.mrf.mxu0
        %v2476 = vadd.f32 0.0, %v2475
        %v2477 = vpop.f32.mrf.mxu0
        %2478 = vmatprep.mubr.f32.mxu0 0.0
        %2479 = vmatmul.mubr.f32.gmra.mxu0 %v2296
        %v2480 = vpop.f32.mrf.mxu0
        %v2481 = vadd.f32 0.0, %v2480
        %v2482 = vpop.f32.mrf.mxu0
        %2483 = vmatprep.mubr.f32.mxu0 0.0
        %2484 = vmatmul.mubr.f32.gmra.mxu0 %v2298
        %v2485 = vpop.f32.mrf.mxu0
        %v2486 = vadd.f32 0.0, %v2485
        %v2487 = vpop.f32.mrf.mxu0
        %2488 = vmatprep.mubr.f32.mxu0 0.0
        %2489 = vmatmul.mubr.f32.gmra.mxu0 %v2300
        %v2490 = vpop.f32.mrf.mxu0
        %v2491 = vadd.f32 0.0, %v2490
        %v2492 = vpop.f32.mrf.mxu0
        %2493 = vmatprep.mubr.f32.mxu0 0.0
        %2494 = vmatmul.mubr.f32.gmra.mxu0 %v2302
        %v2495 = vpop.f32.mrf.mxu0
        %v2496 = vadd.f32 0.0, %v2495
        %v2497 = vpop.f32.mrf.mxu0
        %2498 = vmatprep.mubr.f32.mxu0 0.0
        %2499 = vmatmul.mubr.f32.gmra.mxu0 %v2304
        %v2500 = vpop.f32.mrf.mxu0
        %v2501 = vadd.f32 0.0, %v2500
        %v2502 = vpop.f32.mrf.mxu0
        %2503 = vmatprep.mubr.f32.mxu0 0.0
        %2504 = vmatmul.mubr.f32.gmra.mxu0 %v2306
        %v2505 = vpop.f32.mrf.mxu0
        %v2506 = vadd.f32 0.0, %v2505
        %v2507 = vpop.f32.mrf.mxu0
        %2508 = vmatprep.mubr.f32.mxu0 0.0
        %2509 = vmatmul.mubr.f32.gmra.mxu0 %v2308
        %v2510 = vpop.f32.mrf.mxu0
        %v2511 = vadd.f32 0.0, %v2510
        %v2512 = vpop.f32.mrf.mxu0
        %2513 = vmatprep.mubr.f32.mxu0 0.0
        %2514 = vmatmul.mubr.f32.gmra.mxu0 %v2310
        %v2515 = vpop.f32.mrf.mxu0
        %v2516 = vadd.f32 0.0, %v2515
        %v2517 = vpop.f32.mrf.mxu0
        %2518 = vmatprep.mubr.f32.mxu0 0.0
        %2519 = vmatmul.mubr.f32.gmra.mxu0 %v2312
        %v2520 = vpop.f32.mrf.mxu0
        %v2521 = vadd.f32 0.0, %v2520
        %v2522 = vpop.f32.mrf.mxu0
        %2523 = vmatprep.mubr.f32.mxu0 0.0
        %2524 = vmatmul.mubr.f32.gmra.mxu0 %v2314
        %v2525 = vpop.f32.mrf.mxu0
        %v2526 = vadd.f32 0.0, %v2525
        %v2527 = vpop.f32.mrf.mxu0
        %2528 = vmatprep.mubr.f32.mxu0 0.0
        %2529 = vmatmul.mubr.f32.gmra.mxu0 %v2316
        %v2530 = vpop.f32.mrf.mxu0
        %v2531 = vadd.f32 0.0, %v2530
        %v2532 = vpop.f32.mrf.mxu0
        %2533 = vmatprep.mubr.f32.mxu0 0.0
        %2534 = vmatmul.mubr.f32.gmra.mxu0 %v2318
        %v2535 = vpop.f32.mrf.mxu0
        %v2536 = vadd.f32 0.0, %v2535
        %v2537 = vpop.f32.mrf.mxu0
        %2538 = vmatprep.mubr.f32.mxu0 0.0
        %2539 = vmatmul.mubr.f32.gmra.mxu0 %v2320
        %v2540 = vpop.f32.mrf.mxu0
        %v2541 = vadd.f32 0.0, %v2540
        %v2542 = vpop.f32.mrf.mxu0
        %2543 = vmatprep.mubr.f32.mxu0 0.0
        %2544 = vmatmul.mubr.f32.gmra.mxu0 %v2322
        %v2545 = vpop.f32.mrf.mxu0
        %v2546 = vadd.f32 0.0, %v2545
        %v2547 = vpop.f32.mrf.mxu0
        %2548 = vmatprep.mubr.f32.mxu0 0.0
        %2549 = vmatmul.mubr.f32.gmra.mxu0 %v2324
        %v2550 = vpop.f32.mrf.mxu0
        %v2551 = vadd.f32 0.0, %v2550
        %v2552 = vpop.f32.mrf.mxu0
        %2553 = vdwg.mxu0
        %v2554 = vadd.f32 %v2132, %v2396
        %v2555 = vadd.f32 %v2133, %v2401
        %v2556 = vadd.f32 %v2134, %v2406
        %v2557 = vadd.f32 %v2135, %v2411
        %v2558 = vadd.f32 %v2136, %v2416
        %v2559 = vadd.f32 %v2137, %v2421
        %v2560 = vadd.f32 %v2138, %v2426
        %v2561 = vadd.f32 %v2139, %v2431
        %v2562 = vadd.f32 %v2140, %v2436
        %v2563 = vadd.f32 %v2141, %v2441
        %v2564 = vadd.f32 %v2142, %v2446
        %v2565 = vadd.f32 %v2143, %v2451
        %v2566 = vadd.f32 %v2144, %v2456
        %v2567 = vadd.f32 %v2145, %v2461
        %v2568 = vadd.f32 %v2146, %v2466
        %v2569 = vadd.f32 %v2147, %v2471
        %v2570 = vadd.f32 %v2148, %v2476
        %v2571 = vadd.f32 %v2149, %v2481
        %v2572 = vadd.f32 %v2150, %v2486
        %v2573 = vadd.f32 %v2151, %v2491
        %v2574 = vadd.f32 %v2152, %v2496
        %v2575 = vadd.f32 %v2153, %v2501
        %v2576 = vadd.f32 %v2154, %v2506
        %v2577 = vadd.f32 %v2155, %v2511
        %v2578 = vadd.f32 %v2156, %v2516
        %v2579 = vadd.f32 %v2157, %v2521
        %v2580 = vadd.f32 %v2158, %v2526
        %v2581 = vadd.f32 %v2159, %v2531
        %v2582 = vadd.f32 %v2160, %v2536
        %v2583 = vadd.f32 %v2161, %v2541
        %v2584 = vadd.f32 %v2162, %v2546
        %v2585 = vadd.f32 %v2163, %v2551
        %s2586 = scalar_lea.vmem %s1, 24
        %v2587 = vld [vmem:[%s2586] sm:$0x7]
        %v2589 = vsel %vm375, %v255, 0
        %v2592 = vsel %vm375, %v256, 0
        %v2595 = vsel %vm472, %v2587, 0
        %2597 = vmatprep.subr.mxu0 0.0
        %2598 = vmatpush1.msra.mxu0 0.0
        %2599 = vmatprep.subr.mxu0 0.0
        %2600 = vmatpush1.msra.mxu0 0.0
        %2601 = vmatprep.subr.mxu0 0.0
        %2602 = vmatpush1.msra.mxu0 0.0
        %2603 = vmatprep.subr.mxu0 0.0
        %2604 = vmatpush1.msra.mxu0 0.0
        %2605 = vmatprep.subr.mxu0 0.0
        %2606 = vmatpush1.msra.mxu0 0.0
        %2607 = vmatprep.subr.mxu0 0.0
        %2608 = vmatpush1.msra.mxu0 0.0
        %2609 = vmatprep.subr.mxu0 0.0
        %2610 = vmatpush1.msra.mxu0 0.0
        %2611 = vmatprep.subr.mxu0 0.0
        %2612 = vmatpush1.msra.mxu0 0.0
        %2613 = vmatprep.subr.mxu0 0.0
        %2614 = vmatpush1.msra.mxu0 0.0
        %2615 = vmatprep.subr.mxu0 0.0
        %2616 = vmatpush1.msra.mxu0 0.0
        %2617 = vmatprep.subr.mxu0 0.0
        %2618 = vmatpush1.msra.mxu0 0.0
        %2619 = vmatprep.subr.mxu0 0.0
        %2620 = vmatpush1.msra.mxu0 0.0
        %2621 = vmatprep.subr.mxu0 0.0
        %2622 = vmatpush1.msra.mxu0 0.0
        %2623 = vmatprep.subr.mxu0 0.0
        %2624 = vmatpush1.msra.mxu0 0.0
        %2625 = vmatprep.subr.mxu0 0.0
        %2626 = vmatpush1.msra.mxu0 0.0
        %2627 = vmatprep.subr.mxu0 0.0
        %2628 = vmatpush1.msra.mxu0 %v2595
        %2629 = vmatprep.subr.mxu0 0.0
        %2630 = vmatpush2.msra.mxu0 0.0
        %2631 = vmatprep.subr.mxu0 0.0
        %2632 = vmatpush2.msra.mxu0 0.0
        %2633 = vmatprep.subr.mxu0 0.0
        %2634 = vmatpush2.msra.mxu0 0.0
        %2635 = vmatprep.subr.mxu0 0.0
        %2636 = vmatpush2.msra.mxu0 0.0
        %2637 = vmatprep.subr.mxu0 0.0
        %2638 = vmatpush2.msra.mxu0 0.0
        %2639 = vmatprep.subr.mxu0 0.0
        %2640 = vmatpush2.msra.mxu0 0.0
        %2641 = vmatprep.subr.mxu0 0.0
        %2642 = vmatpush2.msra.mxu0 0.0
        %2643 = vmatprep.subr.mxu0 0.0
        %2644 = vmatpush2.msra.mxu0 0.0
        %2645 = vmatprep.subr.mxu0 0.0
        %2646 = vmatpush2.msra.mxu0 0.0
        %2647 = vmatprep.subr.mxu0 0.0
        %2648 = vmatpush2.msra.mxu0 0.0
        %2649 = vmatprep.subr.mxu0 0.0
        %2650 = vmatpush2.msra.mxu0 0.0
        %2651 = vmatprep.subr.mxu0 0.0
        %2652 = vmatpush2.msra.mxu0 0.0
        %2653 = vmatprep.subr.mxu0 0.0
        %2654 = vmatpush2.msra.mxu0 0.0
        %2655 = vmatprep.subr.mxu0 0.0
        %2656 = vmatpush2.msra.mxu0 0.0
        %2657 = vmatprep.subr.mxu0 0.0
        %2658 = vmatpush2.msra.mxu0 0.0
        %2659 = vmatprep.subr.mxu0 0.0
        %2660 = vmatpush2.msra.mxu0 0.0
        %2661 = vmatprep.mubr.f32.mxu0 0.0
        %2662 = vmatmul.mubr.f32.gmra.mxu0 %v708
        %v2663 = vpop.f32.mrf.mxu0
        %v2664 = vadd.f32 0.0, %v2663
        %v2665 = vpop.f32.mrf.mxu0
        %2666 = vmatprep.mubr.f32.mxu0 0.0
        %2667 = vmatmul.mubr.f32.gmra.mxu0 %v711
        %v2668 = vpop.f32.mrf.mxu0
        %v2669 = vadd.f32 0.0, %v2668
        %v2670 = vpop.f32.mrf.mxu0
        %2671 = vmatprep.mubr.f32.mxu0 0.0
        %2672 = vmatmul.mubr.f32.gmra.mxu0 %v714
        %v2673 = vpop.f32.mrf.mxu0
        %v2674 = vadd.f32 0.0, %v2673
        %v2675 = vpop.f32.mrf.mxu0
        %2676 = vmatprep.mubr.f32.mxu0 0.0
        %2677 = vmatmul.mubr.f32.gmra.mxu0 %v717
        %v2678 = vpop.f32.mrf.mxu0
        %v2679 = vadd.f32 0.0, %v2678
        %v2680 = vpop.f32.mrf.mxu0
        %2681 = vmatprep.mubr.f32.mxu0 0.0
        %2682 = vmatmul.mubr.f32.gmra.mxu0 %v720
        %v2683 = vpop.f32.mrf.mxu0
        %v2684 = vadd.f32 0.0, %v2683
        %v2685 = vpop.f32.mrf.mxu0
        %2686 = vmatprep.mubr.f32.mxu0 0.0
        %2687 = vmatmul.mubr.f32.gmra.mxu0 %v723
        %v2688 = vpop.f32.mrf.mxu0
        %v2689 = vadd.f32 0.0, %v2688
        %v2690 = vpop.f32.mrf.mxu0
        %2691 = vmatprep.mubr.f32.mxu0 0.0
        %2692 = vmatmul.mubr.f32.gmra.mxu0 %v726
        %v2693 = vpop.f32.mrf.mxu0
        %v2694 = vadd.f32 0.0, %v2693
        %v2695 = vpop.f32.mrf.mxu0
        %2696 = vmatprep.mubr.f32.mxu0 0.0
        %2697 = vmatmul.mubr.f32.gmra.mxu0 %v729
        %v2698 = vpop.f32.mrf.mxu0
        %v2699 = vadd.f32 0.0, %v2698
        %v2700 = vpop.f32.mrf.mxu0
        %2701 = vmatprep.mubr.f32.mxu0 0.0
        %2702 = vmatmul.mubr.f32.gmra.mxu0 %v732
        %v2703 = vpop.f32.mrf.mxu0
        %v2704 = vadd.f32 0.0, %v2703
        %v2705 = vpop.f32.mrf.mxu0
        %2706 = vmatprep.mubr.f32.mxu0 0.0
        %2707 = vmatmul.mubr.f32.gmra.mxu0 %v735
        %v2708 = vpop.f32.mrf.mxu0
        %v2709 = vadd.f32 0.0, %v2708
        %v2710 = vpop.f32.mrf.mxu0
        %2711 = vmatprep.mubr.f32.mxu0 0.0
        %2712 = vmatmul.mubr.f32.gmra.mxu0 %v738
        %v2713 = vpop.f32.mrf.mxu0
        %v2714 = vadd.f32 0.0, %v2713
        %v2715 = vpop.f32.mrf.mxu0
        %2716 = vmatprep.mubr.f32.mxu0 0.0
        %2717 = vmatmul.mubr.f32.gmra.mxu0 %v741
        %v2718 = vpop.f32.mrf.mxu0
        %v2719 = vadd.f32 0.0, %v2718
        %v2720 = vpop.f32.mrf.mxu0
        %2721 = vmatprep.mubr.f32.mxu0 0.0
        %2722 = vmatmul.mubr.f32.gmra.mxu0 %v744
        %v2723 = vpop.f32.mrf.mxu0
        %v2724 = vadd.f32 0.0, %v2723
        %v2725 = vpop.f32.mrf.mxu0
        %2726 = vmatprep.mubr.f32.mxu0 0.0
        %2727 = vmatmul.mubr.f32.gmra.mxu0 %v747
        %v2728 = vpop.f32.mrf.mxu0
        %v2729 = vadd.f32 0.0, %v2728
        %v2730 = vpop.f32.mrf.mxu0
        %2731 = vmatprep.mubr.f32.mxu0 0.0
        %2732 = vmatmul.mubr.f32.gmra.mxu0 %v750
        %v2733 = vpop.f32.mrf.mxu0
        %v2734 = vadd.f32 0.0, %v2733
        %v2735 = vpop.f32.mrf.mxu0
        %2736 = vmatprep.mubr.f32.mxu0 0.0
        %2737 = vmatmul.mubr.f32.gmra.mxu0 %v753
        %v2738 = vpop.f32.mrf.mxu0
        %v2739 = vadd.f32 0.0, %v2738
        %v2740 = vpop.f32.mrf.mxu0
        %2741 = vmatprep.mubr.f32.mxu0 0.0
        %2742 = vmatmul.mubr.f32.gmra.mxu0 %v756
        %v2743 = vpop.f32.mrf.mxu0
        %v2744 = vadd.f32 0.0, %v2743
        %v2745 = vpop.f32.mrf.mxu0
        %2746 = vmatprep.mubr.f32.mxu0 0.0
        %2747 = vmatmul.mubr.f32.gmra.mxu0 %v759
        %v2748 = vpop.f32.mrf.mxu0
        %v2749 = vadd.f32 0.0, %v2748
        %v2750 = vpop.f32.mrf.mxu0
        %2751 = vmatprep.mubr.f32.mxu0 0.0
        %2752 = vmatmul.mubr.f32.gmra.mxu0 %v762
        %v2753 = vpop.f32.mrf.mxu0
        %v2754 = vadd.f32 0.0, %v2753
        %v2755 = vpop.f32.mrf.mxu0
        %2756 = vmatprep.mubr.f32.mxu0 0.0
        %2757 = vmatmul.mubr.f32.gmra.mxu0 %v765
        %v2758 = vpop.f32.mrf.mxu0
        %v2759 = vadd.f32 0.0, %v2758
        %v2760 = vpop.f32.mrf.mxu0
        %2761 = vmatprep.mubr.f32.mxu0 0.0
        %2762 = vmatmul.mubr.f32.gmra.mxu0 %v768
        %v2763 = vpop.f32.mrf.mxu0
        %v2764 = vadd.f32 0.0, %v2763
        %v2765 = vpop.f32.mrf.mxu0
        %2766 = vmatprep.mubr.f32.mxu0 0.0
        %2767 = vmatmul.mubr.f32.gmra.mxu0 %v771
        %v2768 = vpop.f32.mrf.mxu0
        %v2769 = vadd.f32 0.0, %v2768
        %v2770 = vpop.f32.mrf.mxu0
        %2771 = vmatprep.mubr.f32.mxu0 0.0
        %2772 = vmatmul.mubr.f32.gmra.mxu0 %v774
        %v2773 = vpop.f32.mrf.mxu0
        %v2774 = vadd.f32 0.0, %v2773
        %v2775 = vpop.f32.mrf.mxu0
        %2776 = vmatprep.mubr.f32.mxu0 0.0
        %2777 = vmatmul.mubr.f32.gmra.mxu0 %v777
        %v2778 = vpop.f32.mrf.mxu0
        %v2779 = vadd.f32 0.0, %v2778
        %v2780 = vpop.f32.mrf.mxu0
        %2781 = vmatprep.mubr.f32.mxu0 0.0
        %2782 = vmatmul.mubr.f32.gmra.mxu0 %v780
        %v2783 = vpop.f32.mrf.mxu0
        %v2784 = vadd.f32 0.0, %v2783
        %v2785 = vpop.f32.mrf.mxu0
        %2786 = vmatprep.mubr.f32.mxu0 0.0
        %2787 = vmatmul.mubr.f32.gmra.mxu0 %v783
        %v2788 = vpop.f32.mrf.mxu0
        %v2789 = vadd.f32 0.0, %v2788
        %v2790 = vpop.f32.mrf.mxu0
        %2791 = vmatprep.mubr.f32.mxu0 0.0
        %2792 = vmatmul.mubr.f32.gmra.mxu0 %v786
        %v2793 = vpop.f32.mrf.mxu0
        %v2794 = vadd.f32 0.0, %v2793
        %v2795 = vpop.f32.mrf.mxu0
        %2796 = vmatprep.mubr.f32.mxu0 0.0
        %2797 = vmatmul.mubr.f32.gmra.mxu0 %v789
        %v2798 = vpop.f32.mrf.mxu0
        %v2799 = vadd.f32 0.0, %v2798
        %v2800 = vpop.f32.mrf.mxu0
        %2801 = vmatprep.mubr.f32.mxu0 0.0
        %2802 = vmatmul.mubr.f32.gmra.mxu0 %v792
        %v2803 = vpop.f32.mrf.mxu0
        %v2804 = vadd.f32 0.0, %v2803
        %v2805 = vpop.f32.mrf.mxu0
        %2806 = vmatprep.mubr.f32.mxu0 0.0
        %2807 = vmatmul.mubr.f32.gmra.mxu0 %v795
        %v2808 = vpop.f32.mrf.mxu0
        %v2809 = vadd.f32 0.0, %v2808
        %v2810 = vpop.f32.mrf.mxu0
        %2811 = vmatprep.mubr.f32.mxu0 0.0
        %2812 = vmatmul.mubr.f32.gmra.mxu0 %v2589
        %v2813 = vpop.f32.mrf.mxu0
        %v2814 = vadd.f32 0.0, %v2813
        %v2815 = vpop.f32.mrf.mxu0
        %2816 = vmatprep.mubr.f32.mxu0 0.0
        %2817 = vmatmul.mubr.f32.gmra.mxu0 %v2592
        %v2818 = vpop.f32.mrf.mxu0
        %v2819 = vadd.f32 0.0, %v2818
        %v2820 = vpop.f32.mrf.mxu0
        %2821 = vdwg.mxu0
        %v2822 = vadd.f32 %v2554, %v2664
        %v2823 = vadd.f32 %v2555, %v2669
        %v2824 = vadd.f32 %v2556, %v2674
        %v2825 = vadd.f32 %v2557, %v2679
        %v2826 = vadd.f32 %v2558, %v2684
        %v2827 = vadd.f32 %v2559, %v2689
        %v2828 = vadd.f32 %v2560, %v2694
        %v2829 = vadd.f32 %v2561, %v2699
        %v2830 = vadd.f32 %v2562, %v2704
        %v2831 = vadd.f32 %v2563, %v2709
        %v2832 = vadd.f32 %v2564, %v2714
        %v2833 = vadd.f32 %v2565, %v2719
        %v2834 = vadd.f32 %v2566, %v2724
        %v2835 = vadd.f32 %v2567, %v2729
        %v2836 = vadd.f32 %v2568, %v2734
        %v2837 = vadd.f32 %v2569, %v2739
        %v2838 = vadd.f32 %v2570, %v2744
        %v2839 = vadd.f32 %v2571, %v2749
        %v2840 = vadd.f32 %v2572, %v2754
        %v2841 = vadd.f32 %v2573, %v2759
        %v2842 = vadd.f32 %v2574, %v2764
        %v2843 = vadd.f32 %v2575, %v2769
        %v2844 = vadd.f32 %v2576, %v2774
        %v2845 = vadd.f32 %v2577, %v2779
        %v2846 = vadd.f32 %v2578, %v2784
        %v2847 = vadd.f32 %v2579, %v2789
        %v2848 = vadd.f32 %v2580, %v2794
        %v2849 = vadd.f32 %v2581, %v2799
        %v2850 = vadd.f32 %v2582, %v2804
        %v2851 = vadd.f32 %v2583, %v2809
        %v2852 = vadd.f32 %v2584, %v2814
        %v2853 = vadd.f32 %v2585, %v2819
        %s2854 = scalar_lea.vmem %s1, 28
        %v2855 = vld [vmem:[%s2854] sm:$0x7]
        %v2857 = vsel %vm375, %v290, 0
        %v2860 = vsel %vm375, %v291, 0
        %v2863 = vsel %vm472, %v2855, 0
        %2865 = vmatprep.subr.mxu0 0.0
        %2866 = vmatpush1.msra.mxu0 0.0
        %2867 = vmatprep.subr.mxu0 0.0
        %2868 = vmatpush1.msra.mxu0 0.0
        %2869 = vmatprep.subr.mxu0 0.0
        %2870 = vmatpush1.msra.mxu0 0.0
        %2871 = vmatprep.subr.mxu0 0.0
        %2872 = vmatpush1.msra.mxu0 0.0
        %2873 = vmatprep.subr.mxu0 0.0
        %2874 = vmatpush1.msra.mxu0 0.0
        %2875 = vmatprep.subr.mxu0 0.0
        %2876 = vmatpush1.msra.mxu0 0.0
        %2877 = vmatprep.subr.mxu0 0.0
        %2878 = vmatpush1.msra.mxu0 0.0
        %2879 = vmatprep.subr.mxu0 0.0
        %2880 = vmatpush1.msra.mxu0 0.0
        %2881 = vmatprep.subr.mxu0 0.0
        %2882 = vmatpush1.msra.mxu0 0.0
        %2883 = vmatprep.subr.mxu0 0.0
        %2884 = vmatpush1.msra.mxu0 0.0
        %2885 = vmatprep.subr.mxu0 0.0
        %2886 = vmatpush1.msra.mxu0 0.0
        %2887 = vmatprep.subr.mxu0 0.0
        %2888 = vmatpush1.msra.mxu0 0.0
        %2889 = vmatprep.subr.mxu0 0.0
        %2890 = vmatpush1.msra.mxu0 0.0
        %2891 = vmatprep.subr.mxu0 0.0
        %2892 = vmatpush1.msra.mxu0 0.0
        %2893 = vmatprep.subr.mxu0 0.0
        %2894 = vmatpush1.msra.mxu0 0.0
        %2895 = vmatprep.subr.mxu0 0.0
        %2896 = vmatpush1.msra.mxu0 %v2863
        %2897 = vmatprep.subr.mxu0 0.0
        %2898 = vmatpush2.msra.mxu0 0.0
        %2899 = vmatprep.subr.mxu0 0.0
        %2900 = vmatpush2.msra.mxu0 0.0
        %2901 = vmatprep.subr.mxu0 0.0
        %2902 = vmatpush2.msra.mxu0 0.0
        %2903 = vmatprep.subr.mxu0 0.0
        %2904 = vmatpush2.msra.mxu0 0.0
        %2905 = vmatprep.subr.mxu0 0.0
        %2906 = vmatpush2.msra.mxu0 0.0
        %2907 = vmatprep.subr.mxu0 0.0
        %2908 = vmatpush2.msra.mxu0 0.0
        %2909 = vmatprep.subr.mxu0 0.0
        %2910 = vmatpush2.msra.mxu0 0.0
        %2911 = vmatprep.subr.mxu0 0.0
        %2912 = vmatpush2.msra.mxu0 0.0
        %2913 = vmatprep.subr.mxu0 0.0
        %2914 = vmatpush2.msra.mxu0 0.0
        %2915 = vmatprep.subr.mxu0 0.0
        %2916 = vmatpush2.msra.mxu0 0.0
        %2917 = vmatprep.subr.mxu0 0.0
        %2918 = vmatpush2.msra.mxu0 0.0
        %2919 = vmatprep.subr.mxu0 0.0
        %2920 = vmatpush2.msra.mxu0 0.0
        %2921 = vmatprep.subr.mxu0 0.0
        %2922 = vmatpush2.msra.mxu0 0.0
        %2923 = vmatprep.subr.mxu0 0.0
        %2924 = vmatpush2.msra.mxu0 0.0
        %2925 = vmatprep.subr.mxu0 0.0
        %2926 = vmatpush2.msra.mxu0 0.0
        %2927 = vmatprep.subr.mxu0 0.0
        %2928 = vmatpush2.msra.mxu0 0.0
        %2929 = vmatprep.mubr.f32.mxu0 0.0
        %2930 = vmatmul.mubr.f32.gmra.mxu0 %v383
        %v2931 = vpop.f32.mrf.mxu0
        %v2932 = vadd.f32 0.0, %v2931
        %v2933 = vpop.f32.mrf.mxu0
        %2934 = vmatprep.mubr.f32.mxu0 0.0
        %2935 = vmatmul.mubr.f32.gmra.mxu0 %v386
        %v2936 = vpop.f32.mrf.mxu0
        %v2937 = vadd.f32 0.0, %v2936
        %v2938 = vpop.f32.mrf.mxu0
        %2939 = vmatprep.mubr.f32.mxu0 0.0
        %2940 = vmatmul.mubr.f32.gmra.mxu0 %v389
        %v2941 = vpop.f32.mrf.mxu0
        %v2942 = vadd.f32 0.0, %v2941
        %v2943 = vpop.f32.mrf.mxu0
        %2944 = vmatprep.mubr.f32.mxu0 0.0
        %2945 = vmatmul.mubr.f32.gmra.mxu0 %v392
        %v2946 = vpop.f32.mrf.mxu0
        %v2947 = vadd.f32 0.0, %v2946
        %v2948 = vpop.f32.mrf.mxu0
        %2949 = vmatprep.mubr.f32.mxu0 0.0
        %2950 = vmatmul.mubr.f32.gmra.mxu0 %v395
        %v2951 = vpop.f32.mrf.mxu0
        %v2952 = vadd.f32 0.0, %v2951
        %v2953 = vpop.f32.mrf.mxu0
        %2954 = vmatprep.mubr.f32.mxu0 0.0
        %2955 = vmatmul.mubr.f32.gmra.mxu0 %v398
        %v2956 = vpop.f32.mrf.mxu0
        %v2957 = vadd.f32 0.0, %v2956
        %v2958 = vpop.f32.mrf.mxu0
        %2959 = vmatprep.mubr.f32.mxu0 0.0
        %2960 = vmatmul.mubr.f32.gmra.mxu0 %v401
        %v2961 = vpop.f32.mrf.mxu0
        %v2962 = vadd.f32 0.0, %v2961
        %v2963 = vpop.f32.mrf.mxu0
        %2964 = vmatprep.mubr.f32.mxu0 0.0
        %2965 = vmatmul.mubr.f32.gmra.mxu0 %v404
        %v2966 = vpop.f32.mrf.mxu0
        %v2967 = vadd.f32 0.0, %v2966
        %v2968 = vpop.f32.mrf.mxu0
        %2969 = vmatprep.mubr.f32.mxu0 0.0
        %2970 = vmatmul.mubr.f32.gmra.mxu0 %v407
        %v2971 = vpop.f32.mrf.mxu0
        %v2972 = vadd.f32 0.0, %v2971
        %v2973 = vpop.f32.mrf.mxu0
        %2974 = vmatprep.mubr.f32.mxu0 0.0
        %2975 = vmatmul.mubr.f32.gmra.mxu0 %v410
        %v2976 = vpop.f32.mrf.mxu0
        %v2977 = vadd.f32 0.0, %v2976
        %v2978 = vpop.f32.mrf.mxu0
        %2979 = vmatprep.mubr.f32.mxu0 0.0
        %2980 = vmatmul.mubr.f32.gmra.mxu0 %v413
        %v2981 = vpop.f32.mrf.mxu0
        %v2982 = vadd.f32 0.0, %v2981
        %v2983 = vpop.f32.mrf.mxu0
        %2984 = vmatprep.mubr.f32.mxu0 0.0
        %2985 = vmatmul.mubr.f32.gmra.mxu0 %v416
        %v2986 = vpop.f32.mrf.mxu0
        %v2987 = vadd.f32 0.0, %v2986
        %v2988 = vpop.f32.mrf.mxu0
        %2989 = vmatprep.mubr.f32.mxu0 0.0
        %2990 = vmatmul.mubr.f32.gmra.mxu0 %v419
        %v2991 = vpop.f32.mrf.mxu0
        %v2992 = vadd.f32 0.0, %v2991
        %v2993 = vpop.f32.mrf.mxu0
        %2994 = vmatprep.mubr.f32.mxu0 0.0
        %2995 = vmatmul.mubr.f32.gmra.mxu0 %v422
        %v2996 = vpop.f32.mrf.mxu0
        %v2997 = vadd.f32 0.0, %v2996
        %v2998 = vpop.f32.mrf.mxu0
        %2999 = vmatprep.mubr.f32.mxu0 0.0
        %3000 = vmatmul.mubr.f32.gmra.mxu0 %v425
        %v3001 = vpop.f32.mrf.mxu0
        %v3002 = vadd.f32 0.0, %v3001
        %v3003 = vpop.f32.mrf.mxu0
        %3004 = vmatprep.mubr.f32.mxu0 0.0
        %3005 = vmatmul.mubr.f32.gmra.mxu0 %v428
        %v3006 = vpop.f32.mrf.mxu0
        %v3007 = vadd.f32 0.0, %v3006
        %v3008 = vpop.f32.mrf.mxu0
        %3009 = vmatprep.mubr.f32.mxu0 0.0
        %3010 = vmatmul.mubr.f32.gmra.mxu0 %v431
        %v3011 = vpop.f32.mrf.mxu0
        %v3012 = vadd.f32 0.0, %v3011
        %v3013 = vpop.f32.mrf.mxu0
        %3014 = vmatprep.mubr.f32.mxu0 0.0
        %3015 = vmatmul.mubr.f32.gmra.mxu0 %v434
        %v3016 = vpop.f32.mrf.mxu0
        %v3017 = vadd.f32 0.0, %v3016
        %v3018 = vpop.f32.mrf.mxu0
        %3019 = vmatprep.mubr.f32.mxu0 0.0
        %3020 = vmatmul.mubr.f32.gmra.mxu0 %v437
        %v3021 = vpop.f32.mrf.mxu0
        %v3022 = vadd.f32 0.0, %v3021
        %v3023 = vpop.f32.mrf.mxu0
        %3024 = vmatprep.mubr.f32.mxu0 0.0
        %3025 = vmatmul.mubr.f32.gmra.mxu0 %v440
        %v3026 = vpop.f32.mrf.mxu0
        %v3027 = vadd.f32 0.0, %v3026
        %v3028 = vpop.f32.mrf.mxu0
        %3029 = vmatprep.mubr.f32.mxu0 0.0
        %3030 = vmatmul.mubr.f32.gmra.mxu0 %v443
        %v3031 = vpop.f32.mrf.mxu0
        %v3032 = vadd.f32 0.0, %v3031
        %v3033 = vpop.f32.mrf.mxu0
        %3034 = vmatprep.mubr.f32.mxu0 0.0
        %3035 = vmatmul.mubr.f32.gmra.mxu0 %v446
        %v3036 = vpop.f32.mrf.mxu0
        %v3037 = vadd.f32 0.0, %v3036
        %v3038 = vpop.f32.mrf.mxu0
        %3039 = vmatprep.mubr.f32.mxu0 0.0
        %3040 = vmatmul.mubr.f32.gmra.mxu0 %v449
        %v3041 = vpop.f32.mrf.mxu0
        %v3042 = vadd.f32 0.0, %v3041
        %v3043 = vpop.f32.mrf.mxu0
        %3044 = vmatprep.mubr.f32.mxu0 0.0
        %3045 = vmatmul.mubr.f32.gmra.mxu0 %v452
        %v3046 = vpop.f32.mrf.mxu0
        %v3047 = vadd.f32 0.0, %v3046
        %v3048 = vpop.f32.mrf.mxu0
        %3049 = vmatprep.mubr.f32.mxu0 0.0
        %3050 = vmatmul.mubr.f32.gmra.mxu0 %v455
        %v3051 = vpop.f32.mrf.mxu0
        %v3052 = vadd.f32 0.0, %v3051
        %v3053 = vpop.f32.mrf.mxu0
        %3054 = vmatprep.mubr.f32.mxu0 0.0
        %3055 = vmatmul.mubr.f32.gmra.mxu0 %v458
        %v3056 = vpop.f32.mrf.mxu0
        %v3057 = vadd.f32 0.0, %v3056
        %v3058 = vpop.f32.mrf.mxu0
        %3059 = vmatprep.mubr.f32.mxu0 0.0
        %3060 = vmatmul.mubr.f32.gmra.mxu0 %v461
        %v3061 = vpop.f32.mrf.mxu0
        %v3062 = vadd.f32 0.0, %v3061
        %v3063 = vpop.f32.mrf.mxu0
        %3064 = vmatprep.mubr.f32.mxu0 0.0
        %3065 = vmatmul.mubr.f32.gmra.mxu0 %v464
        %v3066 = vpop.f32.mrf.mxu0
        %v3067 = vadd.f32 0.0, %v3066
        %v3068 = vpop.f32.mrf.mxu0
        %3069 = vmatprep.mubr.f32.mxu0 0.0
        %3070 = vmatmul.mubr.f32.gmra.mxu0 %v467
        %v3071 = vpop.f32.mrf.mxu0
        %v3072 = vadd.f32 0.0, %v3071
        %v3073 = vpop.f32.mrf.mxu0
        %3074 = vmatprep.mubr.f32.mxu0 0.0
        %3075 = vmatmul.mubr.f32.gmra.mxu0 %v470
        %v3076 = vpop.f32.mrf.mxu0
        %v3077 = vadd.f32 0.0, %v3076
        %v3078 = vpop.f32.mrf.mxu0
        %3079 = vmatprep.mubr.f32.mxu0 0.0
        %3080 = vmatmul.mubr.f32.gmra.mxu0 %v2857
        %v3081 = vpop.f32.mrf.mxu0
        %v3082 = vadd.f32 0.0, %v3081
        %v3083 = vpop.f32.mrf.mxu0
        %3084 = vmatprep.mubr.f32.mxu0 0.0
        %3085 = vmatmul.mubr.f32.gmra.mxu0 %v2860
        %v3086 = vpop.f32.mrf.mxu0
        %v3087 = vadd.f32 0.0, %v3086
        %v3088 = vpop.f32.mrf.mxu0
        %3089 = vdwg.mxu0
        %v3090 = vadd.f32 %v2822, %v2932
        %v3091 = vadd.f32 %v2823, %v2937
        %v3092 = vadd.f32 %v2824, %v2942
        %v3093 = vadd.f32 %v2825, %v2947
        %v3094 = vadd.f32 %v2826, %v2952
        %v3095 = vadd.f32 %v2827, %v2957
        %v3096 = vadd.f32 %v2828, %v2962
        %v3097 = vadd.f32 %v2829, %v2967
        %v3098 = vadd.f32 %v2830, %v2972
        %v3099 = vadd.f32 %v2831, %v2977
        %v3100 = vadd.f32 %v2832, %v2982
        %v3101 = vadd.f32 %v2833, %v2987
        %v3102 = vadd.f32 %v2834, %v2992
        %v3103 = vadd.f32 %v2835, %v2997
        %v3104 = vadd.f32 %v2836, %v3002
        %v3105 = vadd.f32 %v2837, %v3007
        %v3106 = vadd.f32 %v2838, %v3012
        %v3107 = vadd.f32 %v2839, %v3017
        %v3108 = vadd.f32 %v2840, %v3022
        %v3109 = vadd.f32 %v2841, %v3027
        %v3110 = vadd.f32 %v2842, %v3032
        %v3111 = vadd.f32 %v2843, %v3037
        %v3112 = vadd.f32 %v2844, %v3042
        %v3113 = vadd.f32 %v2845, %v3047
        %v3114 = vadd.f32 %v2846, %v3052
        %v3115 = vadd.f32 %v2847, %v3057
        %v3116 = vadd.f32 %v2848, %v3062
        %v3117 = vadd.f32 %v2849, %v3067
        %v3118 = vadd.f32 %v2850, %v3072
        %v3119 = vadd.f32 %v2851, %v3077
        %v3120 = vadd.f32 %v2852, %v3082
        %v3121 = vadd.f32 %v2853, %v3087
        %v3123 = vrot.slane %v255, 1
        %v3124 = vrot.slane %v256, 1
        %v3125 = vsel %vm1041, %v3123, %v3124
        %v3126 = vrot.slane %v257, 1
        %v3127 = vsel %vm1041, %v3124, %v3126
        %s3128 = scalar_lea.vmem %s1, 32
        %v3129 = vld [vmem:[%s3128] sm:$0x7]
        %v3130 = vsel %vm375, %v3125, 0
        %v3132 = vsel %vm375, %v3127, 0
        %v3135 = vsel %vm472, %v3129, 0
        %3137 = vmatprep.subr.mxu0 0.0
        %3138 = vmatpush1.msra.mxu0 0.0
        %3139 = vmatprep.subr.mxu0 0.0
        %3140 = vmatpush1.msra.mxu0 0.0
        %3141 = vmatprep.subr.mxu0 0.0
        %3142 = vmatpush1.msra.mxu0 0.0
        %3143 = vmatprep.subr.mxu0 0.0
        %3144 = vmatpush1.msra.mxu0 0.0
        %3145 = vmatprep.subr.mxu0 0.0
        %3146 = vmatpush1.msra.mxu0 0.0
        %3147 = vmatprep.subr.mxu0 0.0
        %3148 = vmatpush1.msra.mxu0 0.0
        %3149 = vmatprep.subr.mxu0 0.0
        %3150 = vmatpush1.msra.mxu0 0.0
        %3151 = vmatprep.subr.mxu0 0.0
        %3152 = vmatpush1.msra.mxu0 0.0
        %3153 = vmatprep.subr.mxu0 0.0
        %3154 = vmatpush1.msra.mxu0 0.0
        %3155 = vmatprep.subr.mxu0 0.0
        %3156 = vmatpush1.msra.mxu0 0.0
        %3157 = vmatprep.subr.mxu0 0.0
        %3158 = vmatpush1.msra.mxu0 0.0
        %3159 = vmatprep.subr.mxu0 0.0
        %3160 = vmatpush1.msra.mxu0 0.0
        %3161 = vmatprep.subr.mxu0 0.0
        %3162 = vmatpush1.msra.mxu0 0.0
        %3163 = vmatprep.subr.mxu0 0.0
        %3164 = vmatpush1.msra.mxu0 0.0
        %3165 = vmatprep.subr.mxu0 0.0
        %3166 = vmatpush1.msra.mxu0 0.0
        %3167 = vmatprep.subr.mxu0 0.0
        %3168 = vmatpush1.msra.mxu0 %v3135
        %3169 = vmatprep.subr.mxu0 0.0
        %3170 = vmatpush2.msra.mxu0 0.0
        %3171 = vmatprep.subr.mxu0 0.0
        %3172 = vmatpush2.msra.mxu0 0.0
        %3173 = vmatprep.subr.mxu0 0.0
        %3174 = vmatpush2.msra.mxu0 0.0
        %3175 = vmatprep.subr.mxu0 0.0
        %3176 = vmatpush2.msra.mxu0 0.0
        %3177 = vmatprep.subr.mxu0 0.0
        %3178 = vmatpush2.msra.mxu0 0.0
        %3179 = vmatprep.subr.mxu0 0.0
        %3180 = vmatpush2.msra.mxu0 0.0
        %3181 = vmatprep.subr.mxu0 0.0
        %3182 = vmatpush2.msra.mxu0 0.0
        %3183 = vmatprep.subr.mxu0 0.0
        %3184 = vmatpush2.msra.mxu0 0.0
        %3185 = vmatprep.subr.mxu0 0.0
        %3186 = vmatpush2.msra.mxu0 0.0
        %3187 = vmatprep.subr.mxu0 0.0
        %3188 = vmatpush2.msra.mxu0 0.0
        %3189 = vmatprep.subr.mxu0 0.0
        %3190 = vmatpush2.msra.mxu0 0.0
        %3191 = vmatprep.subr.mxu0 0.0
        %3192 = vmatpush2.msra.mxu0 0.0
        %3193 = vmatprep.subr.mxu0 0.0
        %3194 = vmatpush2.msra.mxu0 0.0
        %3195 = vmatprep.subr.mxu0 0.0
        %3196 = vmatpush2.msra.mxu0 0.0
        %3197 = vmatprep.subr.mxu0 0.0
        %3198 = vmatpush2.msra.mxu0 0.0
        %3199 = vmatprep.subr.mxu0 0.0
        %3200 = vmatpush2.msra.mxu0 0.0
        %3201 = vmatprep.mubr.f32.mxu0 0.0
        %3202 = vmatmul.mubr.f32.gmra.mxu0 %v1128
        %v3203 = vpop.f32.mrf.mxu0
        %v3204 = vadd.f32 0.0, %v3203
        %v3205 = vpop.f32.mrf.mxu0
        %3206 = vmatprep.mubr.f32.mxu0 0.0
        %3207 = vmatmul.mubr.f32.gmra.mxu0 %v1130
        %v3208 = vpop.f32.mrf.mxu0
        %v3209 = vadd.f32 0.0, %v3208
        %v3210 = vpop.f32.mrf.mxu0
        %3211 = vmatprep.mubr.f32.mxu0 0.0
        %3212 = vmatmul.mubr.f32.gmra.mxu0 %v1132
        %v3213 = vpop.f32.mrf.mxu0
        %v3214 = vadd.f32 0.0, %v3213
        %v3215 = vpop.f32.mrf.mxu0
        %3216 = vmatprep.mubr.f32.mxu0 0.0
        %3217 = vmatmul.mubr.f32.gmra.mxu0 %v1134
        %v3218 = vpop.f32.mrf.mxu0
        %v3219 = vadd.f32 0.0, %v3218
        %v3220 = vpop.f32.mrf.mxu0
        %3221 = vmatprep.mubr.f32.mxu0 0.0
        %3222 = vmatmul.mubr.f32.gmra.mxu0 %v1136
        %v3223 = vpop.f32.mrf.mxu0
        %v3224 = vadd.f32 0.0, %v3223
        %v3225 = vpop.f32.mrf.mxu0
        %3226 = vmatprep.mubr.f32.mxu0 0.0
        %3227 = vmatmul.mubr.f32.gmra.mxu0 %v1138
        %v3228 = vpop.f32.mrf.mxu0
        %v3229 = vadd.f32 0.0, %v3228
        %v3230 = vpop.f32.mrf.mxu0
        %3231 = vmatprep.mubr.f32.mxu0 0.0
        %3232 = vmatmul.mubr.f32.gmra.mxu0 %v1140
        %v3233 = vpop.f32.mrf.mxu0
        %v3234 = vadd.f32 0.0, %v3233
        %v3235 = vpop.f32.mrf.mxu0
        %3236 = vmatprep.mubr.f32.mxu0 0.0
        %3237 = vmatmul.mubr.f32.gmra.mxu0 %v1142
        %v3238 = vpop.f32.mrf.mxu0
        %v3239 = vadd.f32 0.0, %v3238
        %v3240 = vpop.f32.mrf.mxu0
        %3241 = vmatprep.mubr.f32.mxu0 0.0
        %3242 = vmatmul.mubr.f32.gmra.mxu0 %v1144
        %v3243 = vpop.f32.mrf.mxu0
        %v3244 = vadd.f32 0.0, %v3243
        %v3245 = vpop.f32.mrf.mxu0
        %3246 = vmatprep.mubr.f32.mxu0 0.0
        %3247 = vmatmul.mubr.f32.gmra.mxu0 %v1146
        %v3248 = vpop.f32.mrf.mxu0
        %v3249 = vadd.f32 0.0, %v3248
        %v3250 = vpop.f32.mrf.mxu0
        %3251 = vmatprep.mubr.f32.mxu0 0.0
        %3252 = vmatmul.mubr.f32.gmra.mxu0 %v1148
        %v3253 = vpop.f32.mrf.mxu0
        %v3254 = vadd.f32 0.0, %v3253
        %v3255 = vpop.f32.mrf.mxu0
        %3256 = vmatprep.mubr.f32.mxu0 0.0
        %3257 = vmatmul.mubr.f32.gmra.mxu0 %v1150
        %v3258 = vpop.f32.mrf.mxu0
        %v3259 = vadd.f32 0.0, %v3258
        %v3260 = vpop.f32.mrf.mxu0
        %3261 = vmatprep.mubr.f32.mxu0 0.0
        %3262 = vmatmul.mubr.f32.gmra.mxu0 %v1152
        %v3263 = vpop.f32.mrf.mxu0
        %v3264 = vadd.f32 0.0, %v3263
        %v3265 = vpop.f32.mrf.mxu0
        %3266 = vmatprep.mubr.f32.mxu0 0.0
        %3267 = vmatmul.mubr.f32.gmra.mxu0 %v1154
        %v3268 = vpop.f32.mrf.mxu0
        %v3269 = vadd.f32 0.0, %v3268
        %v3270 = vpop.f32.mrf.mxu0
        %3271 = vmatprep.mubr.f32.mxu0 0.0
        %3272 = vmatmul.mubr.f32.gmra.mxu0 %v1156
        %v3273 = vpop.f32.mrf.mxu0
        %v3274 = vadd.f32 0.0, %v3273
        %v3275 = vpop.f32.mrf.mxu0
        %3276 = vmatprep.mubr.f32.mxu0 0.0
        %3277 = vmatmul.mubr.f32.gmra.mxu0 %v1158
        %v3278 = vpop.f32.mrf.mxu0
        %v3279 = vadd.f32 0.0, %v3278
        %v3280 = vpop.f32.mrf.mxu0
        %3281 = vmatprep.mubr.f32.mxu0 0.0
        %3282 = vmatmul.mubr.f32.gmra.mxu0 %v1160
        %v3283 = vpop.f32.mrf.mxu0
        %v3284 = vadd.f32 0.0, %v3283
        %v3285 = vpop.f32.mrf.mxu0
        %3286 = vmatprep.mubr.f32.mxu0 0.0
        %3287 = vmatmul.mubr.f32.gmra.mxu0 %v1162
        %v3288 = vpop.f32.mrf.mxu0
        %v3289 = vadd.f32 0.0, %v3288
        %v3290 = vpop.f32.mrf.mxu0
        %3291 = vmatprep.mubr.f32.mxu0 0.0
        %3292 = vmatmul.mubr.f32.gmra.mxu0 %v1164
        %v3293 = vpop.f32.mrf.mxu0
        %v3294 = vadd.f32 0.0, %v3293
        %v3295 = vpop.f32.mrf.mxu0
        %3296 = vmatprep.mubr.f32.mxu0 0.0
        %3297 = vmatmul.mubr.f32.gmra.mxu0 %v1166
        %v3298 = vpop.f32.mrf.mxu0
        %v3299 = vadd.f32 0.0, %v3298
        %v3300 = vpop.f32.mrf.mxu0
        %3301 = vmatprep.mubr.f32.mxu0 0.0
        %3302 = vmatmul.mubr.f32.gmra.mxu0 %v1168
        %v3303 = vpop.f32.mrf.mxu0
        %v3304 = vadd.f32 0.0, %v3303
        %v3305 = vpop.f32.mrf.mxu0
        %3306 = vmatprep.mubr.f32.mxu0 0.0
        %3307 = vmatmul.mubr.f32.gmra.mxu0 %v1170
        %v3308 = vpop.f32.mrf.mxu0
        %v3309 = vadd.f32 0.0, %v3308
        %v3310 = vpop.f32.mrf.mxu0
        %3311 = vmatprep.mubr.f32.mxu0 0.0
        %3312 = vmatmul.mubr.f32.gmra.mxu0 %v1172
        %v3313 = vpop.f32.mrf.mxu0
        %v3314 = vadd.f32 0.0, %v3313
        %v3315 = vpop.f32.mrf.mxu0
        %3316 = vmatprep.mubr.f32.mxu0 0.0
        %3317 = vmatmul.mubr.f32.gmra.mxu0 %v1174
        %v3318 = vpop.f32.mrf.mxu0
        %v3319 = vadd.f32 0.0, %v3318
        %v3320 = vpop.f32.mrf.mxu0
        %3321 = vmatprep.mubr.f32.mxu0 0.0
        %3322 = vmatmul.mubr.f32.gmra.mxu0 %v1176
        %v3323 = vpop.f32.mrf.mxu0
        %v3324 = vadd.f32 0.0, %v3323
        %v3325 = vpop.f32.mrf.mxu0
        %3326 = vmatprep.mubr.f32.mxu0 0.0
        %3327 = vmatmul.mubr.f32.gmra.mxu0 %v1178
        %v3328 = vpop.f32.mrf.mxu0
        %v3329 = vadd.f32 0.0, %v3328
        %v3330 = vpop.f32.mrf.mxu0
        %3331 = vmatprep.mubr.f32.mxu0 0.0
        %3332 = vmatmul.mubr.f32.gmra.mxu0 %v1180
        %v3333 = vpop.f32.mrf.mxu0
        %v3334 = vadd.f32 0.0, %v3333
        %v3335 = vpop.f32.mrf.mxu0
        %3336 = vmatprep.mubr.f32.mxu0 0.0
        %3337 = vmatmul.mubr.f32.gmra.mxu0 %v1182
        %v3338 = vpop.f32.mrf.mxu0
        %v3339 = vadd.f32 0.0, %v3338
        %v3340 = vpop.f32.mrf.mxu0
        %3341 = vmatprep.mubr.f32.mxu0 0.0
        %3342 = vmatmul.mubr.f32.gmra.mxu0 %v1184
        %v3343 = vpop.f32.mrf.mxu0
        %v3344 = vadd.f32 0.0, %v3343
        %v3345 = vpop.f32.mrf.mxu0
        %3346 = vmatprep.mubr.f32.mxu0 0.0
        %3347 = vmatmul.mubr.f32.gmra.mxu0 %v1186
        %v3348 = vpop.f32.mrf.mxu0
        %v3349 = vadd.f32 0.0, %v3348
        %v3350 = vpop.f32.mrf.mxu0
        %3351 = vmatprep.mubr.f32.mxu0 0.0
        %3352 = vmatmul.mubr.f32.gmra.mxu0 %v3130
        %v3353 = vpop.f32.mrf.mxu0
        %v3354 = vadd.f32 0.0, %v3353
        %v3355 = vpop.f32.mrf.mxu0
        %3356 = vmatprep.mubr.f32.mxu0 0.0
        %3357 = vmatmul.mubr.f32.gmra.mxu0 %v3132
        %v3358 = vpop.f32.mrf.mxu0
        %v3359 = vadd.f32 0.0, %v3358
        %v3360 = vpop.f32.mrf.mxu0
        %3361 = vdwg.mxu0
        %v3362 = vadd.f32 %v3090, %v3204
        %v3363 = vadd.f32 %v3091, %v3209
        %v3364 = vadd.f32 %v3092, %v3214
        %v3365 = vadd.f32 %v3093, %v3219
        %v3366 = vadd.f32 %v3094, %v3224
        %v3367 = vadd.f32 %v3095, %v3229
        %v3368 = vadd.f32 %v3096, %v3234
        %v3369 = vadd.f32 %v3097, %v3239
        %v3370 = vadd.f32 %v3098, %v3244
        %v3371 = vadd.f32 %v3099, %v3249
        %v3372 = vadd.f32 %v3100, %v3254
        %v3373 = vadd.f32 %v3101, %v3259
        %v3374 = vadd.f32 %v3102, %v3264
        %v3375 = vadd.f32 %v3103, %v3269
        %v3376 = vadd.f32 %v3104, %v3274
        %v3377 = vadd.f32 %v3105, %v3279
        %v3378 = vadd.f32 %v3106, %v3284
        %v3379 = vadd.f32 %v3107, %v3289
        %v3380 = vadd.f32 %v3108, %v3294
        %v3381 = vadd.f32 %v3109, %v3299
        %v3382 = vadd.f32 %v3110, %v3304
        %v3383 = vadd.f32 %v3111, %v3309
        %v3384 = vadd.f32 %v3112, %v3314
        %v3385 = vadd.f32 %v3113, %v3319
        %v3386 = vadd.f32 %v3114, %v3324
        %v3387 = vadd.f32 %v3115, %v3329
        %v3388 = vadd.f32 %v3116, %v3334
        %v3389 = vadd.f32 %v3117, %v3339
        %v3390 = vadd.f32 %v3118, %v3344
        %v3391 = vadd.f32 %v3119, %v3349
        %v3392 = vadd.f32 %v3120, %v3354
        %v3393 = vadd.f32 %v3121, %v3359
        %v3394 = vld [vmem:[%s2] sm:$0x1]
        %v3396 = vlaneseq
        %v3397 = vshrl.u32 %v3396, 7
        %v3398 = vsub.s32 0, %v3397
        %v3399 = vrot.slane %v3394, %v3398
        %v3401 = vadd.f32 %v3362, %v3399
        %v3402 = vadd.f32 %v3363, %v3399
        %v3403 = vadd.f32 %v3364, %v3399
        %v3404 = vadd.f32 %v3365, %v3399
        %v3405 = vadd.f32 %v3366, %v3399
        %v3406 = vadd.f32 %v3367, %v3399
        %v3407 = vadd.f32 %v3368, %v3399
        %v3408 = vadd.f32 %v3369, %v3399
        %v3409 = vadd.f32 %v3370, %v3399
        %v3410 = vadd.f32 %v3371, %v3399
        %v3411 = vadd.f32 %v3372, %v3399
        %v3412 = vadd.f32 %v3373, %v3399
        %v3413 = vadd.f32 %v3374, %v3399
        %v3414 = vadd.f32 %v3375, %v3399
        %v3415 = vadd.f32 %v3376, %v3399
        %v3416 = vadd.f32 %v3377, %v3399
        %v3417 = vadd.f32 %v3378, %v3399
        %v3418 = vadd.f32 %v3379, %v3399
        %v3419 = vadd.f32 %v3380, %v3399
        %v3420 = vadd.f32 %v3381, %v3399
        %v3421 = vadd.f32 %v3382, %v3399
        %v3422 = vadd.f32 %v3383, %v3399
        %v3423 = vadd.f32 %v3384, %v3399
        %v3424 = vadd.f32 %v3385, %v3399
        %v3425 = vadd.f32 %v3386, %v3399
        %v3426 = vadd.f32 %v3387, %v3399
        %v3427 = vadd.f32 %v3388, %v3399
        %v3428 = vadd.f32 %v3389, %v3399
        %v3429 = vadd.f32 %v3390, %v3399
        %v3430 = vadd.f32 %v3391, %v3399
        %v3431 = vadd.f32 %v3392, %v3399
        %v3432 = vadd.f32 %v3393, %v3399
        %v3433 = vmax.f32 %v3401, 0.0
        %v3434 = vmax.f32 %v3402, 0.0
        %v3435 = vmax.f32 %v3403, 0.0
        %v3436 = vmax.f32 %v3404, 0.0
        %v3437 = vmax.f32 %v3405, 0.0
        %v3438 = vmax.f32 %v3406, 0.0
        %v3439 = vmax.f32 %v3407, 0.0
        %v3440 = vmax.f32 %v3408, 0.0
        %v3441 = vmax.f32 %v3409, 0.0
        %v3442 = vmax.f32 %v3410, 0.0
        %v3443 = vmax.f32 %v3411, 0.0
        %v3444 = vmax.f32 %v3412, 0.0
        %v3445 = vmax.f32 %v3413, 0.0
        %v3446 = vmax.f32 %v3414, 0.0
        %v3447 = vmax.f32 %v3415, 0.0
        %v3448 = vmax.f32 %v3416, 0.0
        %v3449 = vmax.f32 %v3417, 0.0
        %v3450 = vmax.f32 %v3418, 0.0
        %v3451 = vmax.f32 %v3419, 0.0
        %v3452 = vmax.f32 %v3420, 0.0
        %v3453 = vmax.f32 %v3421, 0.0
        %v3454 = vmax.f32 %v3422, 0.0
        %v3455 = vmax.f32 %v3423, 0.0
        %v3456 = vmax.f32 %v3424, 0.0
        %v3457 = vmax.f32 %v3425, 0.0
        %v3458 = vmax.f32 %v3426, 0.0
        %v3459 = vmax.f32 %v3427, 0.0
        %v3460 = vmax.f32 %v3428, 0.0
        %v3461 = vmax.f32 %v3429, 0.0
        %v3462 = vmax.f32 %v3430, 0.0
        %v3463 = vmax.f32 %v3431, 0.0
        %v3464 = vmax.f32 %v3432, 0.0
        %vm3465 = vcmask 130048
        %3466 = vst.msk [vmem:[%s194] sm:$0xff] %vm3465, %v3433
        %3467 = vst.msk [vmem:[%s194 + $0x8] sm:$0xff] %vm3465, %v3434
        %3468 = vst.msk [vmem:[%s194 + $0x10] sm:$0xff] %vm3465, %v3435
        %3469 = vst.msk [vmem:[%s194 + $0x18] sm:$0xff] %vm3465, %v3436
        %3470 = vst.msk [vmem:[%s194 + $0x20] sm:$0xff] %vm3465, %v3437
        %3471 = vst.msk [vmem:[%s194 + $0x28] sm:$0xff] %vm3465, %v3438
        %3472 = vst.msk [vmem:[%s194 + $0x30] sm:$0xff] %vm3465, %v3439
        %3473 = vst.msk [vmem:[%s194 + $0x38] sm:$0xff] %vm3465, %v3440
        %3474 = vst.msk [vmem:[%s194 + $0x40] sm:$0xff] %vm3465, %v3441
        %3475 = vst.msk [vmem:[%s194 + $0x48] sm:$0xff] %vm3465, %v3442
        %3476 = vst.msk [vmem:[%s194 + $0x50] sm:$0xff] %vm3465, %v3443
        %3477 = vst.msk [vmem:[%s194 + $0x58] sm:$0xff] %vm3465, %v3444
        %3478 = vst.msk [vmem:[%s194 + $0x60] sm:$0xff] %vm3465, %v3445
        %3479 = vst.msk [vmem:[%s194 + $0x68] sm:$0xff] %vm3465, %v3446
        %3480 = vst.msk [vmem:[%s194 + $0x70] sm:$0xff] %vm3465, %v3447
        %3481 = vst.msk [vmem:[%s194 + $0x78] sm:$0xff] %vm3465, %v3448
        %3482 = vst.msk [vmem:[%s194 + $0x80] sm:$0xff] %vm3465, %v3449
        %3483 = vst.msk [vmem:[%s194 + $0x88] sm:$0xff] %vm3465, %v3450
        %3484 = vst.msk [vmem:[%s194 + $0x90] sm:$0xff] %vm3465, %v3451
        %3485 = vst.msk [vmem:[%s194 + $0x98] sm:$0xff] %vm3465, %v3452
        %3486 = vst.msk [vmem:[%s194 + $0xa0] sm:$0xff] %vm3465, %v3453
        %3487 = vst.msk [vmem:[%s194 + $0xa8] sm:$0xff] %vm3465, %v3454
        %3488 = vst.msk [vmem:[%s194 + $0xb0] sm:$0xff] %vm3465, %v3455
        %3489 = vst.msk [vmem:[%s194 + $0xb8] sm:$0xff] %vm3465, %v3456
        %3490 = vst.msk [vmem:[%s194 + $0xc0] sm:$0xff] %vm3465, %v3457
        %3491 = vst.msk [vmem:[%s194 + $0xc8] sm:$0xff] %vm3465, %v3458
        %3492 = vst.msk [vmem:[%s194 + $0xd0] sm:$0xff] %vm3465, %v3459
        %3493 = vst.msk [vmem:[%s194 + $0xd8] sm:$0xff] %vm3465, %v3460
        %3494 = vst.msk [vmem:[%s194 + $0xe0] sm:$0xff] %vm3465, %v3461
        %3495 = vst.msk [vmem:[%s194 + $0xe8] sm:$0xff] %vm3465, %v3462
        %3496 = vst.msk [vmem:[%s194 + $0xf0] sm:$0xff] %vm3465, %v3463
        %3497 = vst.msk [vmem:[%s194 + $0xf8] sm:$0xff] %vm3465, %v3464
        %3498 = vxpose.xlu0.b32.start [1/16] %v3433, 128
        %3499 = vxpose.xlu0.b32.cont [2/16] %v3434, 128
        %3500 = vxpose.xlu0.b32.cont [3/16] %v3435, 128
        %3501 = vxpose.xlu0.b32.cont [4/16] %v3436, 128
        %3502 = vxpose.xlu0.b32.cont [5/16] %v3437, 128
        %3503 = vxpose.xlu0.b32.cont [6/16] %v3438, 128
        %3504 = vxpose.xlu0.b32.cont [7/16] %v3439, 128
        %3505 = vxpose.xlu0.b32.cont [8/16] %v3440, 128
        %3506 = vxpose.xlu0.b32.cont [9/16] %v3441, 128
        %3507 = vxpose.xlu0.b32.cont [10/16] %v3442, 128
        %3508 = vxpose.xlu0.b32.cont [11/16] %v3443, 128
        %3509 = vxpose.xlu0.b32.cont [12/16] %v3444, 128
        %3510 = vxpose.xlu0.b32.cont [13/16] %v3445, 128
        %3511 = vxpose.xlu0.b32.cont [14/16] %v3446, 128
        %3512 = vxpose.xlu0.b32.cont [15/16] %v3447, 128
        %3513 = vxpose.xlu0.b32.end [16/16] %v3448, 128
        %v3514 = vpop.trf.xlu0
        %v3515 = vpop.trf.xlu0
        %v3516 = vpop.trf.xlu0
        %v3517 = vpop.trf.xlu0
        %v3518 = vpop.trf.xlu0
        %v3519 = vpop.trf.xlu0
        %v3520 = vpop.trf.xlu0
        %v3521 = vpop.trf.xlu0
        %v3522 = vpop.trf.xlu0
        %v3523 = vpop.trf.xlu0
        %v3524 = vpop.trf.xlu0
        %v3525 = vpop.trf.xlu0
        %v3526 = vpop.trf.xlu0
        %v3527 = vpop.trf.xlu0
        %v3528 = vpop.trf.xlu0
        %v3529 = vpop.trf.xlu0
        %3530 = vxpose.xlu0.b32.start [1/16] %v3449, 128
        %3531 = vxpose.xlu0.b32.cont [2/16] %v3450, 128
        %3532 = vxpose.xlu0.b32.cont [3/16] %v3451, 128
        %3533 = vxpose.xlu0.b32.cont [4/16] %v3452, 128
        %3534 = vxpose.xlu0.b32.cont [5/16] %v3453, 128
        %3535 = vxpose.xlu0.b32.cont [6/16] %v3454, 128
        %3536 = vxpose.xlu0.b32.cont [7/16] %v3455, 128
        %3537 = vxpose.xlu0.b32.cont [8/16] %v3456, 128
        %3538 = vxpose.xlu0.b32.cont [9/16] %v3457, 128
        %3539 = vxpose.xlu0.b32.cont [10/16] %v3458, 128
        %3540 = vxpose.xlu0.b32.cont [11/16] %v3459, 128
        %3541 = vxpose.xlu0.b32.cont [12/16] %v3460, 128
        %3542 = vxpose.xlu0.b32.cont [13/16] %v3461, 128
        %3543 = vxpose.xlu0.b32.cont [14/16] %v3462, 128
        %3544 = vxpose.xlu0.b32.cont [15/16] %v3463, 128
        %3545 = vxpose.xlu0.b32.end [16/16] %v3464, 128
        %v3546 = vpop.trf.xlu0
        %v3547 = vpop.trf.xlu0
        %v3548 = vpop.trf.xlu0
        %v3549 = vpop.trf.xlu0
        %v3550 = vpop.trf.xlu0
        %v3551 = vpop.trf.xlu0
        %v3552 = vpop.trf.xlu0
        %v3553 = vpop.trf.xlu0
        %v3554 = vpop.trf.xlu0
        %v3555 = vpop.trf.xlu0
        %v3556 = vpop.trf.xlu0
        %v3557 = vpop.trf.xlu0
        %v3558 = vpop.trf.xlu0
        %v3559 = vpop.trf.xlu0
        %v3560 = vpop.trf.xlu0
        %v3561 = vpop.trf.xlu0
        %3562 = vst [vmem:[%s201] sm:$0xff] %v3514
        %3563 = vst [vmem:[%s201 + $0x8] sm:$0xff] %v3546
        %3564 = vst [vmem:[%s201 + $0x10] sm:$0xff] %v3515
        %3565 = vst [vmem:[%s201 + $0x18] sm:$0xff] %v3547
        %s3566 = sand.u32 %s98, 1
        %s3567 = scalar_lea.sflag [#allocation3], %s3566
        %s3568 = sand.u32 %s98, 1
        %s3569 = smul.addr %s3568, 256
        %s3570 = scalar_lea.vmem [#allocation2], %s3569
        %s3571 = sand.u32 %s124, 1
        %s3572 = scalar_lea.sflag [#allocation5], %s3571
        %s3573 = sand.u32 %s124, 1
        %s3574 = smul.addr %s3573, 32
        %s3575 = scalar_lea.vmem [#allocation4], %s3574
        // Predicated region
        $region33: #{tpu_custom_call.1} parent=31 // pred_check
          %p3576 = pneg %p108
        $region34: #{tpu_custom_call.1} parent=31 // pred_check_branch
          %3578 = sbr.rel (%p3576) target = $region36
        $region35: #{tpu_custom_call.1} parent=31 // pred_region
          %s3580 = ssub.s32 4096, 4096
          %3581 = vsyncadd %s3567, %s3580
          %s3582 = smul.addr %s22, 32
          %s3583 = smul.addr %s3582, 128
          %s3584 = scalar_lea.hbm %s3, %s3583
          %s3585 = sshll.u32 %s3570, 4
          %s3586 = int_to_ptr.vmem [resolvable:$true] %s3585
          %3591 = dma.vmem_to_hbm [thread:$0]  %s3586, 4096, %s3584, %s3567, 128, 128, 8
        $region36: #{tpu_custom_call.1} parent=31 // pred_fallthru
          _
        // Predicated region
        $region37: #{tpu_custom_call.1} parent=31 // pred_check
          %p3592 = pneg %p134
        $region38: #{tpu_custom_call.1} parent=31 // pred_check_branch
          %3594 = sbr.rel (%p3592) target = $region40
        $region39: #{tpu_custom_call.1} parent=31 // pred_region
          %s3596 = ssub.s32 512, 512
          %3597 = vsyncadd %s3572, %s3596
          %s3598 = smul.addr %s22, 4
          %s3599 = smul.addr %s3598, 128
          %s3600 = scalar_lea.hbm %s4, %s3599
          %s3601 = sshll.u32 %s3575, 4
          %s3602 = int_to_ptr.vmem [resolvable:$true] %s3601
          %3607 = dma.vmem_to_hbm [thread:$0]  %s3602, 512, %s3600, %s3572, 256, 256, 16
        $region40: #{tpu_custom_call.1} parent=31 // pred_fallthru
          _
      $region32: #{tpu_custom_call.1} parent=5 // pred_fallthru
        _
      %p3608 = scmp.le.s32.totalorder 2, %s17
      // Predicated region
      $region41: #{tpu_custom_call.1} parent=5 // pred_check
        %p3609 = pneg %p3608
      $region42: #{tpu_custom_call.1} parent=5 // pred_check_branch
        %3611 = sbr.rel (%p3609) target = $region44
      $region43: #{tpu_custom_call.1} parent=5 // pred_region
        %s3612 = ssub.s32 %s17, 2
        // Predicated region
        $region45: #{tpu_custom_call.1} parent=43 // pred_check
          %p3613 = pneg %p114
        $region46: #{tpu_custom_call.1} parent=43 // pred_check_branch
          %3615 = sbr.rel (%p3613) target = $region48
        $region47: #{tpu_custom_call.1} parent=43 // pred_region
          %s3616 = sand.u32 %s99, 1
          %s3617 = scalar_lea.sflag [#allocation3], %s3616
          %s3618 = sand.u32 %s99, 1
          %s3619 = smul.addr %s3618, 256
          %s3620 = scalar_lea.vmem [#allocation2], %s3619
          %3621 = dma.done %s3617, 4096
        $region48: #{tpu_custom_call.1} parent=43 // pred_fallthru
          _
        // Predicated region
        $region49: #{tpu_custom_call.1} parent=43 // pred_check
          %p3622 = pneg %p140
        $region50: #{tpu_custom_call.1} parent=43 // pred_check_branch
          %3624 = sbr.rel (%p3622) target = $region52
        $region51: #{tpu_custom_call.1} parent=43 // pred_region
          %s3625 = sand.u32 %s125, 1
          %s3626 = scalar_lea.sflag [#allocation5], %s3625
          %s3627 = sand.u32 %s125, 1
          %s3628 = smul.addr %s3627, 32
          %s3629 = scalar_lea.vmem [#allocation4], %s3628
          %3630 = dma.done %s3626, 512
        $region52: #{tpu_custom_call.1} parent=43 // pred_fallthru
          _
      $region44: #{tpu_custom_call.1} parent=5 // pred_fallthru
        _
    $region6: #{tpu_custom_call.1} parent=1 // loop_footer
      %s21 = sadd.s32 1, %s17
    $region7: #{tpu_custom_call.1} parent=1 // loop_footer_branch
      %16 = sbr.rel target = $region3
    $region8: #{tpu_custom_call.1} parent=1 // loop_exit
      _
    %3631 = vsyncpa [#allocation3], 1
    %s3632 = scalar_lea.sflag [#allocation3], 1
    %3633 = vsyncpa %s3632, 1
    %3634 = vsyncpa [#allocation5], 1
    %s3635 = scalar_lea.sflag [#allocation5], 1
    %3636 = vsyncpa %s3635, 1

</llo_original>
